<compile_context>
chip_gen: v5e
topology: v5e:2x2
jax: 0.10.0
libtpu: 0.0.40
codegen_flags: <defaults>
</compile_context>

<pallas_src>
from collections import deque

import numpy as np
import jax
import jax.numpy as jnp
from jax import lax
from jax.experimental import pallas as pl
from jax.experimental.pallas import tpu as pltpu

VMEM = pl.BlockSpec(memory_space=pltpu.MemorySpace.VMEM)
_BIG = 1e9


# ----------------------------- in-kernel helpers -----------------------------

def _gcn(a, dinv, x, w, b):
    """D^-1/2 (A+I) D^-1/2 (X W) + b as two row scalings (A carries self loops,
    dinv is precomputed from the alive-masked degrees)."""
    xw = jnp.dot(x, w, preferred_element_type=jnp.float32)
    return dinv * jnp.dot(a, dinv * xw, preferred_element_type=jnp.float32) + b


def _make_kernel(B, n, k_list):
    """Fully fused NetGraph forward.  B subgraphs of n nodes each (block-diag),
    k_list = nodes kept by pool1/pool2/pool3."""
    TOT = B * n

    def stage(a, x, m, k, w, b, ws, bs, gt_mask, eq_mask, seg, eye, ones_mat):
        # Degrees restricted to alive columns == PyG filter_adj + gcn_norm degrees.
        deg = jnp.dot(a, m, preferred_element_type=jnp.float32)
        dinv = lax.rsqrt(jnp.maximum(deg, 1.0))            # dead rows -> finite
        # GCNConv + ReLU (x has zero rows for removed nodes, so stale columns of
        # `a` pointing at removed nodes contribute nothing).
        h = jnp.maximum(_gcn(a, dinv, x, w, b), 0.0)        # (TOT, nhid)
        # SAGPooling score GCN + tanh on the un-gated h (alive rows only).
        s = jnp.tanh(_gcn(a, dinv, h * m, ws, bs))          # (TOT, 1)

        # ---- in-kernel top-k (per subgraph) via pairwise ranking ----
        s_rank = s * m + (m - 1.0) * _BIG                   # dead nodes -> -BIG
        # s_row[i, j] = s_rank[j]   (ones @ diag(s) trick: no transpose needed)
        s_row = jnp.dot(ones_mat, s_rank * eye, preferred_element_type=jnp.float32)
        beats = (gt_mask * jnp.where(s_row > s_rank, 1.0, 0.0)
                 + eq_mask * jnp.where(s_row == s_rank, 1.0, 0.0))
        rank = jnp.sum(beats, axis=1, keepdims=True)        # rank within subgraph
        m_new = jnp.where(rank < float(k), 1.0, 0.0)        # top-k indicator

        # gate: x[perm] * tanh(score[perm]); removed rows forced to 0
        gated = h * s * m_new
        # readout [global_max_pool | global_mean_pool] per subgraph
        mean = jnp.dot(seg, gated, preferred_element_type=jnp.float32) * (1.0 / k)
        masked = gated + (m_new - 1.0) * _BIG
        maxs = [jnp.max(masked[bi * n:(bi + 1) * n, :], axis=0, keepdims=True)
                for bi in range(B)]
        readout = jnp.concatenate([jnp.concatenate(maxs, axis=0), mean], axis=1)
        # filter_adj: drop rows of removed nodes (columns handled via m_new / x=0)
        return a * m_new, gated, m_new, readout

    def kernel(a_ref, x_ref, gt_ref, eq_ref, seg_ref,
               w1_ref, b1_ref, ws1_ref, bs1_ref,
               w2_ref, b2_ref, ws2_ref, bs2_ref,
               w3_ref, b3_ref, ws3_ref, bs3_ref,
               keep_ref, mix_ref, ga_ref, wn_ref, bn_ref,
               ss_ref, st_ref, wl1_ref, bl1_ref, wl2_ref, bl2_ref,
               tgt_ref, wv_ref,
               ce_ref, loss_ref):
        a = a_ref[...]
        x = x_ref[...]
        gt_mask = gt_ref[...]
        eq_mask = eq_ref[...]
        seg = seg_ref[...]
        rows = lax.broadcasted_iota(jnp.int32, (TOT, TOT), 0)
        cols = lax.broadcasted_iota(jnp.int32, (TOT, TOT), 1)
        eye = jnp.where(rows == cols, 1.0, 0.0)
        ones_mat = jnp.ones((TOT, TOT), jnp.float32)
        m = jnp.ones((TOT, 1), jnp.float32)

        stage_w = ((w1_ref, b1_ref, ws1_ref, bs1_ref),
                   (w2_ref, b2_ref, ws2_ref, bs2_ref),
                   (w3_ref, b3_ref, ws3_ref, bs3_ref))
        readouts = []
        for k, (w, b, ws, bs) in zip(k_list, stage_w):
            a, x, m, r = stage(a, x, m, k, w[...], b[...], ws[...], bs[...],
                               gt_mask, eq_mask, seg, eye, ones_mat)
            readouts.append(r)
        modular = jnp.concatenate(readouts, axis=1)         # (B, 6*nhid)
        modular = modular * keep_ref[...]                   # dropout (mask as input)

        # Get_Fs: DAG node features = fixed linear mix of the leaf (class) rows.
        gf = jnp.dot(mix_ref[...], modular, preferred_element_type=jnp.float32)
        # global GCNConv + ReLU
        ga = ga_ref[...]
        gdinv = lax.rsqrt(jnp.sum(ga, axis=1, keepdims=True))
        xg = jnp.maximum(_gcn(ga, gdinv, gf, wn_ref[...], bn_ref[...]), 0.0)
        ce_ref[...] = xg[:B, :]                             # class_embedding

        # feature_split (one-hot gathers) + lin1/lin2 + dot-product logits
        src = jnp.dot(ss_ref[...], xg, preferred_element_type=jnp.float32)
        dst = jnp.dot(st_ref[...], xg, preferred_element_type=jnp.float32)
        fs = jnp.dot(src, wl1_ref[...], preferred_element_type=jnp.float32) + bl1_ref[...]
        ft = jnp.dot(dst, wl2_ref[...], preferred_element_type=jnp.float32) + bl2_ref[...]
        z = jnp.sum(fs * ft, axis=1, keepdims=True)         # link logits (E, 1)
        # stable BCEWithLogits; per-row weights reproduce mean(pos) + mean(neg)
        t = tgt_ref[...]
        l = jnp.maximum(z, 0.0) - z * t + jnp.log1p(jnp.exp(-jnp.abs(z)))
        loss_ref[...] = jnp.sum(l * wv_ref[...], axis=0, keepdims=True)

    return kernel


# ------------------------------ kernel wrapper --------------------------------

def build_forward(args, B, n, consts):
    cur, k_list = n, []
    for _ in range(3):
        cur = int(np.ceil(args.pooling_ratio * cur))
        k_list.append(cur)

    call = pl.pallas_call(
        _make_kernel(B, n, tuple(k_list)),
        out_shape=(jax.ShapeDtypeStruct((B, args.ddi_nhid), jnp.float32),
                   jax.ShapeDtypeStruct((1, 1), jnp.float32)),
        in_specs=[VMEM] * 30,
        out_specs=(VMEM, VMEM),
    )
    feat_dim = 6 * args.nhid
    keep_p = 1.0 - args.dropout_ratio

    def forward(p, x_bd, a_bd, key):
        # TODO(synk): dropout mask drawn with jax.random outside the kernel (one
        # tiny XLA op); could move to pltpu.prng_* for a literally single dispatch.
        keep = jax.random.bernoulli(key, keep_p, (B, feat_dim))
        keep = keep.astype(jnp.float32) * (1.0 / keep_p)
        ce, loss = call(
            a_bd, x_bd, consts["gt"], consts["eq"], consts["seg"],
            p["w1"], p["b1"], p["ws1"], p["bs1"],
            p["w2"], p["b2"], p["ws2"], p["bs2"],
            p["w3"], p["b3"], p["ws3"], p["bs3"],
            keep, consts["mix"], consts["ga"],
            p["w_noattn"], p["b_noattn"],
            consts["ss"], consts["st"],
            p["w_lin1"], p["b_lin1"], p["w_lin2"], p["b_lin2"],
            consts["tgt"], consts["wv"])
        return ce, loss[0, 0]

    return jax.jit(forward)


# ------------------------------- host helpers ---------------------------------

def topo_order(children, n_nodes):
    indeg = {i: 0 for i in range(n_nodes)}
    for _, cs in children.items():
        for c in cs:
            indeg[c] += 1
    q = deque(i for i in range(n_nodes) if indeg[i] == 0)
    order = []
    while q:
        u = q.popleft()
        order.append(u)
        for c in children.get(u, []):
            indeg[c] -= 1
            if indeg[c] == 0:
                q.append(c)
    return order


def mixing_matrix(children, n_nodes, n_leaves):
    """Get_Fs as a fixed (n_nodes, n_leaves) linear map: internal DAG nodes are
    (nested) means of their children; leaves 0..n_leaves-1 are the class rows."""
    mix = {i: np.eye(n_leaves, dtype=np.float32)[i] for i in range(n_leaves)}
    for node in reversed(topo_order(children, n_nodes)):
        cs = children.get(node, [])
        if cs:
            mix[node] = np.mean([mix[c] for c in cs], axis=0)
    return np.stack([mix[k] for k in sorted(mix.keys())])


def raw_adjacency(edge_index, edge_weight, num, add_self_loops=True):
    """Dense adjacency A[t, s] = w for edge s->t, plus unit self loops (the
    diagonal survives pooling, so gcn_norm's add_self_loops is done once here)."""
    A = np.zeros((num, num), np.float32)
    if edge_index.size > 0:
        src, dst = edge_index
        np.add.at(A, (dst, src), edge_weight.astype(np.float32))
    if add_self_loops:
        A[np.diag_indices(num)] += 1.0
    return A


def one_hot_rows(idx, num):
    m = np.zeros((idx.shape[0], num), np.float32)
    m[np.arange(idx.shape[0]), idx] = 1.0
    return m


# --------------------------------- NetGraph -----------------------------------

class Args:
    num_features = 16
    nhid = 32
    ddi_nhid = 32
    pooling_ratio = 0.5
    dropout_ratio = 0.5


def init_params(args):
    key = jax.random.PRNGKey(0)
    ks = jax.random.split(key, 16)

    def w(k, shape, scale=0.1):
        return (scale * jax.random.normal(k, shape)).astype(jnp.float32)

    nf, nh, dn = args.num_features, args.nhid, args.ddi_nhid
    return dict(
        w1=w(ks[0], (nf, nh)), b1=jnp.zeros((1, nh), jnp.float32),
        ws1=w(ks[1], (nh, 1)), bs1=jnp.zeros((1, 1), jnp.float32),
        w2=w(ks[2], (nh, nh)), b2=jnp.zeros((1, nh), jnp.float32),
        ws2=w(ks[3], (nh, 1)), bs2=jnp.zeros((1, 1), jnp.float32),
        w3=w(ks[4], (nh, nh)), b3=jnp.zeros((1, nh), jnp.float32),
        ws3=w(ks[5], (nh, 1)), bs3=jnp.zeros((1, 1), jnp.float32),
        w_noattn=w(ks[6], (6 * nh, dn)), b_noattn=jnp.zeros((1, dn), jnp.float32),
        w_lin1=w(ks[7], (dn, dn)), b_lin1=w(ks[8], (1, dn)),
        w_lin2=w(ks[9], (dn, dn)), b_lin2=w(ks[10], (1, dn)),
    )


# ----------------------------------- main --------------------------------------

if __name__ == "__main__":
    args = Args()
    params = init_params(args)
    rng = np.random.default_rng(0)
    key = jax.random.PRNGKey(0)

    # 4 modular subgraphs, 12 nodes each, ring topology (both directions).
    num_nodes, class_num = 12, 4
    xs, adjs = [], []
    for _ in range(class_num):
        key, sub = jax.random.split(key)
        xs.append(jax.random.normal(sub, (num_nodes, args.num_features), jnp.float32))
        src = np.arange(num_nodes)
        dst = (src + 1) % num_nodes
        edge_index = np.concatenate(
            [np.stack([src, dst]), np.stack([dst, src])], axis=1).astype(np.int64)
        edge_weight = rng.uniform(0.5, 1.5, edge_index.shape[1]).astype(np.float32)
        adjs.append(raw_adjacency(edge_index, edge_weight, num_nodes))

    tot = class_num * num_nodes
    x_bd = jnp.concatenate(xs, axis=0)                     # (48, 16)
    a_np = np.zeros((tot, tot), np.float32)                # block-diag adjacency (+I)
    for b, A in enumerate(adjs):
        a_np[b * num_nodes:(b + 1) * num_nodes, b * num_nodes:(b + 1) * num_nodes] = A
    a_bd = jnp.asarray(a_np)                               # (48, 48)

    # structural constants for in-kernel top-k / readout
    blk = np.arange(tot) // num_nodes
    same = (blk[:, None] == blk[None, :]).astype(np.float32)
    lt = (np.arange(tot)[None, :] < np.arange(tot)[:, None]).astype(np.float32)
    seg = np.stack([(blk == b).astype(np.float32) for b in range(class_num)])

    # Hierarchical DAG: leaves 0..3 (classes), internal 4,5, root 6.
    children = {4: [0, 1], 5: [2, 3], 6: [4, 5]}
    n_graph_nodes = 7
    ge = np.array([[4, 4, 5, 5, 6, 6], [0, 1, 2, 3, 4, 5]], np.int64)
    global_edge_index = np.concatenate([ge, ge[::-1]], axis=1)   # undirected
    neg_edge_index = np.array([[0, 1, 2, 3], [2, 3, 0, 1]], np.int64)
    g_ew = np.ones((global_edge_index.shape[1],), np.float32)
    e_pos, e_neg = global_edge_index.shape[1], neg_edge_index.shape[1]

    consts = dict(
        gt=jnp.asarray(same),
        eq=jnp.asarray(same * lt),
        seg=jnp.asarray(seg),
        mix=jnp.asarray(mixing_matrix(children, n_graph_nodes, class_num)),
        ga=jnp.asarray(raw_adjacency(global_edge_index, g_ew, n_graph_nodes)),
        ss=jnp.asarray(np.concatenate(
            [one_hot_rows(global_edge_index[0], n_graph_nodes),
             one_hot_rows(neg_edge_index[0], n_graph_nodes)])),
        st=jnp.asarray(np.concatenate(
            [one_hot_rows(global_edge_index[1], n_graph_nodes),
             one_hot_rows(neg_edge_index[1], n_graph_nodes)])),
        tgt=jnp.asarray(np.concatenate(
            [np.ones((e_pos, 1), np.float32), np.zeros((e_neg, 1), np.float32)])),
        wv=jnp.asarray(np.concatenate(
            [np.full((e_pos, 1), 1.0 / e_pos, np.float32),
             np.full((e_neg, 1), 1.0 / e_neg, np.float32)])),
    )

    fwd = build_forward(args, class_num, num_nodes, consts)
    class_embedding, loss = fwd(params, x_bd, a_bd, jax.random.PRNGKey(123))
    jax.block_until_ready(class_embedding)
    jax.block_until_ready(loss)
    assert class_embedding.shape == (class_num, args.ddi_nhid)
    assert np.isfinite(float(loss))
    print("KERNEL_OK")
</pallas_src>

<mosaic_0001>
module attributes {stable_mosaic.version = 11 : i64} {
  func.func @kernel(%arg0: memref<48x48xf32, #tpu.memory_space<vmem>>, %arg1: memref<48x16xf32, #tpu.memory_space<vmem>>, %arg2: memref<48x48xf32, #tpu.memory_space<vmem>>, %arg3: memref<48x48xf32, #tpu.memory_space<vmem>>, %arg4: memref<4x48xf32, #tpu.memory_space<vmem>>, %arg5: memref<16x32xf32, #tpu.memory_space<vmem>>, %arg6: memref<1x32xf32, #tpu.memory_space<vmem>>, %arg7: memref<32x1xf32, #tpu.memory_space<vmem>>, %arg8: memref<1x1xf32, #tpu.memory_space<vmem>>, %arg9: memref<32x32xf32, #tpu.memory_space<vmem>>, %arg10: memref<1x32xf32, #tpu.memory_space<vmem>>, %arg11: memref<32x1xf32, #tpu.memory_space<vmem>>, %arg12: memref<1x1xf32, #tpu.memory_space<vmem>>, %arg13: memref<32x32xf32, #tpu.memory_space<vmem>>, %arg14: memref<1x32xf32, #tpu.memory_space<vmem>>, %arg15: memref<32x1xf32, #tpu.memory_space<vmem>>, %arg16: memref<1x1xf32, #tpu.memory_space<vmem>>, %arg17: memref<4x192xf32, #tpu.memory_space<vmem>>, %arg18: memref<7x4xf32, #tpu.memory_space<vmem>>, %arg19: memref<7x7xf32, #tpu.memory_space<vmem>>, %arg20: memref<192x32xf32, #tpu.memory_space<vmem>>, %arg21: memref<1x32xf32, #tpu.memory_space<vmem>>, %arg22: memref<16x7xf32, #tpu.memory_space<vmem>>, %arg23: memref<16x7xf32, #tpu.memory_space<vmem>>, %arg24: memref<32x32xf32, #tpu.memory_space<vmem>>, %arg25: memref<1x32xf32, #tpu.memory_space<vmem>>, %arg26: memref<32x32xf32, #tpu.memory_space<vmem>>, %arg27: memref<1x32xf32, #tpu.memory_space<vmem>>, %arg28: memref<16x1xf32, #tpu.memory_space<vmem>>, %arg29: memref<16x1xf32, #tpu.memory_space<vmem>>, %arg30: memref<4x32xf32, #tpu.memory_space<vmem>>, %arg31: memref<1x1xf32, #tpu.memory_space<vmem>>) attributes {dimension_semantics = [], scalar_prefetch = 0 : i64, scratch_operands = 0 : i64, tpu.core_type = #tpu.core_type<tc>} {
    %c0 = arith.constant 0 : index
    %c0_0 = arith.constant 0 : index
    %0 = vector.load %arg0[%c0, %c0_0] : memref<48x48xf32, #tpu.memory_space<vmem>>, vector<48x48xf32>
    %c0_1 = arith.constant 0 : index
    %c0_2 = arith.constant 0 : index
    %1 = vector.load %arg1[%c0_1, %c0_2] : memref<48x16xf32, #tpu.memory_space<vmem>>, vector<48x16xf32>
    %c0_3 = arith.constant 0 : index
    %c0_4 = arith.constant 0 : index
    %2 = vector.load %arg2[%c0_3, %c0_4] : memref<48x48xf32, #tpu.memory_space<vmem>>, vector<48x48xf32>
    %c0_5 = arith.constant 0 : index
    %c0_6 = arith.constant 0 : index
    %3 = vector.load %arg3[%c0_5, %c0_6] : memref<48x48xf32, #tpu.memory_space<vmem>>, vector<48x48xf32>
    %c0_7 = arith.constant 0 : index
    %c0_8 = arith.constant 0 : index
    %4 = vector.load %arg4[%c0_7, %c0_8] : memref<4x48xf32, #tpu.memory_space<vmem>>, vector<4x48xf32>
    %5 = tpu.iota {dimensions = array<i32: 0>} : vector<48x48xi32>
    %6 = tpu.iota {dimensions = array<i32: 1>} : vector<48x48xi32>
    %7 = arith.cmpi eq, %5, %6 : vector<48x48xi32>
    %cst = arith.constant 1.000000e+00 : f32
    %cst_9 = arith.constant 0.000000e+00 : f32
    %8 = vector.broadcast %cst : f32 to vector<48x48xf32>
    %9 = vector.broadcast %cst_9 : f32 to vector<48x48xf32>
    %10 = arith.select %7, %8, %9 : vector<48x48xi1>, vector<48x48xf32>
    %cst_10 = arith.constant 1.000000e+00 : f32
    %11 = vector.broadcast %cst_10 : f32 to vector<48x48xf32>
    %cst_11 = arith.constant 1.000000e+00 : f32
    %12 = vector.broadcast %cst_11 : f32 to vector<48x1xf32>
    %c0_12 = arith.constant 0 : index
    %c0_13 = arith.constant 0 : index
    %13 = vector.load %arg5[%c0_12, %c0_13] : memref<16x32xf32, #tpu.memory_space<vmem>>, vector<16x32xf32>
    %c0_14 = arith.constant 0 : index
    %c0_15 = arith.constant 0 : index
    %14 = vector.load %arg6[%c0_14, %c0_15] : memref<1x32xf32, #tpu.memory_space<vmem>>, vector<1x32xf32>
    %c0_16 = arith.constant 0 : index
    %c0_17 = arith.constant 0 : index
    %15 = vector.load %arg7[%c0_16, %c0_17] : memref<32x1xf32, #tpu.memory_space<vmem>>, vector<32x1xf32>
    %c0_18 = arith.constant 0 : index
    %c0_19 = arith.constant 0 : index
    %16 = vector.load %arg8[%c0_18, %c0_19] : memref<1x1xf32, #tpu.memory_space<vmem>>, vector<1x1xf32>
    %cst_20 = arith.constant dense<0.000000e+00> : vector<48x1xf32>
    %17 = tpu.matmul %0, %12, %cst_20 {dimension_numbers = #tpu.dot_dimension_numbers<[1], [0], [0], [1], [0, 0, 1, 1], [], []>} : vector<48x48xf32>, vector<48x1xf32>, vector<48x1xf32> -> vector<48x1xf32>
    %cst_21 = arith.constant 1.000000e+00 : f32
    %18 = vector.broadcast %cst_21 : f32 to vector<48x1xf32>
    %19 = arith.maximumf %17, %18 : vector<48x1xf32>
    %20 = math.rsqrt %19 : vector<48x1xf32>
    %cst_22 = arith.constant dense<0.000000e+00> : vector<48x32xf32>
    %21 = tpu.matmul %1, %13, %cst_22 {dimension_numbers = #tpu.dot_dimension_numbers<[1], [0], [0], [1], [0, 0, 1, 1], [], []>} : vector<48x16xf32>, vector<16x32xf32>, vector<48x32xf32> -> vector<48x32xf32>
    %22 = vector.broadcast %20 : vector<48x1xf32> to vector<48x32xf32>
    %23 = arith.mulf %22, %21 : vector<48x32xf32>
    %cst_23 = arith.constant dense<0.000000e+00> : vector<48x32xf32>
    %24 = tpu.matmul %0, %23, %cst_23 {dimension_numbers = #tpu.dot_dimension_numbers<[1], [0], [0], [1], [0, 0, 1, 1], [], []>} : vector<48x48xf32>, vector<48x32xf32>, vector<48x32xf32> -> vector<48x32xf32>
    %25 = vector.broadcast %20 : vector<48x1xf32> to vector<48x32xf32>
    %26 = arith.mulf %25, %24 : vector<48x32xf32>
    %27 = vector.broadcast %14 : vector<1x32xf32> to vector<48x32xf32>
    %28 = arith.addf %26, %27 : vector<48x32xf32>
    %cst_24 = arith.constant 0.000000e+00 : f32
    %29 = vector.broadcast %cst_24 : f32 to vector<48x32xf32>
    %30 = arith.maximumf %28, %29 : vector<48x32xf32>
    %31 = vector.broadcast %12 : vector<48x1xf32> to vector<48x32xf32>
    %32 = arith.mulf %30, %31 : vector<48x32xf32>
    %cst_25 = arith.constant dense<0.000000e+00> : vector<48x1xf32>
    %33 = tpu.matmul %32, %15, %cst_25 {dimension_numbers = #tpu.dot_dimension_numbers<[1], [0], [0], [1], [0, 0, 1, 1], [], []>} : vector<48x32xf32>, vector<32x1xf32>, vector<48x1xf32> -> vector<48x1xf32>
    %34 = arith.mulf %20, %33 : vector<48x1xf32>
    %cst_26 = arith.constant dense<0.000000e+00> : vector<48x1xf32>
    %35 = tpu.matmul %0, %34, %cst_26 {dimension_numbers = #tpu.dot_dimension_numbers<[1], [0], [0], [1], [0, 0, 1, 1], [], []>} : vector<48x48xf32>, vector<48x1xf32>, vector<48x1xf32> -> vector<48x1xf32>
    %36 = arith.mulf %20, %35 : vector<48x1xf32>
    %37 = vector.broadcast %16 : vector<1x1xf32> to vector<48x1xf32>
    %38 = arith.addf %36, %37 : vector<48x1xf32>
    %39 = math.tanh %38 : vector<48x1xf32>
    %40 = arith.mulf %39, %12 : vector<48x1xf32>
    %cst_27 = arith.constant 1.000000e+00 : f32
    %41 = vector.broadcast %cst_27 : f32 to vector<48x1xf32>
    %42 = arith.subf %12, %41 : vector<48x1xf32>
    %cst_28 = arith.constant 1.000000e+09 : f32
    %43 = vector.broadcast %cst_28 : f32 to vector<48x1xf32>
    %44 = arith.mulf %42, %43 : vector<48x1xf32>
    %45 = arith.addf %40, %44 : vector<48x1xf32>
    %46 = vector.broadcast %45 : vector<48x1xf32> to vector<48x48xf32>
    %47 = arith.mulf %46, %10 : vector<48x48xf32>
    %cst_29 = arith.constant dense<0.000000e+00> : vector<48x48xf32>
    %48 = tpu.matmul %11, %47, %cst_29 {dimension_numbers = #tpu.dot_dimension_numbers<[1], [0], [0], [1], [0, 0, 1, 1], [], []>} : vector<48x48xf32>, vector<48x48xf32>, vector<48x48xf32> -> vector<48x48xf32>
    %49 = vector.broadcast %45 : vector<48x1xf32> to vector<48x48xf32>
    %50 = arith.cmpf ogt, %48, %49 : vector<48x48xf32>
    %cst_30 = arith.constant 1.000000e+00 : f32
    %cst_31 = arith.constant 0.000000e+00 : f32
    %51 = vector.broadcast %cst_30 : f32 to vector<48x48xf32>
    %52 = vector.broadcast %cst_31 : f32 to vector<48x48xf32>
    %53 = arith.select %50, %51, %52 : vector<48x48xi1>, vector<48x48xf32>
    %54 = arith.mulf %2, %53 : vector<48x48xf32>
    %55 = vector.broadcast %45 : vector<48x1xf32> to vector<48x48xf32>
    %56 = arith.cmpf oeq, %48, %55 : vector<48x48xf32>
    %cst_32 = arith.constant 1.000000e+00 : f32
    %cst_33 = arith.constant 0.000000e+00 : f32
    %57 = vector.broadcast %cst_32 : f32 to vector<48x48xf32>
    %58 = vector.broadcast %cst_33 : f32 to vector<48x48xf32>
    %59 = arith.select %56, %57, %58 : vector<48x48xi1>, vector<48x48xf32>
    %60 = arith.mulf %3, %59 : vector<48x48xf32>
    %61 = arith.addf %54, %60 : vector<48x48xf32>
    %cst_34 = arith.constant dense<0.000000e+00> : vector<48xf32>
    %62 = vector.multi_reduction <add>, %61, %cst_34 [1] : vector<48x48xf32> to vector<48xf32>
    %63 = vector.shape_cast %62 : vector<48xf32> to vector<48x1xf32>
    %cst_35 = arith.constant 6.000000e+00 : f32
    %64 = vector.broadcast %cst_35 : f32 to vector<48x1xf32>
    %65 = arith.cmpf olt, %63, %64 : vector<48x1xf32>
    %cst_36 = arith.constant 1.000000e+00 : f32
    %cst_37 = arith.constant 0.000000e+00 : f32
    %66 = vector.broadcast %cst_36 : f32 to vector<48x1xf32>
    %67 = vector.broadcast %cst_37 : f32 to vector<48x1xf32>
    %68 = arith.select %65, %66, %67 : vector<48x1xi1>, vector<48x1xf32>
    %69 = vector.broadcast %39 : vector<48x1xf32> to vector<48x32xf32>
    %70 = arith.mulf %30, %69 : vector<48x32xf32>
    %71 = vector.broadcast %68 : vector<48x1xf32> to vector<48x32xf32>
    %72 = arith.mulf %70, %71 : vector<48x32xf32>
    %cst_38 = arith.constant dense<0.000000e+00> : vector<4x32xf32>
    %73 = tpu.matmul %4, %72, %cst_38 {dimension_numbers = #tpu.dot_dimension_numbers<[1], [0], [0], [1], [0, 0, 1, 1], [], []>} : vector<4x48xf32>, vector<48x32xf32>, vector<4x32xf32> -> vector<4x32xf32>
    %cst_39 = arith.constant 0.166666672 : f32
    %74 = vector.broadcast %cst_39 : f32 to vector<4x32xf32>
    %75 = arith.mulf %73, %74 : vector<4x32xf32>
    %cst_40 = arith.constant 1.000000e+00 : f32
    %76 = vector.broadcast %cst_40 : f32 to vector<48x1xf32>
    %77 = arith.subf %68, %76 : vector<48x1xf32>
    %cst_41 = arith.constant 1.000000e+09 : f32
    %78 = vector.broadcast %cst_41 : f32 to vector<48x1xf32>
    %79 = arith.mulf %77, %78 : vector<48x1xf32>
    %80 = vector.broadcast %79 : vector<48x1xf32> to vector<48x32xf32>
    %81 = arith.addf %72, %80 : vector<48x32xf32>
    %82 = vector.extract_strided_slice %81 {offsets = [0, 0], sizes = [12, 32], strides = [1, 1]} : vector<48x32xf32> to vector<12x32xf32>
    %cst_42 = arith.constant dense<0xFF800000> : vector<32xf32>
    %83 = vector.multi_reduction <maximumf>, %82, %cst_42 [0] : vector<12x32xf32> to vector<32xf32>
    %84 = vector.shape_cast %83 : vector<32xf32> to vector<1x32xf32>
    %85 = vector.extract_strided_slice %81 {offsets = [12, 0], sizes = [12, 32], strides = [1, 1]} : vector<48x32xf32> to vector<12x32xf32>
    %cst_43 = arith.constant dense<0xFF800000> : vector<32xf32>
    %86 = vector.multi_reduction <maximumf>, %85, %cst_43 [0] : vector<12x32xf32> to vector<32xf32>
    %87 = vector.shape_cast %86 : vector<32xf32> to vector<1x32xf32>
    %88 = vector.extract_strided_slice %81 {offsets = [24, 0], sizes = [12, 32], strides = [1, 1]} : vector<48x32xf32> to vector<12x32xf32>
    %cst_44 = arith.constant dense<0xFF800000> : vector<32xf32>
    %89 = vector.multi_reduction <maximumf>, %88, %cst_44 [0] : vector<12x32xf32> to vector<32xf32>
    %90 = vector.shape_cast %89 : vector<32xf32> to vector<1x32xf32>
    %91 = vector.extract_strided_slice %81 {offsets = [36, 0], sizes = [12, 32], strides = [1, 1]} : vector<48x32xf32> to vector<12x32xf32>
    %cst_45 = arith.constant dense<0xFF800000> : vector<32xf32>
    %92 = vector.multi_reduction <maximumf>, %91, %cst_45 [0] : vector<12x32xf32> to vector<32xf32>
    %93 = vector.shape_cast %92 : vector<32xf32> to vector<1x32xf32>
    %94 = tpu.concatenate %84, %87, %90, %93 in 0 : vector<1x32xf32>, vector<1x32xf32>, vector<1x32xf32>, vector<1x32xf32> -> vector<4x32xf32>
    %95 = tpu.concatenate %94, %75 in 1 : vector<4x32xf32>, vector<4x32xf32> -> vector<4x64xf32>
    %96 = vector.broadcast %68 : vector<48x1xf32> to vector<48x48xf32>
    %97 = arith.mulf %0, %96 : vector<48x48xf32>
    %c0_46 = arith.constant 0 : index
    %c0_47 = arith.constant 0 : index
    %98 = vector.load %arg9[%c0_46, %c0_47] : memref<32x32xf32, #tpu.memory_space<vmem>>, vector<32x32xf32>
    %c0_48 = arith.constant 0 : index
    %c0_49 = arith.constant 0 : index
    %99 = vector.load %arg10[%c0_48, %c0_49] : memref<1x32xf32, #tpu.memory_space<vmem>>, vector<1x32xf32>
    %c0_50 = arith.constant 0 : index
    %c0_51 = arith.constant 0 : index
    %100 = vector.load %arg11[%c0_50, %c0_51] : memref<32x1xf32, #tpu.memory_space<vmem>>, vector<32x1xf32>
    %c0_52 = arith.constant 0 : index
    %c0_53 = arith.constant 0 : index
    %101 = vector.load %arg12[%c0_52, %c0_53] : memref<1x1xf32, #tpu.memory_space<vmem>>, vector<1x1xf32>
    %cst_54 = arith.constant dense<0.000000e+00> : vector<48x1xf32>
    %102 = tpu.matmul %97, %68, %cst_54 {dimension_numbers = #tpu.dot_dimension_numbers<[1], [0], [0], [1], [0, 0, 1, 1], [], []>} : vector<48x48xf32>, vector<48x1xf32>, vector<48x1xf32> -> vector<48x1xf32>
    %cst_55 = arith.constant 1.000000e+00 : f32
    %103 = vector.broadcast %cst_55 : f32 to vector<48x1xf32>
    %104 = arith.maximumf %102, %103 : vector<48x1xf32>
    %105 = math.rsqrt %104 : vector<48x1xf32>
    %cst_56 = arith.constant dense<0.000000e+00> : vector<48x32xf32>
    %106 = tpu.matmul %72, %98, %cst_56 {dimension_numbers = #tpu.dot_dimension_numbers<[1], [0], [0], [1], [0, 0, 1, 1], [], []>} : vector<48x32xf32>, vector<32x32xf32>, vector<48x32xf32> -> vector<48x32xf32>
    %107 = vector.broadcast %105 : vector<48x1xf32> to vector<48x32xf32>
    %108 = arith.mulf %107, %106 : vector<48x32xf32>
    %cst_57 = arith.constant dense<0.000000e+00> : vector<48x32xf32>
    %109 = tpu.matmul %97, %108, %cst_57 {dimension_numbers = #tpu.dot_dimension_numbers<[1], [0], [0], [1], [0, 0, 1, 1], [], []>} : vector<48x48xf32>, vector<48x32xf32>, vector<48x32xf32> -> vector<48x32xf32>
    %110 = vector.broadcast %105 : vector<48x1xf32> to vector<48x32xf32>
    %111 = arith.mulf %110, %109 : vector<48x32xf32>
    %112 = vector.broadcast %99 : vector<1x32xf32> to vector<48x32xf32>
    %113 = arith.addf %111, %112 : vector<48x32xf32>
    %cst_58 = arith.constant 0.000000e+00 : f32
    %114 = vector.broadcast %cst_58 : f32 to vector<48x32xf32>
    %115 = arith.maximumf %113, %114 : vector<48x32xf32>
    %116 = vector.broadcast %68 : vector<48x1xf32> to vector<48x32xf32>
    %117 = arith.mulf %115, %116 : vector<48x32xf32>
    %cst_59 = arith.constant dense<0.000000e+00> : vector<48x1xf32>
    %118 = tpu.matmul %117, %100, %cst_59 {dimension_numbers = #tpu.dot_dimension_numbers<[1], [0], [0], [1], [0, 0, 1, 1], [], []>} : vector<48x32xf32>, vector<32x1xf32>, vector<48x1xf32> -> vector<48x1xf32>
    %119 = arith.mulf %105, %118 : vector<48x1xf32>
    %cst_60 = arith.constant dense<0.000000e+00> : vector<48x1xf32>
    %120 = tpu.matmul %97, %119, %cst_60 {dimension_numbers = #tpu.dot_dimension_numbers<[1], [0], [0], [1], [0, 0, 1, 1], [], []>} : vector<48x48xf32>, vector<48x1xf32>, vector<48x1xf32> -> vector<48x1xf32>
    %121 = arith.mulf %105, %120 : vector<48x1xf32>
    %122 = vector.broadcast %101 : vector<1x1xf32> to vector<48x1xf32>
    %123 = arith.addf %121, %122 : vector<48x1xf32>
    %124 = math.tanh %123 : vector<48x1xf32>
    %125 = arith.mulf %124, %68 : vector<48x1xf32>
    %cst_61 = arith.constant 1.000000e+00 : f32
    %126 = vector.broadcast %cst_61 : f32 to vector<48x1xf32>
    %127 = arith.subf %68, %126 : vector<48x1xf32>
    %cst_62 = arith.constant 1.000000e+09 : f32
    %128 = vector.broadcast %cst_62 : f32 to vector<48x1xf32>
    %129 = arith.mulf %127, %128 : vector<48x1xf32>
    %130 = arith.addf %125, %129 : vector<48x1xf32>
    %131 = vector.broadcast %130 : vector<48x1xf32> to vector<48x48xf32>
    %132 = arith.mulf %131, %10 : vector<48x48xf32>
    %cst_63 = arith.constant dense<0.000000e+00> : vector<48x48xf32>
    %133 = tpu.matmul %11, %132, %cst_63 {dimension_numbers = #tpu.dot_dimension_numbers<[1], [0], [0], [1], [0, 0, 1, 1], [], []>} : vector<48x48xf32>, vector<48x48xf32>, vector<48x48xf32> -> vector<48x48xf32>
    %134 = vector.broadcast %130 : vector<48x1xf32> to vector<48x48xf32>
    %135 = arith.cmpf ogt, %133, %134 : vector<48x48xf32>
    %cst_64 = arith.constant 1.000000e+00 : f32
    %cst_65 = arith.constant 0.000000e+00 : f32
    %136 = vector.broadcast %cst_64 : f32 to vector<48x48xf32>
    %137 = vector.broadcast %cst_65 : f32 to vector<48x48xf32>
    %138 = arith.select %135, %136, %137 : vector<48x48xi1>, vector<48x48xf32>
    %139 = arith.mulf %2, %138 : vector<48x48xf32>
    %140 = vector.broadcast %130 : vector<48x1xf32> to vector<48x48xf32>
    %141 = arith.cmpf oeq, %133, %140 : vector<48x48xf32>
    %cst_66 = arith.constant 1.000000e+00 : f32
    %cst_67 = arith.constant 0.000000e+00 : f32
    %142 = vector.broadcast %cst_66 : f32 to vector<48x48xf32>
    %143 = vector.broadcast %cst_67 : f32 to vector<48x48xf32>
    %144 = arith.select %141, %142, %143 : vector<48x48xi1>, vector<48x48xf32>
    %145 = arith.mulf %3, %144 : vector<48x48xf32>
    %146 = arith.addf %139, %145 : vector<48x48xf32>
    %cst_68 = arith.constant dense<0.000000e+00> : vector<48xf32>
    %147 = vector.multi_reduction <add>, %146, %cst_68 [1] : vector<48x48xf32> to vector<48xf32>
    %148 = vector.shape_cast %147 : vector<48xf32> to vector<48x1xf32>
    %cst_69 = arith.constant 3.000000e+00 : f32
    %149 = vector.broadcast %cst_69 : f32 to vector<48x1xf32>
    %150 = arith.cmpf olt, %148, %149 : vector<48x1xf32>
    %cst_70 = arith.constant 1.000000e+00 : f32
    %cst_71 = arith.constant 0.000000e+00 : f32
    %151 = vector.broadcast %cst_70 : f32 to vector<48x1xf32>
    %152 = vector.broadcast %cst_71 : f32 to vector<48x1xf32>
    %153 = arith.select %150, %151, %152 : vector<48x1xi1>, vector<48x1xf32>
    %154 = vector.broadcast %124 : vector<48x1xf32> to vector<48x32xf32>
    %155 = arith.mulf %115, %154 : vector<48x32xf32>
    %156 = vector.broadcast %153 : vector<48x1xf32> to vector<48x32xf32>
    %157 = arith.mulf %155, %156 : vector<48x32xf32>
    %cst_72 = arith.constant dense<0.000000e+00> : vector<4x32xf32>
    %158 = tpu.matmul %4, %157, %cst_72 {dimension_numbers = #tpu.dot_dimension_numbers<[1], [0], [0], [1], [0, 0, 1, 1], [], []>} : vector<4x48xf32>, vector<48x32xf32>, vector<4x32xf32> -> vector<4x32xf32>
    %cst_73 = arith.constant 0.333333343 : f32
    %159 = vector.broadcast %cst_73 : f32 to vector<4x32xf32>
    %160 = arith.mulf %158, %159 : vector<4x32xf32>
    %cst_74 = arith.constant 1.000000e+00 : f32
    %161 = vector.broadcast %cst_74 : f32 to vector<48x1xf32>
    %162 = arith.subf %153, %161 : vector<48x1xf32>
    %cst_75 = arith.constant 1.000000e+09 : f32
    %163 = vector.broadcast %cst_75 : f32 to vector<48x1xf32>
    %164 = arith.mulf %162, %163 : vector<48x1xf32>
    %165 = vector.broadcast %164 : vector<48x1xf32> to vector<48x32xf32>
    %166 = arith.addf %157, %165 : vector<48x32xf32>
    %167 = vector.extract_strided_slice %166 {offsets = [0, 0], sizes = [12, 32], strides = [1, 1]} : vector<48x32xf32> to vector<12x32xf32>
    %cst_76 = arith.constant dense<0xFF800000> : vector<32xf32>
    %168 = vector.multi_reduction <maximumf>, %167, %cst_76 [0] : vector<12x32xf32> to vector<32xf32>
    %169 = vector.shape_cast %168 : vector<32xf32> to vector<1x32xf32>
    %170 = vector.extract_strided_slice %166 {offsets = [12, 0], sizes = [12, 32], strides = [1, 1]} : vector<48x32xf32> to vector<12x32xf32>
    %cst_77 = arith.constant dense<0xFF800000> : vector<32xf32>
    %171 = vector.multi_reduction <maximumf>, %170, %cst_77 [0] : vector<12x32xf32> to vector<32xf32>
    %172 = vector.shape_cast %171 : vector<32xf32> to vector<1x32xf32>
    %173 = vector.extract_strided_slice %166 {offsets = [24, 0], sizes = [12, 32], strides = [1, 1]} : vector<48x32xf32> to vector<12x32xf32>
    %cst_78 = arith.constant dense<0xFF800000> : vector<32xf32>
    %174 = vector.multi_reduction <maximumf>, %173, %cst_78 [0] : vector<12x32xf32> to vector<32xf32>
    %175 = vector.shape_cast %174 : vector<32xf32> to vector<1x32xf32>
    %176 = vector.extract_strided_slice %166 {offsets = [36, 0], sizes = [12, 32], strides = [1, 1]} : vector<48x32xf32> to vector<12x32xf32>
    %cst_79 = arith.constant dense<0xFF800000> : vector<32xf32>
    %177 = vector.multi_reduction <maximumf>, %176, %cst_79 [0] : vector<12x32xf32> to vector<32xf32>
    %178 = vector.shape_cast %177 : vector<32xf32> to vector<1x32xf32>
    %179 = tpu.concatenate %169, %172, %175, %178 in 0 : vector<1x32xf32>, vector<1x32xf32>, vector<1x32xf32>, vector<1x32xf32> -> vector<4x32xf32>
    %180 = tpu.concatenate %179, %160 in 1 : vector<4x32xf32>, vector<4x32xf32> -> vector<4x64xf32>
    %181 = vector.broadcast %153 : vector<48x1xf32> to vector<48x48xf32>
    %182 = arith.mulf %97, %181 : vector<48x48xf32>
    %c0_80 = arith.constant 0 : index
    %c0_81 = arith.constant 0 : index
    %183 = vector.load %arg13[%c0_80, %c0_81] : memref<32x32xf32, #tpu.memory_space<vmem>>, vector<32x32xf32>
    %c0_82 = arith.constant 0 : index
    %c0_83 = arith.constant 0 : index
    %184 = vector.load %arg14[%c0_82, %c0_83] : memref<1x32xf32, #tpu.memory_space<vmem>>, vector<1x32xf32>
    %c0_84 = arith.constant 0 : index
    %c0_85 = arith.constant 0 : index
    %185 = vector.load %arg15[%c0_84, %c0_85] : memref<32x1xf32, #tpu.memory_space<vmem>>, vector<32x1xf32>
    %c0_86 = arith.constant 0 : index
    %c0_87 = arith.constant 0 : index
    %186 = vector.load %arg16[%c0_86, %c0_87] : memref<1x1xf32, #tpu.memory_space<vmem>>, vector<1x1xf32>
    %cst_88 = arith.constant dense<0.000000e+00> : vector<48x1xf32>
    %187 = tpu.matmul %182, %153, %cst_88 {dimension_numbers = #tpu.dot_dimension_numbers<[1], [0], [0], [1], [0, 0, 1, 1], [], []>} : vector<48x48xf32>, vector<48x1xf32>, vector<48x1xf32> -> vector<48x1xf32>
    %cst_89 = arith.constant 1.000000e+00 : f32
    %188 = vector.broadcast %cst_89 : f32 to vector<48x1xf32>
    %189 = arith.maximumf %187, %188 : vector<48x1xf32>
    %190 = math.rsqrt %189 : vector<48x1xf32>
    %cst_90 = arith.constant dense<0.000000e+00> : vector<48x32xf32>
    %191 = tpu.matmul %157, %183, %cst_90 {dimension_numbers = #tpu.dot_dimension_numbers<[1], [0], [0], [1], [0, 0, 1, 1], [], []>} : vector<48x32xf32>, vector<32x32xf32>, vector<48x32xf32> -> vector<48x32xf32>
    %192 = vector.broadcast %190 : vector<48x1xf32> to vector<48x32xf32>
    %193 = arith.mulf %192, %191 : vector<48x32xf32>
    %cst_91 = arith.constant dense<0.000000e+00> : vector<48x32xf32>
    %194 = tpu.matmul %182, %193, %cst_91 {dimension_numbers = #tpu.dot_dimension_numbers<[1], [0], [0], [1], [0, 0, 1, 1], [], []>} : vector<48x48xf32>, vector<48x32xf32>, vector<48x32xf32> -> vector<48x32xf32>
    %195 = vector.broadcast %190 : vector<48x1xf32> to vector<48x32xf32>
    %196 = arith.mulf %195, %194 : vector<48x32xf32>
    %197 = vector.broadcast %184 : vector<1x32xf32> to vector<48x32xf32>
    %198 = arith.addf %196, %197 : vector<48x32xf32>
    %cst_92 = arith.constant 0.000000e+00 : f32
    %199 = vector.broadcast %cst_92 : f32 to vector<48x32xf32>
    %200 = arith.maximumf %198, %199 : vector<48x32xf32>
    %201 = vector.broadcast %153 : vector<48x1xf32> to vector<48x32xf32>
    %202 = arith.mulf %200, %201 : vector<48x32xf32>
    %cst_93 = arith.constant dense<0.000000e+00> : vector<48x1xf32>
    %203 = tpu.matmul %202, %185, %cst_93 {dimension_numbers = #tpu.dot_dimension_numbers<[1], [0], [0], [1], [0, 0, 1, 1], [], []>} : vector<48x32xf32>, vector<32x1xf32>, vector<48x1xf32> -> vector<48x1xf32>
    %204 = arith.mulf %190, %203 : vector<48x1xf32>
    %cst_94 = arith.constant dense<0.000000e+00> : vector<48x1xf32>
    %205 = tpu.matmul %182, %204, %cst_94 {dimension_numbers = #tpu.dot_dimension_numbers<[1], [0], [0], [1], [0, 0, 1, 1], [], []>} : vector<48x48xf32>, vector<48x1xf32>, vector<48x1xf32> -> vector<48x1xf32>
    %206 = arith.mulf %190, %205 : vector<48x1xf32>
    %207 = vector.broadcast %186 : vector<1x1xf32> to vector<48x1xf32>
    %208 = arith.addf %206, %207 : vector<48x1xf32>
    %209 = math.tanh %208 : vector<48x1xf32>
    %210 = arith.mulf %209, %153 : vector<48x1xf32>
    %cst_95 = arith.constant 1.000000e+00 : f32
    %211 = vector.broadcast %cst_95 : f32 to vector<48x1xf32>
    %212 = arith.subf %153, %211 : vector<48x1xf32>
    %cst_96 = arith.constant 1.000000e+09 : f32
    %213 = vector.broadcast %cst_96 : f32 to vector<48x1xf32>
    %214 = arith.mulf %212, %213 : vector<48x1xf32>
    %215 = arith.addf %210, %214 : vector<48x1xf32>
    %216 = vector.broadcast %215 : vector<48x1xf32> to vector<48x48xf32>
    %217 = arith.mulf %216, %10 : vector<48x48xf32>
    %cst_97 = arith.constant dense<0.000000e+00> : vector<48x48xf32>
    %218 = tpu.matmul %11, %217, %cst_97 {dimension_numbers = #tpu.dot_dimension_numbers<[1], [0], [0], [1], [0, 0, 1, 1], [], []>} : vector<48x48xf32>, vector<48x48xf32>, vector<48x48xf32> -> vector<48x48xf32>
    %219 = vector.broadcast %215 : vector<48x1xf32> to vector<48x48xf32>
    %220 = arith.cmpf ogt, %218, %219 : vector<48x48xf32>
    %cst_98 = arith.constant 1.000000e+00 : f32
    %cst_99 = arith.constant 0.000000e+00 : f32
    %221 = vector.broadcast %cst_98 : f32 to vector<48x48xf32>
    %222 = vector.broadcast %cst_99 : f32 to vector<48x48xf32>
    %223 = arith.select %220, %221, %222 : vector<48x48xi1>, vector<48x48xf32>
    %224 = arith.mulf %2, %223 : vector<48x48xf32>
    %225 = vector.broadcast %215 : vector<48x1xf32> to vector<48x48xf32>
    %226 = arith.cmpf oeq, %218, %225 : vector<48x48xf32>
    %cst_100 = arith.constant 1.000000e+00 : f32
    %cst_101 = arith.constant 0.000000e+00 : f32
    %227 = vector.broadcast %cst_100 : f32 to vector<48x48xf32>
    %228 = vector.broadcast %cst_101 : f32 to vector<48x48xf32>
    %229 = arith.select %226, %227, %228 : vector<48x48xi1>, vector<48x48xf32>
    %230 = arith.mulf %3, %229 : vector<48x48xf32>
    %231 = arith.addf %224, %230 : vector<48x48xf32>
    %cst_102 = arith.constant dense<0.000000e+00> : vector<48xf32>
    %232 = vector.multi_reduction <add>, %231, %cst_102 [1] : vector<48x48xf32> to vector<48xf32>
    %233 = vector.shape_cast %232 : vector<48xf32> to vector<48x1xf32>
    %cst_103 = arith.constant 2.000000e+00 : f32
    %234 = vector.broadcast %cst_103 : f32 to vector<48x1xf32>
    %235 = arith.cmpf olt, %233, %234 : vector<48x1xf32>
    %cst_104 = arith.constant 1.000000e+00 : f32
    %cst_105 = arith.constant 0.000000e+00 : f32
    %236 = vector.broadcast %cst_104 : f32 to vector<48x1xf32>
    %237 = vector.broadcast %cst_105 : f32 to vector<48x1xf32>
    %238 = arith.select %235, %236, %237 : vector<48x1xi1>, vector<48x1xf32>
    %239 = vector.broadcast %209 : vector<48x1xf32> to vector<48x32xf32>
    %240 = arith.mulf %200, %239 : vector<48x32xf32>
    %241 = vector.broadcast %238 : vector<48x1xf32> to vector<48x32xf32>
    %242 = arith.mulf %240, %241 : vector<48x32xf32>
    %cst_106 = arith.constant dense<0.000000e+00> : vector<4x32xf32>
    %243 = tpu.matmul %4, %242, %cst_106 {dimension_numbers = #tpu.dot_dimension_numbers<[1], [0], [0], [1], [0, 0, 1, 1], [], []>} : vector<4x48xf32>, vector<48x32xf32>, vector<4x32xf32> -> vector<4x32xf32>
    %cst_107 = arith.constant 5.000000e-01 : f32
    %244 = vector.broadcast %cst_107 : f32 to vector<4x32xf32>
    %245 = arith.mulf %243, %244 : vector<4x32xf32>
    %cst_108 = arith.constant 1.000000e+00 : f32
    %246 = vector.broadcast %cst_108 : f32 to vector<48x1xf32>
    %247 = arith.subf %238, %246 : vector<48x1xf32>
    %cst_109 = arith.constant 1.000000e+09 : f32
    %248 = vector.broadcast %cst_109 : f32 to vector<48x1xf32>
    %249 = arith.mulf %247, %248 : vector<48x1xf32>
    %250 = vector.broadcast %249 : vector<48x1xf32> to vector<48x32xf32>
    %251 = arith.addf %242, %250 : vector<48x32xf32>
    %252 = vector.extract_strided_slice %251 {offsets = [0, 0], sizes = [12, 32], strides = [1, 1]} : vector<48x32xf32> to vector<12x32xf32>
    %cst_110 = arith.constant dense<0xFF800000> : vector<32xf32>
    %253 = vector.multi_reduction <maximumf>, %252, %cst_110 [0] : vector<12x32xf32> to vector<32xf32>
    %254 = vector.shape_cast %253 : vector<32xf32> to vector<1x32xf32>
    %255 = vector.extract_strided_slice %251 {offsets = [12, 0], sizes = [12, 32], strides = [1, 1]} : vector<48x32xf32> to vector<12x32xf32>
    %cst_111 = arith.constant dense<0xFF800000> : vector<32xf32>
    %256 = vector.multi_reduction <maximumf>, %255, %cst_111 [0] : vector<12x32xf32> to vector<32xf32>
    %257 = vector.shape_cast %256 : vector<32xf32> to vector<1x32xf32>
    %258 = vector.extract_strided_slice %251 {offsets = [24, 0], sizes = [12, 32], strides = [1, 1]} : vector<48x32xf32> to vector<12x32xf32>
    %cst_112 = arith.constant dense<0xFF800000> : vector<32xf32>
    %259 = vector.multi_reduction <maximumf>, %258, %cst_112 [0] : vector<12x32xf32> to vector<32xf32>
    %260 = vector.shape_cast %259 : vector<32xf32> to vector<1x32xf32>
    %261 = vector.extract_strided_slice %251 {offsets = [36, 0], sizes = [12, 32], strides = [1, 1]} : vector<48x32xf32> to vector<12x32xf32>
    %cst_113 = arith.constant dense<0xFF800000> : vector<32xf32>
    %262 = vector.multi_reduction <maximumf>, %261, %cst_113 [0] : vector<12x32xf32> to vector<32xf32>
    %263 = vector.shape_cast %262 : vector<32xf32> to vector<1x32xf32>
    %264 = tpu.concatenate %254, %257, %260, %263 in 0 : vector<1x32xf32>, vector<1x32xf32>, vector<1x32xf32>, vector<1x32xf32> -> vector<4x32xf32>
    %265 = tpu.concatenate %264, %245 in 1 : vector<4x32xf32>, vector<4x32xf32> -> vector<4x64xf32>
    %266 = tpu.concatenate %95, %180, %265 in 1 : vector<4x64xf32>, vector<4x64xf32>, vector<4x64xf32> -> vector<4x192xf32>
    %c0_114 = arith.constant 0 : index
    %c0_115 = arith.constant 0 : index
    %267 = vector.load %arg17[%c0_114, %c0_115] : memref<4x192xf32, #tpu.memory_space<vmem>>, vector<4x192xf32>
    %268 = arith.mulf %266, %267 : vector<4x192xf32>
    %c0_116 = arith.constant 0 : index
    %c0_117 = arith.constant 0 : index
    %269 = vector.load %arg18[%c0_116, %c0_117] : memref<7x4xf32, #tpu.memory_space<vmem>>, vector<7x4xf32>
    %cst_118 = arith.constant dense<0.000000e+00> : vector<7x192xf32>
    %270 = tpu.matmul %269, %268, %cst_118 {dimension_numbers = #tpu.dot_dimension_numbers<[1], [0], [0], [1], [0, 0, 1, 1], [], []>} : vector<7x4xf32>, vector<4x192xf32>, vector<7x192xf32> -> vector<7x192xf32>
    %c0_119 = arith.constant 0 : index
    %c0_120 = arith.constant 0 : index
    %271 = vector.load %arg19[%c0_119, %c0_120] : memref<7x7xf32, #tpu.memory_space<vmem>>, vector<7x7xf32>
    %cst_121 = arith.constant dense<0.000000e+00> : vector<7xf32>
    %272 = vector.multi_reduction <add>, %271, %cst_121 [1] : vector<7x7xf32> to vector<7xf32>
    %273 = vector.shape_cast %272 : vector<7xf32> to vector<7x1xf32>
    %274 = math.rsqrt %273 : vector<7x1xf32>
    %c0_122 = arith.constant 0 : index
    %c0_123 = arith.constant 0 : index
    %275 = vector.load %arg20[%c0_122, %c0_123] : memref<192x32xf32, #tpu.memory_space<vmem>>, vector<192x32xf32>
    %c0_124 = arith.constant 0 : index
    %c0_125 = arith.constant 0 : index
    %276 = vector.load %arg21[%c0_124, %c0_125] : memref<1x32xf32, #tpu.memory_space<vmem>>, vector<1x32xf32>
    %cst_126 = arith.constant dense<0.000000e+00> : vector<7x32xf32>
    %277 = tpu.matmul %270, %275, %cst_126 {dimension_numbers = #tpu.dot_dimension_numbers<[1], [0], [0], [1], [0, 0, 1, 1], [], []>} : vector<7x192xf32>, vector<192x32xf32>, vector<7x32xf32> -> vector<7x32xf32>
    %278 = vector.broadcast %274 : vector<7x1xf32> to vector<7x32xf32>
    %279 = arith.mulf %278, %277 : vector<7x32xf32>
    %cst_127 = arith.constant dense<0.000000e+00> : vector<7x32xf32>
    %280 = tpu.matmul %271, %279, %cst_127 {dimension_numbers = #tpu.dot_dimension_numbers<[1], [0], [0], [1], [0, 0, 1, 1], [], []>} : vector<7x7xf32>, vector<7x32xf32>, vector<7x32xf32> -> vector<7x32xf32>
    %281 = vector.broadcast %274 : vector<7x1xf32> to vector<7x32xf32>
    %282 = arith.mulf %281, %280 : vector<7x32xf32>
    %283 = vector.broadcast %276 : vector<1x32xf32> to vector<7x32xf32>
    %284 = arith.addf %282, %283 : vector<7x32xf32>
    %cst_128 = arith.constant 0.000000e+00 : f32
    %285 = vector.broadcast %cst_128 : f32 to vector<7x32xf32>
    %286 = arith.maximumf %284, %285 : vector<7x32xf32>
    %287 = vector.extract_strided_slice %286 {offsets = [0, 0], sizes = [4, 32], strides = [1, 1]} : vector<7x32xf32> to vector<4x32xf32>
    %c0_129 = arith.constant 0 : index
    %c0_130 = arith.constant 0 : index
    %288 = vector.load %arg30[%c0_129, %c0_130] : memref<4x32xf32, #tpu.memory_space<vmem>>, vector<4x32xf32>
    tpu.vector_store %arg30[%c0_129, %c0_130], %287 {strides = array<i32>} : memref<4x32xf32, #tpu.memory_space<vmem>>, vector<4x32xf32>,
    %c0_131 = arith.constant 0 : index
    %c0_132 = arith.constant 0 : index
    %289 = vector.load %arg22[%c0_131, %c0_132] : memref<16x7xf32, #tpu.memory_space<vmem>>, vector<16x7xf32>
    %cst_133 = arith.constant dense<0.000000e+00> : vector<16x32xf32>
    %290 = tpu.matmul %289, %286, %cst_133 {dimension_numbers = #tpu.dot_dimension_numbers<[1], [0], [0], [1], [0, 0, 1, 1], [], []>} : vector<16x7xf32>, vector<7x32xf32>, vector<16x32xf32> -> vector<16x32xf32>
    %c0_134 = arith.constant 0 : index
    %c0_135 = arith.constant 0 : index
    %291 = vector.load %arg23[%c0_134, %c0_135] : memref<16x7xf32, #tpu.memory_space<vmem>>, vector<16x7xf32>
    %cst_136 = arith.constant dense<0.000000e+00> : vector<16x32xf32>
    %292 = tpu.matmul %291, %286, %cst_136 {dimension_numbers = #tpu.dot_dimension_numbers<[1], [0], [0], [1], [0, 0, 1, 1], [], []>} : vector<16x7xf32>, vector<7x32xf32>, vector<16x32xf32> -> vector<16x32xf32>
    %c0_137 = arith.constant 0 : index
    %c0_138 = arith.constant 0 : index
    %293 = vector.load %arg24[%c0_137, %c0_138] : memref<32x32xf32, #tpu.memory_space<vmem>>, vector<32x32xf32>
    %cst_139 = arith.constant dense<0.000000e+00> : vector<16x32xf32>
    %294 = tpu.matmul %290, %293, %cst_139 {dimension_numbers = #tpu.dot_dimension_numbers<[1], [0], [0], [1], [0, 0, 1, 1], [], []>} : vector<16x32xf32>, vector<32x32xf32>, vector<16x32xf32> -> vector<16x32xf32>
    %c0_140 = arith.constant 0 : index
    %c0_141 = arith.constant 0 : index
    %295 = vector.load %arg25[%c0_140, %c0_141] : memref<1x32xf32, #tpu.memory_space<vmem>>, vector<1x32xf32>
    %296 = vector.broadcast %295 : vector<1x32xf32> to vector<16x32xf32>
    %297 = arith.addf %294, %296 : vector<16x32xf32>
    %c0_142 = arith.constant 0 : index
    %c0_143 = arith.constant 0 : index
    %298 = vector.load %arg26[%c0_142, %c0_143] : memref<32x32xf32, #tpu.memory_space<vmem>>, vector<32x32xf32>
    %cst_144 = arith.constant dense<0.000000e+00> : vector<16x32xf32>
    %299 = tpu.matmul %292, %298, %cst_144 {dimension_numbers = #tpu.dot_dimension_numbers<[1], [0], [0], [1], [0, 0, 1, 1], [], []>} : vector<16x32xf32>, vector<32x32xf32>, vector<16x32xf32> -> vector<16x32xf32>
    %c0_145 = arith.constant 0 : index
    %c0_146 = arith.constant 0 : index
    %300 = vector.load %arg27[%c0_145, %c0_146] : memref<1x32xf32, #tpu.memory_space<vmem>>, vector<1x32xf32>
    %301 = vector.broadcast %300 : vector<1x32xf32> to vector<16x32xf32>
    %302 = arith.addf %299, %301 : vector<16x32xf32>
    %303 = arith.mulf %297, %302 : vector<16x32xf32>
    %cst_147 = arith.constant dense<0.000000e+00> : vector<16xf32>
    %304 = vector.multi_reduction <add>, %303, %cst_147 [1] : vector<16x32xf32> to vector<16xf32>
    %305 = vector.shape_cast %304 : vector<16xf32> to vector<16x1xf32>
    %c0_148 = arith.constant 0 : index
    %c0_149 = arith.constant 0 : index
    %306 = vector.load %arg28[%c0_148, %c0_149] : memref<16x1xf32, #tpu.memory_space<vmem>>, vector<16x1xf32>
    %cst_150 = arith.constant 0.000000e+00 : f32
    %307 = vector.broadcast %cst_150 : f32 to vector<16x1xf32>
    %308 = arith.maximumf %305, %307 : vector<16x1xf32>
    %309 = arith.mulf %305, %306 : vector<16x1xf32>
    %310 = arith.subf %308, %309 : vector<16x1xf32>
    %311 = math.absf %305 : vector<16x1xf32>
    %cst_151 = arith.constant 0.000000e+00 : f32
    %312 = vector.broadcast %cst_151 : f32 to vector<16x1xf32>
    %313 = arith.subf %312, %311 : vector<16x1xf32>
    %314 = math.exp %313 : vector<16x1xf32>
    %315 = math.log1p %314 : vector<16x1xf32>
    %316 = arith.addf %310, %315 : vector<16x1xf32>
    %c0_152 = arith.constant 0 : index
    %c0_153 = arith.constant 0 : index
    %317 = vector.load %arg29[%c0_152, %c0_153] : memref<16x1xf32, #tpu.memory_space<vmem>>, vector<16x1xf32>
    %318 = arith.mulf %316, %317 : vector<16x1xf32>
    %cst_154 = arith.constant dense<0.000000e+00> : vector<1xf32>
    %319 = vector.multi_reduction <add>, %318, %cst_154 [0] : vector<16x1xf32> to vector<1xf32>
    %320 = vector.shape_cast %319 : vector<1xf32> to vector<1x1xf32>
    %c0_155 = arith.constant 0 : index
    %c0_156 = arith.constant 0 : index
    %321 = vector.load %arg31[%c0_155, %c0_156] : memref<1x1xf32, #tpu.memory_space<vmem>>, vector<1x1xf32>
    tpu.vector_store %arg31[%c0_155, %c0_156], %320 {strides = array<i32>} : memref<1x1xf32, #tpu.memory_space<vmem>>, vector<1x1xf32>,
    return
  }
}

</mosaic_0001>

<llo_original>
// kernel: forward.1
$region0: #{forward.1}
  #allocation0 [shape = 'u32[]', space=smem, size = 0x4, offset = 0x4, fixed_abs, tag = 'smem constant byte address 0x4 - core index']
  #allocation1 [shape = 'u32[72,128]{1,0:T(1,128)}', space=vmem, size = 0x9000, scoped, tag = 'internal scratch']
  #allocation2 [shape = 'f32[1,1]{1,0:T(1,128)S(1)}', space=vmem, size = 0x200, scoped, tag = 'scoped memory for forward.1']
  #allocation3 [shape = 'f32[1,1]{1,0:T(1,128)S(1)}', space=vmem, size = 0x200, scoped, tag = 'scoped memory for forward.1']
  #allocation4 [shape = 'f32[1,1]{1,0:T(1,128)S(1)}', space=vmem, size = 0x200, scoped, tag = 'scoped memory for forward.1']
  %s0 = inlined_call_operand.smem [shape: u32[32], index: -1, kind: input, shape index: {}]
  %s1 = sld [smem:[%s0]]
  %s2 = scalar_lea.smem %s0, 1
  %s3 = sld [smem:[%s2]]
  %s4 = scalar_lea.smem %s0, 2
  %s5 = sld [smem:[%s4]]
  %s6 = scalar_lea.smem %s0, 3
  %s7 = sld [smem:[%s6]]
  %s8 = scalar_lea.smem %s0, 4
  %s9 = sld [smem:[%s8]]
  %s10 = scalar_lea.smem %s0, 5
  %s11 = sld [smem:[%s10]]
  %s12 = scalar_lea.smem %s0, 6
  %s13 = sld [smem:[%s12]]
  %s14 = scalar_lea.smem %s0, 7
  %s15 = sld [smem:[%s14]]
  %s16 = scalar_lea.smem %s0, 8
  %s17 = sld [smem:[%s16]]
  %s18 = scalar_lea.smem %s0, 9
  %s19 = sld [smem:[%s18]]
  %s20 = scalar_lea.smem %s0, 10
  %s21 = sld [smem:[%s20]]
  %s22 = scalar_lea.smem %s0, 11
  %s23 = sld [smem:[%s22]]
  %s24 = scalar_lea.smem %s0, 12
  %s25 = sld [smem:[%s24]]
  %s26 = scalar_lea.smem %s0, 13
  %s27 = sld [smem:[%s26]]
  %s28 = scalar_lea.smem %s0, 14
  %s29 = sld [smem:[%s28]]
  %s30 = scalar_lea.smem %s0, 15
  %s31 = sld [smem:[%s30]]
  %s32 = scalar_lea.smem %s0, 16
  %s33 = sld [smem:[%s32]]
  %s34 = scalar_lea.smem %s0, 17
  %s35 = sld [smem:[%s34]]
  %s36 = scalar_lea.smem %s0, 18
  %s37 = sld [smem:[%s36]]
  %s38 = scalar_lea.smem %s0, 19
  %s39 = sld [smem:[%s38]]
  %s40 = scalar_lea.smem %s0, 20
  %s41 = sld [smem:[%s40]]
  %s42 = scalar_lea.smem %s0, 21
  %s43 = sld [smem:[%s42]]
  %s44 = scalar_lea.smem %s0, 22
  %s45 = sld [smem:[%s44]]
  %s46 = scalar_lea.smem %s0, 23
  %s47 = sld [smem:[%s46]]
  %s48 = scalar_lea.smem %s0, 24
  %s49 = sld [smem:[%s48]]
  %s50 = scalar_lea.smem %s0, 25
  %s51 = sld [smem:[%s50]]
  %s52 = scalar_lea.smem %s0, 26
  %s53 = sld [smem:[%s52]]
  %s54 = scalar_lea.smem %s0, 27
  %s55 = sld [smem:[%s54]]
  %s56 = scalar_lea.smem %s0, 28
  %s57 = sld [smem:[%s56]]
  %s58 = scalar_lea.smem %s0, 29
  %s59 = sld [smem:[%s58]]
  %s60 = scalar_lea.smem %s0, 30
  %s61 = sld [smem:[%s60]]
  %s62 = scalar_lea.smem %s0, 31
  %s63 = sld [smem:[%s62]]
  %64 = xla_tuple %s61, %s63
  %s65 = sld [smem:[#allocation0]]
  $region138: #{forward.1} parent=0
    _
  %s67 = ssub.s32 1, %s65
  %s68 = scalar_select 0, %s67, %s65
  %v69 = vstv %s17
  %70 = vst [vmem:[#allocation2] sm:$0x1] %v69
  %v71 = vstv %s25
  %72 = vst [vmem:[#allocation3] sm:$0x1] %v71
  %v73 = vstv %s33
  %74 = vst [vmem:[#allocation4] sm:$0x1] %v73
  $region1: #{forward.1} parent=0
    #allocation5 [shape = 'u8[2048]{0}', space=vmem, size = 0x800, scoped, tag = 'output window, operand 0, single buffered']
    #allocation6 [shape = 's32[1]{0}', space=sflag, size = 0x4, scoped, tag = 'scoped memory for forward.1']
    #allocation7 [shape = 'u8[512]{0}', space=vmem, size = 0x400, scoped, tag = 'output window, operand 1, single buffered']
    #allocation8 [shape = 's32[1]{0}', space=sflag, size = 0x4, scoped, tag = 'scoped memory for forward.1']
    %75 = vsyncpa [#allocation6], 0
    %76 = vsyncpa [#allocation8], 0
    // Predicated region
    $region2: #{forward.1} parent=1 // pred_check
      _
    $region3: #{forward.1} parent=1 // pred_check_branch
      %78 = sbr.rel (0) target = $region5
    $region4: #{forward.1} parent=1 // pred_region
      _
    $region5: #{forward.1} parent=1 // pred_fallthru
      _
    // Predicated region
    $region6: #{forward.1} parent=1 // pred_check
      _
    $region7: #{forward.1} parent=1 // pred_check_branch
      %80 = sbr.rel (0) target = $region9
    $region8: #{forward.1} parent=1 // pred_region
      _
    $region9: #{forward.1} parent=1 // pred_fallthru
      _
    // Predicated region
    $region10: #{forward.1} parent=1 // pred_check
      _
    $region11: #{forward.1} parent=1 // pred_check_branch
      %82 = sbr.rel (0) target = $region13
    $region12: #{forward.1} parent=1 // pred_region
      _
    $region13: #{forward.1} parent=1 // pred_fallthru
      _
    // Predicated region
    $region14: #{forward.1} parent=1 // pred_check
      _
    $region15: #{forward.1} parent=1 // pred_check_branch
      %84 = sbr.rel (0) target = $region17
    $region16: #{forward.1} parent=1 // pred_region
      _
    $region17: #{forward.1} parent=1 // pred_fallthru
      _
    // Predicated region
    $region18: #{forward.1} parent=1 // pred_check
      _
    $region19: #{forward.1} parent=1 // pred_check_branch
      %86 = sbr.rel (0) target = $region21
    $region20: #{forward.1} parent=1 // pred_region
      _
    $region21: #{forward.1} parent=1 // pred_fallthru
      _
    // Predicated region
    $region22: #{forward.1} parent=1 // pred_check
      _
    $region23: #{forward.1} parent=1 // pred_check_branch
      %88 = sbr.rel (0) target = $region25
    $region24: #{forward.1} parent=1 // pred_region
      _
    $region25: #{forward.1} parent=1 // pred_fallthru
      _
    // Predicated region
    $region26: #{forward.1} parent=1 // pred_check
      _
    $region27: #{forward.1} parent=1 // pred_check_branch
      %90 = sbr.rel (0) target = $region29
    $region28: #{forward.1} parent=1 // pred_region
      _
    $region29: #{forward.1} parent=1 // pred_fallthru
      _
    // Predicated region
    $region30: #{forward.1} parent=1 // pred_check
      _
    $region31: #{forward.1} parent=1 // pred_check_branch
      %92 = sbr.rel (0) target = $region33
    $region32: #{forward.1} parent=1 // pred_region
      _
    $region33: #{forward.1} parent=1 // pred_fallthru
      _
    // Predicated region
    $region34: #{forward.1} parent=1 // pred_check
      _
    $region35: #{forward.1} parent=1 // pred_check_branch
      %94 = sbr.rel (0) target = $region37
    $region36: #{forward.1} parent=1 // pred_region
      _
    $region37: #{forward.1} parent=1 // pred_fallthru
      _
    // Predicated region
    $region38: #{forward.1} parent=1 // pred_check
      _
    $region39: #{forward.1} parent=1 // pred_check_branch
      %96 = sbr.rel (0) target = $region41
    $region40: #{forward.1} parent=1 // pred_region
      _
    $region41: #{forward.1} parent=1 // pred_fallthru
      _
    // Predicated region
    $region42: #{forward.1} parent=1 // pred_check
      _
    $region43: #{forward.1} parent=1 // pred_check_branch
      %98 = sbr.rel (0) target = $region45
    $region44: #{forward.1} parent=1 // pred_region
      _
    $region45: #{forward.1} parent=1 // pred_fallthru
      _
    // Predicated region
    $region46: #{forward.1} parent=1 // pred_check
      _
    $region47: #{forward.1} parent=1 // pred_check_branch
      %100 = sbr.rel (0) target = $region49
    $region48: #{forward.1} parent=1 // pred_region
      _
    $region49: #{forward.1} parent=1 // pred_fallthru
      _
    // Predicated region
    $region50: #{forward.1} parent=1 // pred_check
      _
    $region51: #{forward.1} parent=1 // pred_check_branch
      %102 = sbr.rel (0) target = $region53
    $region52: #{forward.1} parent=1 // pred_region
      _
    $region53: #{forward.1} parent=1 // pred_fallthru
      _
    // Predicated region
    $region54: #{forward.1} parent=1 // pred_check
      _
    $region55: #{forward.1} parent=1 // pred_check_branch
      %104 = sbr.rel (0) target = $region57
    $region56: #{forward.1} parent=1 // pred_region
      _
    $region57: #{forward.1} parent=1 // pred_fallthru
      _
    // Predicated region
    $region58: #{forward.1} parent=1 // pred_check
      _
    $region59: #{forward.1} parent=1 // pred_check_branch
      %106 = sbr.rel (0) target = $region61
    $region60: #{forward.1} parent=1 // pred_region
      _
    $region61: #{forward.1} parent=1 // pred_fallthru
      _
    // Predicated region
    $region62: #{forward.1} parent=1 // pred_check
      _
    $region63: #{forward.1} parent=1 // pred_check_branch
      %108 = sbr.rel (0) target = $region65
    $region64: #{forward.1} parent=1 // pred_region
      _
    $region65: #{forward.1} parent=1 // pred_fallthru
      _
    // Predicated region
    $region66: #{forward.1} parent=1 // pred_check
      _
    $region67: #{forward.1} parent=1 // pred_check_branch
      %110 = sbr.rel (0) target = $region69
    $region68: #{forward.1} parent=1 // pred_region
      _
    $region69: #{forward.1} parent=1 // pred_fallthru
      _
    // Predicated region
    $region70: #{forward.1} parent=1 // pred_check
      _
    $region71: #{forward.1} parent=1 // pred_check_branch
      %112 = sbr.rel (0) target = $region73
    $region72: #{forward.1} parent=1 // pred_region
      _
    $region73: #{forward.1} parent=1 // pred_fallthru
      _
    // Predicated region
    $region74: #{forward.1} parent=1 // pred_check
      _
    $region75: #{forward.1} parent=1 // pred_check_branch
      %114 = sbr.rel (0) target = $region77
    $region76: #{forward.1} parent=1 // pred_region
      _
    $region77: #{forward.1} parent=1 // pred_fallthru
      _
    // Predicated region
    $region78: #{forward.1} parent=1 // pred_check
      _
    $region79: #{forward.1} parent=1 // pred_check_branch
      %116 = sbr.rel (0) target = $region81
    $region80: #{forward.1} parent=1 // pred_region
      _
    $region81: #{forward.1} parent=1 // pred_fallthru
      _
    // Predicated region
    $region82: #{forward.1} parent=1 // pred_check
      _
    $region83: #{forward.1} parent=1 // pred_check_branch
      %118 = sbr.rel (0) target = $region85
    $region84: #{forward.1} parent=1 // pred_region
      _
    $region85: #{forward.1} parent=1 // pred_fallthru
      _
    // Predicated region
    $region86: #{forward.1} parent=1 // pred_check
      _
    $region87: #{forward.1} parent=1 // pred_check_branch
      %120 = sbr.rel (0) target = $region89
    $region88: #{forward.1} parent=1 // pred_region
      _
    $region89: #{forward.1} parent=1 // pred_fallthru
      _
    // Predicated region
    $region90: #{forward.1} parent=1 // pred_check
      _
    $region91: #{forward.1} parent=1 // pred_check_branch
      %122 = sbr.rel (0) target = $region93
    $region92: #{forward.1} parent=1 // pred_region
      _
    $region93: #{forward.1} parent=1 // pred_fallthru
      _
    // Predicated region
    $region94: #{forward.1} parent=1 // pred_check
      _
    $region95: #{forward.1} parent=1 // pred_check_branch
      %124 = sbr.rel (0) target = $region97
    $region96: #{forward.1} parent=1 // pred_region
      _
    $region97: #{forward.1} parent=1 // pred_fallthru
      _
    // Predicated region
    $region98: #{forward.1} parent=1 // pred_check
      _
    $region99: #{forward.1} parent=1 // pred_check_branch
      %126 = sbr.rel (0) target = $region101
    $region100: #{forward.1} parent=1 // pred_region
      _
    $region101: #{forward.1} parent=1 // pred_fallthru
      _
    // Predicated region
    $region102: #{forward.1} parent=1 // pred_check
      _
    $region103: #{forward.1} parent=1 // pred_check_branch
      %128 = sbr.rel (0) target = $region105
    $region104: #{forward.1} parent=1 // pred_region
      _
    $region105: #{forward.1} parent=1 // pred_fallthru
      _
    // Predicated region
    $region106: #{forward.1} parent=1 // pred_check
      _
    $region107: #{forward.1} parent=1 // pred_check_branch
      %130 = sbr.rel (0) target = $region109
    $region108: #{forward.1} parent=1 // pred_region
      _
    $region109: #{forward.1} parent=1 // pred_fallthru
      _
    // Predicated region
    $region110: #{forward.1} parent=1 // pred_check
      _
    $region111: #{forward.1} parent=1 // pred_check_branch
      %132 = sbr.rel (0) target = $region113
    $region112: #{forward.1} parent=1 // pred_region
      _
    $region113: #{forward.1} parent=1 // pred_fallthru
      _
    // Predicated region
    $region114: #{forward.1} parent=1 // pred_check
      _
    $region115: #{forward.1} parent=1 // pred_check_branch
      %134 = sbr.rel (0) target = $region117
    $region116: #{forward.1} parent=1 // pred_region
      _
    $region117: #{forward.1} parent=1 // pred_fallthru
      _
    // Predicated region
    $region118: #{forward.1} parent=1 // pred_check
      _
    $region119: #{forward.1} parent=1 // pred_check_branch
      %136 = sbr.rel (0) target = $region121
    $region120: #{forward.1} parent=1 // pred_region
      _
    $region121: #{forward.1} parent=1 // pred_fallthru
      _
    %v137 = vld [vmem:[%s1] sm:$0xff]
    %v138 = vld [vmem:[%s1 + $0x8] sm:$0xff]
    %v139 = vld [vmem:[%s1 + $0x10] sm:$0xff]
    %v140 = vld [vmem:[%s1 + $0x18] sm:$0xff]
    %v141 = vld [vmem:[%s1 + $0x20] sm:$0xff]
    %v142 = vld [vmem:[%s1 + $0x28] sm:$0xff]
    %v143 = vld [vmem:[%s3] sm:$0xff]
    %v144 = vld [vmem:[%s3 + $0x8] sm:$0xff]
    %v145 = vld [vmem:[%s3 + $0x10] sm:$0xff]
    %v146 = vld [vmem:[%s3 + $0x18] sm:$0xff]
    %v147 = vld [vmem:[%s3 + $0x20] sm:$0xff]
    %v148 = vld [vmem:[%s3 + $0x28] sm:$0xff]
    %v149 = vld [vmem:[%s5] sm:$0xff]
    %v150 = vld [vmem:[%s5 + $0x8] sm:$0xff]
    %v151 = vld [vmem:[%s5 + $0x10] sm:$0xff]
    %v152 = vld [vmem:[%s5 + $0x18] sm:$0xff]
    %v153 = vld [vmem:[%s5 + $0x20] sm:$0xff]
    %v154 = vld [vmem:[%s5 + $0x28] sm:$0xff]
    %v155 = vld [vmem:[%s7] sm:$0xff]
    %v156 = vld [vmem:[%s7 + $0x8] sm:$0xff]
    %v157 = vld [vmem:[%s7 + $0x10] sm:$0xff]
    %v158 = vld [vmem:[%s7 + $0x18] sm:$0xff]
    %v159 = vld [vmem:[%s7 + $0x20] sm:$0xff]
    %v160 = vld [vmem:[%s7 + $0x28] sm:$0xff]
    %v161 = vld [vmem:[%s9] sm:$0xf]
    %v162 = vlaneseq
    %v163 = vshrl.u32 %v162, 7
    %v164 = vadd.s32 %v163, 8
    %v165 = vadd.s32 %v163, 16
    %v166 = vadd.s32 %v163, 24
    %v167 = vadd.s32 %v163, 32
    %v168 = vadd.s32 %v163, 40
    %v169 = vlaneseq
    %v170 = vand.u32 %v169, 127
    %vm171 = vcmp.eq.s32.totalorder %v163, %v170
    %vm172 = vcmp.eq.s32.totalorder %v164, %v170
    %vm173 = vcmp.eq.s32.totalorder %v165, %v170
    %vm174 = vcmp.eq.s32.totalorder %v166, %v170
    %vm175 = vcmp.eq.s32.totalorder %v167, %v170
    %vm176 = vcmp.eq.s32.totalorder %v168, %v170
    %v177 = vsel %vm171, 1.0, 0.0
    %v178 = vsel %vm172, 1.0, 0.0
    %v179 = vsel %vm173, 1.0, 0.0
    %v180 = vsel %vm174, 1.0, 0.0
    %v181 = vsel %vm175, 1.0, 0.0
    %v182 = vsel %vm176, 1.0, 0.0
    %v183 = vld [vmem:[%s11] sm:$0xff]
    %v184 = vld [vmem:[%s11 + $0x8] sm:$0xff]
    %v185 = vld [vmem:[%s13] sm:$0x1]
    %v186 = vld [vmem:[%s15] sm:$0xff]
    %v187 = vld [vmem:[%s15 + $0x8] sm:$0xff]
    %v188 = vld [vmem:[%s15 + $0x10] sm:$0xff]
    %v189 = vld [vmem:[%s15 + $0x18] sm:$0xff]
    %v190 = vld [vmem:[#allocation2] sm:$0x1]
    %vm191 = vcmask 392192
    %v193 = vsel %vm191, %v137, 0
    %v196 = vsel %vm191, %v138, 0
    %v199 = vsel %vm191, %v139, 0
    %v202 = vsel %vm191, %v140, 0
    %v205 = vsel %vm191, %v141, 0
    %v208 = vsel %vm191, %v142, 0
    %210 = vmatpush.msra.mxu0 0.0
    %211 = vmatpush.msra.mxu0 0.0
    %212 = vmatpush.msra.mxu0 0.0
    %213 = vmatpush.msra.mxu0 0.0
    %214 = vmatpush.msra.mxu0 0.0
    %215 = vmatpush.msra.mxu0 0.0
    %216 = vmatpush.msra.mxu0 0.0
    %217 = vmatpush.msra.mxu0 0.0
    %218 = vmatpush.msra.mxu0 0.0
    %219 = vmatpush.msra.mxu0 0.0
    %220 = vmatpush.msra.mxu0 1.0
    %221 = vmatpush.msra.mxu0 1.0
    %222 = vmatpush.msra.mxu0 1.0
    %223 = vmatpush.msra.mxu0 1.0
    %224 = vmatpush.msra.mxu0 1.0
    %225 = vmatpush.msra.mxu0 1.0
    %226 = vmatmul.f32.gmra.mxu0 %v193
    %v227 = vpop.f32.mrf.mxu0
    %v228 = vadd.f32 0.0, %v227
    %229 = vmatmul.f32.gmra.mxu0 %v196
    %v230 = vpop.f32.mrf.mxu0
    %v231 = vadd.f32 0.0, %v230
    %232 = vmatmul.f32.gmra.mxu0 %v199
    %v233 = vpop.f32.mrf.mxu0
    %v234 = vadd.f32 0.0, %v233
    %235 = vmatmul.f32.gmra.mxu0 %v202
    %v236 = vpop.f32.mrf.mxu0
    %v237 = vadd.f32 0.0, %v236
    %238 = vmatmul.f32.gmra.mxu0 %v205
    %v239 = vpop.f32.mrf.mxu0
    %v240 = vadd.f32 0.0, %v239
    %241 = vmatmul.f32.gmra.mxu0 %v208
    %v242 = vpop.f32.mrf.mxu0
    %v243 = vadd.f32 0.0, %v242
    %244 = vdwg.mxu0
    %v245 = vmax.f32 %v228, 1.0
    %v246 = vmax.f32 %v231, 1.0
    %v247 = vmax.f32 %v234, 1.0
    %v248 = vmax.f32 %v237, 1.0
    %v249 = vmax.f32 %v240, 1.0
    %v250 = vmax.f32 %v243, 1.0
    %v251 = vrsqrt.pop %v245
    %v252 = vmul.f32 %v251, %v245
    %v253 = vmul.f32 %v252, %v251
    %v254 = vmul.f32 0.5, %v253
    %v255 = vsub.f32 1.5, %v254
    %v256 = vmul.f32 %v251, %v255
    %vm257 = vweird.f32 %v245
    %vm258 = vweird.f32 %v251
    %vm259 = vmor %vm257, %vm258
    %v260 = vsel %vm259, %v251, %v256
    %v261 = vrsqrt.pop %v246
    %v262 = vmul.f32 %v261, %v246
    %v263 = vmul.f32 %v262, %v261
    %v264 = vmul.f32 0.5, %v263
    %v265 = vsub.f32 1.5, %v264
    %v266 = vmul.f32 %v261, %v265
    %vm267 = vweird.f32 %v246
    %vm268 = vweird.f32 %v261
    %vm269 = vmor %vm267, %vm268
    %v270 = vsel %vm269, %v261, %v266
    %v271 = vrsqrt.pop %v247
    %v272 = vmul.f32 %v271, %v247
    %v273 = vmul.f32 %v272, %v271
    %v274 = vmul.f32 0.5, %v273
    %v275 = vsub.f32 1.5, %v274
    %v276 = vmul.f32 %v271, %v275
    %vm277 = vweird.f32 %v247
    %vm278 = vweird.f32 %v271
    %vm279 = vmor %vm277, %vm278
    %v280 = vsel %vm279, %v271, %v276
    %v281 = vrsqrt.pop %v248
    %v282 = vmul.f32 %v281, %v248
    %v283 = vmul.f32 %v282, %v281
    %v284 = vmul.f32 0.5, %v283
    %v285 = vsub.f32 1.5, %v284
    %v286 = vmul.f32 %v281, %v285
    %vm287 = vweird.f32 %v248
    %vm288 = vweird.f32 %v281
    %vm289 = vmor %vm287, %vm288
    %v290 = vsel %vm289, %v281, %v286
    %v291 = vrsqrt.pop %v249
    %v292 = vmul.f32 %v291, %v249
    %v293 = vmul.f32 %v292, %v291
    %v294 = vmul.f32 0.5, %v293
    %v295 = vsub.f32 1.5, %v294
    %v296 = vmul.f32 %v291, %v295
    %vm297 = vweird.f32 %v249
    %vm298 = vweird.f32 %v291
    %vm299 = vmor %vm297, %vm298
    %v300 = vsel %vm299, %v291, %v296
    %v301 = vrsqrt.pop %v250
    %v302 = vmul.f32 %v301, %v250
    %v303 = vmul.f32 %v302, %v301
    %v304 = vmul.f32 0.5, %v303
    %v305 = vsub.f32 1.5, %v304
    %v306 = vmul.f32 %v301, %v305
    %vm307 = vweird.f32 %v250
    %vm308 = vweird.f32 %v301
    %vm309 = vmor %vm307, %vm308
    %v310 = vsel %vm309, %v301, %v306
    %vm311 = vcmask 130048
    %v313 = vsel %vm311, %v143, 0
    %v316 = vsel %vm311, %v144, 0
    %v319 = vsel %vm311, %v145, 0
    %v322 = vsel %vm311, %v146, 0
    %v325 = vsel %vm311, %v147, 0
    %v328 = vsel %vm311, %v148, 0
    %330 = vmatpush.msra.mxu0 0.0
    %331 = vmatpush.msra.mxu0 0.0
    %332 = vmatpush.msra.mxu0 0.0
    %333 = vmatpush.msra.mxu0 0.0
    %334 = vmatpush.msra.mxu0 0.0
    %335 = vmatpush.msra.mxu0 0.0
    %336 = vmatpush.msra.mxu0 0.0
    %337 = vmatpush.msra.mxu0 0.0
    %338 = vmatpush.msra.mxu0 0.0
    %339 = vmatpush.msra.mxu0 0.0
    %340 = vmatpush.msra.mxu0 0.0
    %341 = vmatpush.msra.mxu0 0.0
    %342 = vmatpush.msra.mxu0 0.0
    %343 = vmatpush.msra.mxu0 0.0
    %344 = vmatpush.msra.mxu0 %v184
    %345 = vmatpush.msra.mxu0 %v183
    %346 = vmatmul.f32.gmra.mxu0 %v313
    %v347 = vpop.f32.mrf.mxu0
    %v348 = vadd.f32 0.0, %v347
    %349 = vmatmul.f32.gmra.mxu0 %v316
    %v350 = vpop.f32.mrf.mxu0
    %v351 = vadd.f32 0.0, %v350
    %352 = vmatmul.f32.gmra.mxu0 %v319
    %v353 = vpop.f32.mrf.mxu0
    %v354 = vadd.f32 0.0, %v353
    %355 = vmatmul.f32.gmra.mxu0 %v322
    %v356 = vpop.f32.mrf.mxu0
    %v357 = vadd.f32 0.0, %v356
    %358 = vmatmul.f32.gmra.mxu0 %v325
    %v359 = vpop.f32.mrf.mxu0
    %v360 = vadd.f32 0.0, %v359
    %361 = vmatmul.f32.gmra.mxu0 %v328
    %v362 = vpop.f32.mrf.mxu0
    %v363 = vadd.f32 0.0, %v362
    %364 = vdwg.mxu0
    %366 = vset.pattern.permute.xlu0 0
    %367 = vperm.xlu0 %366, %v260
    %v368 = vpop.permute.xlu0 %367
    %371 = vset.pattern.permute.xlu0 0
    %372 = vperm.xlu0 %371, %v270
    %v373 = vpop.permute.xlu0 %372
    %376 = vset.pattern.permute.xlu0 0
    %377 = vperm.xlu0 %376, %v280
    %v378 = vpop.permute.xlu0 %377
    %381 = vset.pattern.permute.xlu0 0
    %382 = vperm.xlu0 %381, %v290
    %v383 = vpop.permute.xlu0 %382
    %386 = vset.pattern.permute.xlu0 0
    %387 = vperm.xlu0 %386, %v300
    %v388 = vpop.permute.xlu0 %387
    %391 = vset.pattern.permute.xlu0 0
    %392 = vperm.xlu0 %391, %v310
    %v393 = vpop.permute.xlu0 %392
    %v395 = vmul.f32 %v368, %v348
    %v396 = vmul.f32 %v373, %v351
    %v397 = vmul.f32 %v378, %v354
    %v398 = vmul.f32 %v383, %v357
    %v399 = vmul.f32 %v388, %v360
    %v400 = vmul.f32 %v393, %v363
    %401 = vmatpush.msra.mxu0 0.0
    %402 = vmatpush.msra.mxu0 0.0
    %403 = vmatpush.msra.mxu0 0.0
    %404 = vmatpush.msra.mxu0 0.0
    %405 = vmatpush.msra.mxu0 0.0
    %406 = vmatpush.msra.mxu0 0.0
    %407 = vmatpush.msra.mxu0 0.0
    %408 = vmatpush.msra.mxu0 0.0
    %409 = vmatpush.msra.mxu0 0.0
    %410 = vmatpush.msra.mxu0 0.0
    %411 = vmatpush.msra.mxu0 %v400
    %412 = vmatpush.msra.mxu0 %v399
    %413 = vmatpush.msra.mxu0 %v398
    %414 = vmatpush.msra.mxu0 %v397
    %415 = vmatpush.msra.mxu0 %v396
    %416 = vmatpush.msra.mxu0 %v395
    %417 = vmatmul.f32.gmra.mxu0 %v193
    %v418 = vpop.f32.mrf.mxu0
    %v419 = vadd.f32 0.0, %v418
    %420 = vmatmul.f32.gmra.mxu0 %v196
    %v421 = vpop.f32.mrf.mxu0
    %v422 = vadd.f32 0.0, %v421
    %423 = vmatmul.f32.gmra.mxu0 %v199
    %v424 = vpop.f32.mrf.mxu0
    %v425 = vadd.f32 0.0, %v424
    %426 = vmatmul.f32.gmra.mxu0 %v202
    %v427 = vpop.f32.mrf.mxu0
    %v428 = vadd.f32 0.0, %v427
    %429 = vmatmul.f32.gmra.mxu0 %v205
    %v430 = vpop.f32.mrf.mxu0
    %v431 = vadd.f32 0.0, %v430
    %432 = vmatmul.f32.gmra.mxu0 %v208
    %v433 = vpop.f32.mrf.mxu0
    %v434 = vadd.f32 0.0, %v433
    %435 = vdwg.mxu0
    %v436 = vmul.f32 %v368, %v419
    %v437 = vmul.f32 %v373, %v422
    %v438 = vmul.f32 %v378, %v425
    %v439 = vmul.f32 %v383, %v428
    %v440 = vmul.f32 %v388, %v431
    %v441 = vmul.f32 %v393, %v434
    %v443 = vperm.slane %v185, 0
    %v445 = vadd.f32 %v436, %v443
    %v446 = vadd.f32 %v437, %v443
    %v447 = vadd.f32 %v438, %v443
    %v448 = vadd.f32 %v439, %v443
    %v449 = vadd.f32 %v440, %v443
    %v450 = vadd.f32 %v441, %v443
    %v451 = vmax.f32 %v445, 0.0
    %v452 = vmax.f32 %v446, 0.0
    %v453 = vmax.f32 %v447, 0.0
    %v454 = vmax.f32 %v448, 0.0
    %v455 = vmax.f32 %v449, 0.0
    %v456 = vmax.f32 %v450, 0.0
    %vm457 = vcmask 261120
    %v459 = vsel %vm457, %v451, 0
    %v462 = vsel %vm457, %v452, 0
    %v465 = vsel %vm457, %v453, 0
    %v468 = vsel %vm457, %v454, 0
    %v471 = vsel %vm457, %v455, 0
    %v474 = vsel %vm457, %v456, 0
    %476 = vmatpush.msra.mxu0 0.0
    %477 = vmatpush.msra.mxu0 0.0
    %478 = vmatpush.msra.mxu0 0.0
    %479 = vmatpush.msra.mxu0 0.0
    %480 = vmatpush.msra.mxu0 0.0
    %481 = vmatpush.msra.mxu0 0.0
    %482 = vmatpush.msra.mxu0 0.0
    %483 = vmatpush.msra.mxu0 0.0
    %484 = vmatpush.msra.mxu0 0.0
    %485 = vmatpush.msra.mxu0 0.0
    %486 = vmatpush.msra.mxu0 0.0
    %487 = vmatpush.msra.mxu0 0.0
    %488 = vmatpush.msra.mxu0 %v189
    %489 = vmatpush.msra.mxu0 %v188
    %490 = vmatpush.msra.mxu0 %v187
    %491 = vmatpush.msra.mxu0 %v186
    %492 = vmatmul.f32.gmra.mxu0 %v459
    %v493 = vpop.f32.mrf.mxu0
    %v494 = vadd.f32 0.0, %v493
    %495 = vmatmul.f32.gmra.mxu0 %v462
    %v496 = vpop.f32.mrf.mxu0
    %v497 = vadd.f32 0.0, %v496
    %498 = vmatmul.f32.gmra.mxu0 %v465
    %v499 = vpop.f32.mrf.mxu0
    %v500 = vadd.f32 0.0, %v499
    %501 = vmatmul.f32.gmra.mxu0 %v468
    %v502 = vpop.f32.mrf.mxu0
    %v503 = vadd.f32 0.0, %v502
    %504 = vmatmul.f32.gmra.mxu0 %v471
    %v505 = vpop.f32.mrf.mxu0
    %v506 = vadd.f32 0.0, %v505
    %507 = vmatmul.f32.gmra.mxu0 %v474
    %v508 = vpop.f32.mrf.mxu0
    %v509 = vadd.f32 0.0, %v508
    %510 = vdwg.mxu0
    %v511 = vmul.f32 %v260, %v494
    %v512 = vmul.f32 %v270, %v497
    %v513 = vmul.f32 %v280, %v500
    %v514 = vmul.f32 %v290, %v503
    %v515 = vmul.f32 %v300, %v506
    %v516 = vmul.f32 %v310, %v509
    %517 = vmatpush.msra.mxu0 0.0
    %518 = vmatpush.msra.mxu0 0.0
    %519 = vmatpush.msra.mxu0 0.0
    %520 = vmatpush.msra.mxu0 0.0
    %521 = vmatpush.msra.mxu0 0.0
    %522 = vmatpush.msra.mxu0 0.0
    %523 = vmatpush.msra.mxu0 0.0
    %524 = vmatpush.msra.mxu0 0.0
    %525 = vmatpush.msra.mxu0 0.0
    %526 = vmatpush.msra.mxu0 0.0
    %527 = vmatpush.msra.mxu0 %v516
    %528 = vmatpush.msra.mxu0 %v515
    %529 = vmatpush.msra.mxu0 %v514
    %530 = vmatpush.msra.mxu0 %v513
    %531 = vmatpush.msra.mxu0 %v512
    %532 = vmatpush.msra.mxu0 %v511
    %533 = vmatmul.f32.gmra.mxu0 %v193
    %v534 = vpop.f32.mrf.mxu0
    %v535 = vadd.f32 0.0, %v534
    %536 = vmatmul.f32.gmra.mxu0 %v196
    %v537 = vpop.f32.mrf.mxu0
    %v538 = vadd.f32 0.0, %v537
    %539 = vmatmul.f32.gmra.mxu0 %v199
    %v540 = vpop.f32.mrf.mxu0
    %v541 = vadd.f32 0.0, %v540
    %542 = vmatmul.f32.gmra.mxu0 %v202
    %v543 = vpop.f32.mrf.mxu0
    %v544 = vadd.f32 0.0, %v543
    %545 = vmatmul.f32.gmra.mxu0 %v205
    %v546 = vpop.f32.mrf.mxu0
    %v547 = vadd.f32 0.0, %v546
    %548 = vmatmul.f32.gmra.mxu0 %v208
    %v549 = vpop.f32.mrf.mxu0
    %v550 = vadd.f32 0.0, %v549
    %551 = vdwg.mxu0
    %v552 = vmul.f32 %v260, %v535
    %v553 = vmul.f32 %v270, %v538
    %v554 = vmul.f32 %v280, %v541
    %v555 = vmul.f32 %v290, %v544
    %v556 = vmul.f32 %v300, %v547
    %v557 = vmul.f32 %v310, %v550
    %v559 = vperm.slane %v190, 0
    %v561 = vadd.f32 %v552, %v559
    %v562 = vadd.f32 %v553, %v559
    %v563 = vadd.f32 %v554, %v559
    %v564 = vadd.f32 %v555, %v559
    %v565 = vadd.f32 %v556, %v559
    %v566 = vadd.f32 %v557, %v559
    %v567 = vtanh.pop %v561
    %v568 = vtanh.pop %v562
    %v569 = vtanh.pop %v563
    %v570 = vtanh.pop %v564
    %v571 = vtanh.pop %v565
    %v572 = vtanh.pop %v566
    %v573 = vadd.f32 %v567, 0.0
    %v574 = vadd.f32 %v568, 0.0
    %v575 = vadd.f32 %v569, 0.0
    %v576 = vadd.f32 %v570, 0.0
    %v577 = vadd.f32 %v571, 0.0
    %v578 = vadd.f32 %v572, 0.0
    %580 = vset.pattern.permute.xlu0 0
    %581 = vperm.xlu0 %580, %v573
    %v582 = vpop.permute.xlu0 %581
    %585 = vset.pattern.permute.xlu0 0
    %586 = vperm.xlu0 %585, %v574
    %v587 = vpop.permute.xlu0 %586
    %590 = vset.pattern.permute.xlu0 0
    %591 = vperm.xlu0 %590, %v575
    %v592 = vpop.permute.xlu0 %591
    %595 = vset.pattern.permute.xlu0 0
    %596 = vperm.xlu0 %595, %v576
    %v597 = vpop.permute.xlu0 %596
    %600 = vset.pattern.permute.xlu0 0
    %601 = vperm.xlu0 %600, %v577
    %v602 = vpop.permute.xlu0 %601
    %605 = vset.pattern.permute.xlu0 0
    %606 = vperm.xlu0 %605, %v578
    %v607 = vpop.permute.xlu0 %606
    %v609 = vmul.f32 %v582, %v177
    %v610 = vmul.f32 %v587, %v178
    %v611 = vmul.f32 %v592, %v179
    %v612 = vmul.f32 %v597, %v180
    %v613 = vmul.f32 %v602, %v181
    %v614 = vmul.f32 %v607, %v182
    %v616 = vsel %vm191, 1.0, 0
    %618 = vmatpush.msra.mxu0 0.0
    %619 = vmatpush.msra.mxu0 0.0
    %620 = vmatpush.msra.mxu0 0.0
    %621 = vmatpush.msra.mxu0 0.0
    %622 = vmatpush.msra.mxu0 0.0
    %623 = vmatpush.msra.mxu0 0.0
    %624 = vmatpush.msra.mxu0 0.0
    %625 = vmatpush.msra.mxu0 0.0
    %626 = vmatpush.msra.mxu0 0.0
    %627 = vmatpush.msra.mxu0 0.0
    %628 = vmatpush.msra.mxu0 %v614
    %629 = vmatpush.msra.mxu0 %v613
    %630 = vmatpush.msra.mxu0 %v612
    %631 = vmatpush.msra.mxu0 %v611
    %632 = vmatpush.msra.mxu0 %v610
    %633 = vmatpush.msra.mxu0 %v609
    %634 = vmatmul.f32.gmra.mxu0 %v616
    %v635 = vpop.f32.mrf.mxu0
    %v636 = vadd.f32 0.0, %v635
    %637 = vmatmul.f32.gmra.mxu0 %v616
    %v638 = vpop.f32.mrf.mxu0
    %v639 = vadd.f32 0.0, %v638
    %640 = vmatmul.f32.gmra.mxu0 %v616
    %v641 = vpop.f32.mrf.mxu0
    %v642 = vadd.f32 0.0, %v641
    %643 = vmatmul.f32.gmra.mxu0 %v616
    %v644 = vpop.f32.mrf.mxu0
    %v645 = vadd.f32 0.0, %v644
    %646 = vmatmul.f32.gmra.mxu0 %v616
    %v647 = vpop.f32.mrf.mxu0
    %v648 = vadd.f32 0.0, %v647
    %649 = vmatmul.f32.gmra.mxu0 %v616
    %v650 = vpop.f32.mrf.mxu0
    %v651 = vadd.f32 0.0, %v650
    %652 = vdwg.mxu0
    %vm653 = vcmp.gt.f32.partialorder %v636, %v582
    %vm654 = vcmp.gt.f32.partialorder %v639, %v587
    %vm655 = vcmp.gt.f32.partialorder %v642, %v592
    %vm656 = vcmp.gt.f32.partialorder %v645, %v597
    %vm657 = vcmp.gt.f32.partialorder %v648, %v602
    %vm658 = vcmp.gt.f32.partialorder %v651, %v607
    %v659 = vsel %vm653, 1.0, 0.0
    %v660 = vsel %vm654, 1.0, 0.0
    %v661 = vsel %vm655, 1.0, 0.0
    %v662 = vsel %vm656, 1.0, 0.0
    %v663 = vsel %vm657, 1.0, 0.0
    %v664 = vsel %vm658, 1.0, 0.0
    %v665 = vmul.f32 %v149, %v659
    %v666 = vmul.f32 %v150, %v660
    %v667 = vmul.f32 %v151, %v661
    %v668 = vmul.f32 %v152, %v662
    %v669 = vmul.f32 %v153, %v663
    %v670 = vmul.f32 %v154, %v664
    %vm671 = vcmp.eq.f32.partialorder %v636, %v582
    %vm672 = vcmp.eq.f32.partialorder %v639, %v587
    %vm673 = vcmp.eq.f32.partialorder %v642, %v592
    %vm674 = vcmp.eq.f32.partialorder %v645, %v597
    %vm675 = vcmp.eq.f32.partialorder %v648, %v602
    %vm676 = vcmp.eq.f32.partialorder %v651, %v607
    %v677 = vsel %vm671, 1.0, 0.0
    %v678 = vsel %vm672, 1.0, 0.0
    %v679 = vsel %vm673, 1.0, 0.0
    %v680 = vsel %vm674, 1.0, 0.0
    %v681 = vsel %vm675, 1.0, 0.0
    %v682 = vsel %vm676, 1.0, 0.0
    %v683 = vmul.f32 %v155, %v677
    %v684 = vmul.f32 %v156, %v678
    %v685 = vmul.f32 %v157, %v679
    %v686 = vmul.f32 %v158, %v680
    %v687 = vmul.f32 %v159, %v681
    %v688 = vmul.f32 %v160, %v682
    %v689 = vadd.f32 %v665, %v683
    %v690 = vadd.f32 %v666, %v684
    %v691 = vadd.f32 %v667, %v685
    %v692 = vadd.f32 %v668, %v686
    %v693 = vadd.f32 %v669, %v687
    %v694 = vadd.f32 %v670, %v688
    %v695 = vsel %vm191, %v689, 0.0
    %696 = vadd.xlane.f32.xlu0 %v695
    %v697 = vpop.xlane.xlu0 %696
    %v698 = vsel %vm191, %v690, 0.0
    %699 = vadd.xlane.f32.xlu0 %v698
    %v700 = vpop.xlane.xlu0 %699
    %v701 = vsel %vm191, %v691, 0.0
    %702 = vadd.xlane.f32.xlu0 %v701
    %v703 = vpop.xlane.xlu0 %702
    %v704 = vsel %vm191, %v692, 0.0
    %705 = vadd.xlane.f32.xlu0 %v704
    %v706 = vpop.xlane.xlu0 %705
    %v707 = vsel %vm191, %v693, 0.0
    %708 = vadd.xlane.f32.xlu0 %v707
    %v709 = vpop.xlane.xlu0 %708
    %v710 = vsel %vm191, %v694, 0.0
    %711 = vadd.xlane.f32.xlu0 %v710
    %v712 = vpop.xlane.xlu0 %711
    %vm713 = vcmp.lt.f32.partialorder %v697, 6.0
    %vm714 = vcmp.lt.f32.partialorder %v700, 6.0
    %vm715 = vcmp.lt.f32.partialorder %v703, 6.0
    %vm716 = vcmp.lt.f32.partialorder %v706, 6.0
    %vm717 = vcmp.lt.f32.partialorder %v709, 6.0
    %vm718 = vcmp.lt.f32.partialorder %v712, 6.0
    %v719 = vsel %vm713, 1.0, 0.0
    %v720 = vsel %vm714, 1.0, 0.0
    %v721 = vsel %vm715, 1.0, 0.0
    %v722 = vsel %vm716, 1.0, 0.0
    %v723 = vsel %vm717, 1.0, 0.0
    %v724 = vsel %vm718, 1.0, 0.0
    %726 = vset.pattern.permute.xlu0 0
    %727 = vperm.xlu0 %726, %v567
    %v728 = vpop.permute.xlu0 %727
    %731 = vset.pattern.permute.xlu0 0
    %732 = vperm.xlu0 %731, %v568
    %v733 = vpop.permute.xlu0 %732
    %736 = vset.pattern.permute.xlu0 0
    %737 = vperm.xlu0 %736, %v569
    %v738 = vpop.permute.xlu0 %737
    %741 = vset.pattern.permute.xlu0 0
    %742 = vperm.xlu0 %741, %v570
    %v743 = vpop.permute.xlu0 %742
    %746 = vset.pattern.permute.xlu0 0
    %747 = vperm.xlu0 %746, %v571
    %v748 = vpop.permute.xlu0 %747
    %751 = vset.pattern.permute.xlu0 0
    %752 = vperm.xlu0 %751, %v572
    %v753 = vpop.permute.xlu0 %752
    %v755 = vmul.f32 %v451, %v728
    %v756 = vmul.f32 %v452, %v733
    %v757 = vmul.f32 %v453, %v738
    %v758 = vmul.f32 %v454, %v743
    %v759 = vmul.f32 %v455, %v748
    %v760 = vmul.f32 %v456, %v753
    %v761 = vmul.f32 %v755, %v719
    %v762 = vmul.f32 %v756, %v720
    %v763 = vmul.f32 %v757, %v721
    %v764 = vmul.f32 %v758, %v722
    %v765 = vmul.f32 %v759, %v723
    %v766 = vmul.f32 %v760, %v724
    %v768 = vsel %vm191, %v161, 0
    %770 = vmatpush.msra.mxu0 0.0
    %771 = vmatpush.msra.mxu0 0.0
    %772 = vmatpush.msra.mxu0 0.0
    %773 = vmatpush.msra.mxu0 0.0
    %774 = vmatpush.msra.mxu0 0.0
    %775 = vmatpush.msra.mxu0 0.0
    %776 = vmatpush.msra.mxu0 0.0
    %777 = vmatpush.msra.mxu0 0.0
    %778 = vmatpush.msra.mxu0 0.0
    %779 = vmatpush.msra.mxu0 0.0
    %780 = vmatpush.msra.mxu0 %v766
    %781 = vmatpush.msra.mxu0 %v765
    %782 = vmatpush.msra.mxu0 %v764
    %783 = vmatpush.msra.mxu0 %v763
    %784 = vmatpush.msra.mxu0 %v762
    %785 = vmatpush.msra.mxu0 %v761
    %786 = vmatmul.f32.gmra.mxu0 %v768
    %v787 = vpop.f32.mrf.mxu0
    %v788 = vadd.f32 0.0, %v787
    %789 = vdwg.mxu0
    %v790 = vmul.f32 %v788, 0.16666667
    %v791 = vsub.f32 %v719, 1.0
    %v792 = vsub.f32 %v720, 1.0
    %v793 = vsub.f32 %v721, 1.0
    %v794 = vsub.f32 %v722, 1.0
    %v795 = vsub.f32 %v723, 1.0
    %v796 = vsub.f32 %v724, 1.0
    %v797 = vmul.f32 %v791, 1e+09
    %v798 = vmul.f32 %v792, 1e+09
    %v799 = vmul.f32 %v793, 1e+09
    %v800 = vmul.f32 %v794, 1e+09
    %v801 = vmul.f32 %v795, 1e+09
    %v802 = vmul.f32 %v796, 1e+09
    %v803 = vadd.f32 %v761, %v797
    %v804 = vadd.f32 %v762, %v798
    %v805 = vadd.f32 %v763, %v799
    %v806 = vadd.f32 %v764, %v800
    %v807 = vadd.f32 %v765, %v801
    %v808 = vadd.f32 %v766, %v802
    %v809 = vsel %vm457, %v803, -inf
    %vm810 = vcmask 257024
    %v811 = vsel %vm810, %v804, -inf
    %v812 = vmax.f32 %v809, %v811
    %v813 = vrot.slane %v812, 4
    %v814 = vmax.f32 %v812, %v813
    %v815 = vrot.slane %v814, 2
    %v816 = vmax.f32 %v814, %v815
    %v817 = vrot.slane %v816, 1
    %v818 = vmax.f32 %v816, %v817
    %vm819 = vcmask 261124
    %v820 = vsel %vm819, %v804, -inf
    %v821 = vsel %vm457, %v805, -inf
    %v822 = vmax.f32 %v820, %v821
    %v823 = vrot.slane %v822, 4
    %v824 = vmax.f32 %v822, %v823
    %v825 = vrot.slane %v824, 2
    %v826 = vmax.f32 %v824, %v825
    %v827 = vrot.slane %v826, 1
    %v828 = vmax.f32 %v826, %v827
    %v829 = vsel %vm457, %v806, -inf
    %v830 = vsel %vm810, %v807, -inf
    %v831 = vmax.f32 %v829, %v830
    %v832 = vrot.slane %v831, 4
    %v833 = vmax.f32 %v831, %v832
    %v834 = vrot.slane %v833, 2
    %v835 = vmax.f32 %v833, %v834
    %v836 = vrot.slane %v835, 1
    %v837 = vmax.f32 %v835, %v836
    %v838 = vsel %vm819, %v807, -inf
    %v839 = vsel %vm457, %v808, -inf
    %v840 = vmax.f32 %v838, %v839
    %v841 = vrot.slane %v840, 4
    %v842 = vmax.f32 %v840, %v841
    %v843 = vrot.slane %v842, 2
    %v844 = vmax.f32 %v842, %v843
    %v845 = vrot.slane %v844, 1
    %v846 = vmax.f32 %v844, %v845
    %vm847 = vcmask 1040384
    %v848 = vsel %vm847, %v818, %v828
    %vm849 = vcmask 1041408
    %v850 = vsel %vm849, %v848, %v837
    %vm851 = vcmask 1042432
    %v852 = vsel %vm851, %v850, %v846
    %854 = vrot.lane.b32.xlu0 %v790, 32
    %v855 = vpop.permute.xlu0 %854
    %v857 = vsel %vm457, %v852, %v855
    %v858 = vmul.f32 %v137, %v719
    %v859 = vmul.f32 %v138, %v720
    %v860 = vmul.f32 %v139, %v721
    %v861 = vmul.f32 %v140, %v722
    %v862 = vmul.f32 %v141, %v723
    %v863 = vmul.f32 %v142, %v724
    %v864 = vld [vmem:[%s19] sm:$0xff]
    %v865 = vld [vmem:[%s19 + $0x8] sm:$0xff]
    %v866 = vld [vmem:[%s19 + $0x10] sm:$0xff]
    %v867 = vld [vmem:[%s19 + $0x18] sm:$0xff]
    %v868 = vld [vmem:[%s21] sm:$0x1]
    %v869 = vld [vmem:[%s23] sm:$0xff]
    %v870 = vld [vmem:[%s23 + $0x8] sm:$0xff]
    %v871 = vld [vmem:[%s23 + $0x10] sm:$0xff]
    %v872 = vld [vmem:[%s23 + $0x18] sm:$0xff]
    %v873 = vld [vmem:[#allocation3] sm:$0x1]
    %v875 = vsel %vm191, %v858, 0
    %v878 = vsel %vm191, %v859, 0
    %v881 = vsel %vm191, %v860, 0
    %v884 = vsel %vm191, %v861, 0
    %v887 = vsel %vm191, %v862, 0
    %v890 = vsel %vm191, %v863, 0
    %892 = vmatpush.msra.mxu0 0.0
    %893 = vmatpush.msra.mxu0 0.0
    %894 = vmatpush.msra.mxu0 0.0
    %895 = vmatpush.msra.mxu0 0.0
    %896 = vmatpush.msra.mxu0 0.0
    %897 = vmatpush.msra.mxu0 0.0
    %898 = vmatpush.msra.mxu0 0.0
    %899 = vmatpush.msra.mxu0 0.0
    %900 = vmatpush.msra.mxu0 0.0
    %901 = vmatpush.msra.mxu0 0.0
    %902 = vmatpush.msra.mxu0 %v724
    %903 = vmatpush.msra.mxu0 %v723
    %904 = vmatpush.msra.mxu0 %v722
    %905 = vmatpush.msra.mxu0 %v721
    %906 = vmatpush.msra.mxu0 %v720
    %907 = vmatpush.msra.mxu0 %v719
    %908 = vmatmul.f32.gmra.mxu0 %v875
    %v909 = vpop.f32.mrf.mxu0
    %v910 = vadd.f32 0.0, %v909
    %911 = vmatmul.f32.gmra.mxu0 %v878
    %v912 = vpop.f32.mrf.mxu0
    %v913 = vadd.f32 0.0, %v912
    %914 = vmatmul.f32.gmra.mxu0 %v881
    %v915 = vpop.f32.mrf.mxu0
    %v916 = vadd.f32 0.0, %v915
    %917 = vmatmul.f32.gmra.mxu0 %v884
    %v918 = vpop.f32.mrf.mxu0
    %v919 = vadd.f32 0.0, %v918
    %920 = vmatmul.f32.gmra.mxu0 %v887
    %v921 = vpop.f32.mrf.mxu0
    %v922 = vadd.f32 0.0, %v921
    %923 = vmatmul.f32.gmra.mxu0 %v890
    %v924 = vpop.f32.mrf.mxu0
    %v925 = vadd.f32 0.0, %v924
    %926 = vdwg.mxu0
    %v927 = vmax.f32 %v910, 1.0
    %v928 = vmax.f32 %v913, 1.0
    %v929 = vmax.f32 %v916, 1.0
    %v930 = vmax.f32 %v919, 1.0
    %v931 = vmax.f32 %v922, 1.0
    %v932 = vmax.f32 %v925, 1.0
    %v933 = vrsqrt.pop %v927
    %v934 = vmul.f32 %v933, %v927
    %v935 = vmul.f32 %v934, %v933
    %v936 = vmul.f32 0.5, %v935
    %v937 = vsub.f32 1.5, %v936
    %v938 = vmul.f32 %v933, %v937
    %vm939 = vweird.f32 %v927
    %vm940 = vweird.f32 %v933
    %vm941 = vmor %vm939, %vm940
    %v942 = vsel %vm941, %v933, %v938
    %v943 = vrsqrt.pop %v928
    %v944 = vmul.f32 %v943, %v928
    %v945 = vmul.f32 %v944, %v943
    %v946 = vmul.f32 0.5, %v945
    %v947 = vsub.f32 1.5, %v946
    %v948 = vmul.f32 %v943, %v947
    %vm949 = vweird.f32 %v928
    %vm950 = vweird.f32 %v943
    %vm951 = vmor %vm949, %vm950
    %v952 = vsel %vm951, %v943, %v948
    %v953 = vrsqrt.pop %v929
    %v954 = vmul.f32 %v953, %v929
    %v955 = vmul.f32 %v954, %v953
    %v956 = vmul.f32 0.5, %v955
    %v957 = vsub.f32 1.5, %v956
    %v958 = vmul.f32 %v953, %v957
    %vm959 = vweird.f32 %v929
    %vm960 = vweird.f32 %v953
    %vm961 = vmor %vm959, %vm960
    %v962 = vsel %vm961, %v953, %v958
    %v963 = vrsqrt.pop %v930
    %v964 = vmul.f32 %v963, %v930
    %v965 = vmul.f32 %v964, %v963
    %v966 = vmul.f32 0.5, %v965
    %v967 = vsub.f32 1.5, %v966
    %v968 = vmul.f32 %v963, %v967
    %vm969 = vweird.f32 %v930
    %vm970 = vweird.f32 %v963
    %vm971 = vmor %vm969, %vm970
    %v972 = vsel %vm971, %v963, %v968
    %v973 = vrsqrt.pop %v931
    %v974 = vmul.f32 %v973, %v931
    %v975 = vmul.f32 %v974, %v973
    %v976 = vmul.f32 0.5, %v975
    %v977 = vsub.f32 1.5, %v976
    %v978 = vmul.f32 %v973, %v977
    %vm979 = vweird.f32 %v931
    %vm980 = vweird.f32 %v973
    %vm981 = vmor %vm979, %vm980
    %v982 = vsel %vm981, %v973, %v978
    %v983 = vrsqrt.pop %v932
    %v984 = vmul.f32 %v983, %v932
    %v985 = vmul.f32 %v984, %v983
    %v986 = vmul.f32 0.5, %v985
    %v987 = vsub.f32 1.5, %v986
    %v988 = vmul.f32 %v983, %v987
    %vm989 = vweird.f32 %v932
    %vm990 = vweird.f32 %v983
    %vm991 = vmor %vm989, %vm990
    %v992 = vsel %vm991, %v983, %v988
    %v994 = vsel %vm457, %v761, 0
    %v997 = vsel %vm457, %v762, 0
    %v1000 = vsel %vm457, %v763, 0
    %v1003 = vsel %vm457, %v764, 0
    %v1006 = vsel %vm457, %v765, 0
    %v1009 = vsel %vm457, %v766, 0
    %1011 = vmatpush.msra.mxu0 0.0
    %1012 = vmatpush.msra.mxu0 0.0
    %1013 = vmatpush.msra.mxu0 0.0
    %1014 = vmatpush.msra.mxu0 0.0
    %1015 = vmatpush.msra.mxu0 0.0
    %1016 = vmatpush.msra.mxu0 0.0
    %1017 = vmatpush.msra.mxu0 0.0
    %1018 = vmatpush.msra.mxu0 0.0
    %1019 = vmatpush.msra.mxu0 0.0
    %1020 = vmatpush.msra.mxu0 0.0
    %1021 = vmatpush.msra.mxu0 0.0
    %1022 = vmatpush.msra.mxu0 0.0
    %1023 = vmatpush.msra.mxu0 %v867
    %1024 = vmatpush.msra.mxu0 %v866
    %1025 = vmatpush.msra.mxu0 %v865
    %1026 = vmatpush.msra.mxu0 %v864
    %1027 = vmatmul.f32.gmra.mxu0 %v994
    %v1028 = vpop.f32.mrf.mxu0
    %v1029 = vadd.f32 0.0, %v1028
    %1030 = vmatmul.f32.gmra.mxu0 %v997
    %v1031 = vpop.f32.mrf.mxu0
    %v1032 = vadd.f32 0.0, %v1031
    %1033 = vmatmul.f32.gmra.mxu0 %v1000
    %v1034 = vpop.f32.mrf.mxu0
    %v1035 = vadd.f32 0.0, %v1034
    %1036 = vmatmul.f32.gmra.mxu0 %v1003
    %v1037 = vpop.f32.mrf.mxu0
    %v1038 = vadd.f32 0.0, %v1037
    %1039 = vmatmul.f32.gmra.mxu0 %v1006
    %v1040 = vpop.f32.mrf.mxu0
    %v1041 = vadd.f32 0.0, %v1040
    %1042 = vmatmul.f32.gmra.mxu0 %v1009
    %v1043 = vpop.f32.mrf.mxu0
    %v1044 = vadd.f32 0.0, %v1043
    %1045 = vdwg.mxu0
    %1047 = vset.pattern.permute.xlu0 0
    %1048 = vperm.xlu0 %1047, %v942
    %v1049 = vpop.permute.xlu0 %1048
    %1052 = vset.pattern.permute.xlu0 0
    %1053 = vperm.xlu0 %1052, %v952
    %v1054 = vpop.permute.xlu0 %1053
    %1057 = vset.pattern.permute.xlu0 0
    %1058 = vperm.xlu0 %1057, %v962
    %v1059 = vpop.permute.xlu0 %1058
    %1062 = vset.pattern.permute.xlu0 0
    %1063 = vperm.xlu0 %1062, %v972
    %v1064 = vpop.permute.xlu0 %1063
    %1067 = vset.pattern.permute.xlu0 0
    %1068 = vperm.xlu0 %1067, %v982
    %v1069 = vpop.permute.xlu0 %1068
    %1072 = vset.pattern.permute.xlu0 0
    %1073 = vperm.xlu0 %1072, %v992
    %v1074 = vpop.permute.xlu0 %1073
    %v1076 = vmul.f32 %v1049, %v1029
    %v1077 = vmul.f32 %v1054, %v1032
    %v1078 = vmul.f32 %v1059, %v1035
    %v1079 = vmul.f32 %v1064, %v1038
    %v1080 = vmul.f32 %v1069, %v1041
    %v1081 = vmul.f32 %v1074, %v1044
    %1082 = vmatpush.msra.mxu0 0.0
    %1083 = vmatpush.msra.mxu0 0.0
    %1084 = vmatpush.msra.mxu0 0.0
    %1085 = vmatpush.msra.mxu0 0.0
    %1086 = vmatpush.msra.mxu0 0.0
    %1087 = vmatpush.msra.mxu0 0.0
    %1088 = vmatpush.msra.mxu0 0.0
    %1089 = vmatpush.msra.mxu0 0.0
    %1090 = vmatpush.msra.mxu0 0.0
    %1091 = vmatpush.msra.mxu0 0.0
    %1092 = vmatpush.msra.mxu0 %v1081
    %1093 = vmatpush.msra.mxu0 %v1080
    %1094 = vmatpush.msra.mxu0 %v1079
    %1095 = vmatpush.msra.mxu0 %v1078
    %1096 = vmatpush.msra.mxu0 %v1077
    %1097 = vmatpush.msra.mxu0 %v1076
    %1098 = vmatmul.f32.gmra.mxu0 %v875
    %v1099 = vpop.f32.mrf.mxu0
    %v1100 = vadd.f32 0.0, %v1099
    %1101 = vmatmul.f32.gmra.mxu0 %v878
    %v1102 = vpop.f32.mrf.mxu0
    %v1103 = vadd.f32 0.0, %v1102
    %1104 = vmatmul.f32.gmra.mxu0 %v881
    %v1105 = vpop.f32.mrf.mxu0
    %v1106 = vadd.f32 0.0, %v1105
    %1107 = vmatmul.f32.gmra.mxu0 %v884
    %v1108 = vpop.f32.mrf.mxu0
    %v1109 = vadd.f32 0.0, %v1108
    %1110 = vmatmul.f32.gmra.mxu0 %v887
    %v1111 = vpop.f32.mrf.mxu0
    %v1112 = vadd.f32 0.0, %v1111
    %1113 = vmatmul.f32.gmra.mxu0 %v890
    %v1114 = vpop.f32.mrf.mxu0
    %v1115 = vadd.f32 0.0, %v1114
    %1116 = vdwg.mxu0
    %v1117 = vmul.f32 %v1049, %v1100
    %v1118 = vmul.f32 %v1054, %v1103
    %v1119 = vmul.f32 %v1059, %v1106
    %v1120 = vmul.f32 %v1064, %v1109
    %v1121 = vmul.f32 %v1069, %v1112
    %v1122 = vmul.f32 %v1074, %v1115
    %v1124 = vperm.slane %v868, 0
    %v1126 = vadd.f32 %v1117, %v1124
    %v1127 = vadd.f32 %v1118, %v1124
    %v1128 = vadd.f32 %v1119, %v1124
    %v1129 = vadd.f32 %v1120, %v1124
    %v1130 = vadd.f32 %v1121, %v1124
    %v1131 = vadd.f32 %v1122, %v1124
    %v1132 = vmax.f32 %v1126, 0.0
    %v1133 = vmax.f32 %v1127, 0.0
    %v1134 = vmax.f32 %v1128, 0.0
    %v1135 = vmax.f32 %v1129, 0.0
    %v1136 = vmax.f32 %v1130, 0.0
    %v1137 = vmax.f32 %v1131, 0.0
    %v1138 = vmul.f32 %v1132, %v719
    %v1139 = vmul.f32 %v1133, %v720
    %v1140 = vmul.f32 %v1134, %v721
    %v1141 = vmul.f32 %v1135, %v722
    %v1142 = vmul.f32 %v1136, %v723
    %v1143 = vmul.f32 %v1137, %v724
    %v1145 = vsel %vm457, %v1138, 0
    %v1148 = vsel %vm457, %v1139, 0
    %v1151 = vsel %vm457, %v1140, 0
    %v1154 = vsel %vm457, %v1141, 0
    %v1157 = vsel %vm457, %v1142, 0
    %v1160 = vsel %vm457, %v1143, 0
    %1162 = vmatpush.msra.mxu0 0.0
    %1163 = vmatpush.msra.mxu0 0.0
    %1164 = vmatpush.msra.mxu0 0.0
    %1165 = vmatpush.msra.mxu0 0.0
    %1166 = vmatpush.msra.mxu0 0.0
    %1167 = vmatpush.msra.mxu0 0.0
    %1168 = vmatpush.msra.mxu0 0.0
    %1169 = vmatpush.msra.mxu0 0.0
    %1170 = vmatpush.msra.mxu0 0.0
    %1171 = vmatpush.msra.mxu0 0.0
    %1172 = vmatpush.msra.mxu0 0.0
    %1173 = vmatpush.msra.mxu0 0.0
    %1174 = vmatpush.msra.mxu0 %v872
    %1175 = vmatpush.msra.mxu0 %v871
    %1176 = vmatpush.msra.mxu0 %v870
    %1177 = vmatpush.msra.mxu0 %v869
    %1178 = vmatmul.f32.gmra.mxu0 %v1145
    %v1179 = vpop.f32.mrf.mxu0
    %v1180 = vadd.f32 0.0, %v1179
    %1181 = vmatmul.f32.gmra.mxu0 %v1148
    %v1182 = vpop.f32.mrf.mxu0
    %v1183 = vadd.f32 0.0, %v1182
    %1184 = vmatmul.f32.gmra.mxu0 %v1151
    %v1185 = vpop.f32.mrf.mxu0
    %v1186 = vadd.f32 0.0, %v1185
    %1187 = vmatmul.f32.gmra.mxu0 %v1154
    %v1188 = vpop.f32.mrf.mxu0
    %v1189 = vadd.f32 0.0, %v1188
    %1190 = vmatmul.f32.gmra.mxu0 %v1157
    %v1191 = vpop.f32.mrf.mxu0
    %v1192 = vadd.f32 0.0, %v1191
    %1193 = vmatmul.f32.gmra.mxu0 %v1160
    %v1194 = vpop.f32.mrf.mxu0
    %v1195 = vadd.f32 0.0, %v1194
    %1196 = vdwg.mxu0
    %v1197 = vmul.f32 %v942, %v1180
    %v1198 = vmul.f32 %v952, %v1183
    %v1199 = vmul.f32 %v962, %v1186
    %v1200 = vmul.f32 %v972, %v1189
    %v1201 = vmul.f32 %v982, %v1192
    %v1202 = vmul.f32 %v992, %v1195
    %1203 = vmatpush.msra.mxu0 0.0
    %1204 = vmatpush.msra.mxu0 0.0
    %1205 = vmatpush.msra.mxu0 0.0
    %1206 = vmatpush.msra.mxu0 0.0
    %1207 = vmatpush.msra.mxu0 0.0
    %1208 = vmatpush.msra.mxu0 0.0
    %1209 = vmatpush.msra.mxu0 0.0
    %1210 = vmatpush.msra.mxu0 0.0
    %1211 = vmatpush.msra.mxu0 0.0
    %1212 = vmatpush.msra.mxu0 0.0
    %1213 = vmatpush.msra.mxu0 %v1202
    %1214 = vmatpush.msra.mxu0 %v1201
    %1215 = vmatpush.msra.mxu0 %v1200
    %1216 = vmatpush.msra.mxu0 %v1199
    %1217 = vmatpush.msra.mxu0 %v1198
    %1218 = vmatpush.msra.mxu0 %v1197
    %1219 = vmatmul.f32.gmra.mxu0 %v875
    %v1220 = vpop.f32.mrf.mxu0
    %v1221 = vadd.f32 0.0, %v1220
    %1222 = vmatmul.f32.gmra.mxu0 %v878
    %v1223 = vpop.f32.mrf.mxu0
    %v1224 = vadd.f32 0.0, %v1223
    %1225 = vmatmul.f32.gmra.mxu0 %v881
    %v1226 = vpop.f32.mrf.mxu0
    %v1227 = vadd.f32 0.0, %v1226
    %1228 = vmatmul.f32.gmra.mxu0 %v884
    %v1229 = vpop.f32.mrf.mxu0
    %v1230 = vadd.f32 0.0, %v1229
    %1231 = vmatmul.f32.gmra.mxu0 %v887
    %v1232 = vpop.f32.mrf.mxu0
    %v1233 = vadd.f32 0.0, %v1232
    %1234 = vmatmul.f32.gmra.mxu0 %v890
    %v1235 = vpop.f32.mrf.mxu0
    %v1236 = vadd.f32 0.0, %v1235
    %1237 = vdwg.mxu0
    %v1238 = vmul.f32 %v942, %v1221
    %v1239 = vmul.f32 %v952, %v1224
    %v1240 = vmul.f32 %v962, %v1227
    %v1241 = vmul.f32 %v972, %v1230
    %v1242 = vmul.f32 %v982, %v1233
    %v1243 = vmul.f32 %v992, %v1236
    %v1245 = vperm.slane %v873, 0
    %v1247 = vadd.f32 %v1238, %v1245
    %v1248 = vadd.f32 %v1239, %v1245
    %v1249 = vadd.f32 %v1240, %v1245
    %v1250 = vadd.f32 %v1241, %v1245
    %v1251 = vadd.f32 %v1242, %v1245
    %v1252 = vadd.f32 %v1243, %v1245
    %v1253 = vtanh.pop %v1247
    %v1254 = vtanh.pop %v1248
    %v1255 = vtanh.pop %v1249
    %v1256 = vtanh.pop %v1250
    %v1257 = vtanh.pop %v1251
    %v1258 = vtanh.pop %v1252
    %v1259 = vmul.f32 %v1253, %v719
    %v1260 = vmul.f32 %v1254, %v720
    %v1261 = vmul.f32 %v1255, %v721
    %v1262 = vmul.f32 %v1256, %v722
    %v1263 = vmul.f32 %v1257, %v723
    %v1264 = vmul.f32 %v1258, %v724
    %v1265 = vadd.f32 %v1259, %v797
    %v1266 = vadd.f32 %v1260, %v798
    %v1267 = vadd.f32 %v1261, %v799
    %v1268 = vadd.f32 %v1262, %v800
    %v1269 = vadd.f32 %v1263, %v801
    %v1270 = vadd.f32 %v1264, %v802
    %1272 = vset.pattern.permute.xlu0 0
    %1273 = vperm.xlu0 %1272, %v1265
    %v1274 = vpop.permute.xlu0 %1273
    %1277 = vset.pattern.permute.xlu0 0
    %1278 = vperm.xlu0 %1277, %v1266
    %v1279 = vpop.permute.xlu0 %1278
    %1282 = vset.pattern.permute.xlu0 0
    %1283 = vperm.xlu0 %1282, %v1267
    %v1284 = vpop.permute.xlu0 %1283
    %1287 = vset.pattern.permute.xlu0 0
    %1288 = vperm.xlu0 %1287, %v1268
    %v1289 = vpop.permute.xlu0 %1288
    %1292 = vset.pattern.permute.xlu0 0
    %1293 = vperm.xlu0 %1292, %v1269
    %v1294 = vpop.permute.xlu0 %1293
    %1297 = vset.pattern.permute.xlu0 0
    %1298 = vperm.xlu0 %1297, %v1270
    %v1299 = vpop.permute.xlu0 %1298
    %v1301 = vmul.f32 %v1274, %v177
    %v1302 = vmul.f32 %v1279, %v178
    %v1303 = vmul.f32 %v1284, %v179
    %v1304 = vmul.f32 %v1289, %v180
    %v1305 = vmul.f32 %v1294, %v181
    %v1306 = vmul.f32 %v1299, %v182
    %1307 = vmatpush.msra.mxu0 0.0
    %1308 = vmatpush.msra.mxu0 0.0
    %1309 = vmatpush.msra.mxu0 0.0
    %1310 = vmatpush.msra.mxu0 0.0
    %1311 = vmatpush.msra.mxu0 0.0
    %1312 = vmatpush.msra.mxu0 0.0
    %1313 = vmatpush.msra.mxu0 0.0
    %1314 = vmatpush.msra.mxu0 0.0
    %1315 = vmatpush.msra.mxu0 0.0
    %1316 = vmatpush.msra.mxu0 0.0
    %1317 = vmatpush.msra.mxu0 %v1306
    %1318 = vmatpush.msra.mxu0 %v1305
    %1319 = vmatpush.msra.mxu0 %v1304
    %1320 = vmatpush.msra.mxu0 %v1303
    %1321 = vmatpush.msra.mxu0 %v1302
    %1322 = vmatpush.msra.mxu0 %v1301
    %1323 = vmatmul.f32.gmra.mxu0 %v616
    %v1324 = vpop.f32.mrf.mxu0
    %v1325 = vadd.f32 0.0, %v1324
    %1326 = vmatmul.f32.gmra.mxu0 %v616
    %v1327 = vpop.f32.mrf.mxu0
    %v1328 = vadd.f32 0.0, %v1327
    %1329 = vmatmul.f32.gmra.mxu0 %v616
    %v1330 = vpop.f32.mrf.mxu0
    %v1331 = vadd.f32 0.0, %v1330
    %1332 = vmatmul.f32.gmra.mxu0 %v616
    %v1333 = vpop.f32.mrf.mxu0
    %v1334 = vadd.f32 0.0, %v1333
    %1335 = vmatmul.f32.gmra.mxu0 %v616
    %v1336 = vpop.f32.mrf.mxu0
    %v1337 = vadd.f32 0.0, %v1336
    %1338 = vmatmul.f32.gmra.mxu0 %v616
    %v1339 = vpop.f32.mrf.mxu0
    %v1340 = vadd.f32 0.0, %v1339
    %1341 = vdwg.mxu0
    %vm1342 = vcmp.gt.f32.partialorder %v1325, %v1274
    %vm1343 = vcmp.gt.f32.partialorder %v1328, %v1279
    %vm1344 = vcmp.gt.f32.partialorder %v1331, %v1284
    %vm1345 = vcmp.gt.f32.partialorder %v1334, %v1289
    %vm1346 = vcmp.gt.f32.partialorder %v1337, %v1294
    %vm1347 = vcmp.gt.f32.partialorder %v1340, %v1299
    %v1348 = vsel %vm1342, 1.0, 0.0
    %v1349 = vsel %vm1343, 1.0, 0.0
    %v1350 = vsel %vm1344, 1.0, 0.0
    %v1351 = vsel %vm1345, 1.0, 0.0
    %v1352 = vsel %vm1346, 1.0, 0.0
    %v1353 = vsel %vm1347, 1.0, 0.0
    %v1354 = vmul.f32 %v149, %v1348
    %v1355 = vmul.f32 %v150, %v1349
    %v1356 = vmul.f32 %v151, %v1350
    %v1357 = vmul.f32 %v152, %v1351
    %v1358 = vmul.f32 %v153, %v1352
    %v1359 = vmul.f32 %v154, %v1353
    %vm1360 = vcmp.eq.f32.partialorder %v1325, %v1274
    %vm1361 = vcmp.eq.f32.partialorder %v1328, %v1279
    %vm1362 = vcmp.eq.f32.partialorder %v1331, %v1284
    %vm1363 = vcmp.eq.f32.partialorder %v1334, %v1289
    %vm1364 = vcmp.eq.f32.partialorder %v1337, %v1294
    %vm1365 = vcmp.eq.f32.partialorder %v1340, %v1299
    %v1366 = vsel %vm1360, 1.0, 0.0
    %v1367 = vsel %vm1361, 1.0, 0.0
    %v1368 = vsel %vm1362, 1.0, 0.0
    %v1369 = vsel %vm1363, 1.0, 0.0
    %v1370 = vsel %vm1364, 1.0, 0.0
    %v1371 = vsel %vm1365, 1.0, 0.0
    %v1372 = vmul.f32 %v155, %v1366
    %v1373 = vmul.f32 %v156, %v1367
    %v1374 = vmul.f32 %v157, %v1368
    %v1375 = vmul.f32 %v158, %v1369
    %v1376 = vmul.f32 %v159, %v1370
    %v1377 = vmul.f32 %v160, %v1371
    %v1378 = vadd.f32 %v1354, %v1372
    %v1379 = vadd.f32 %v1355, %v1373
    %v1380 = vadd.f32 %v1356, %v1374
    %v1381 = vadd.f32 %v1357, %v1375
    %v1382 = vadd.f32 %v1358, %v1376
    %v1383 = vadd.f32 %v1359, %v1377
    %v1384 = vsel %vm191, %v1378, 0.0
    %1385 = vadd.xlane.f32.xlu0 %v1384
    %v1386 = vpop.xlane.xlu0 %1385
    %v1387 = vsel %vm191, %v1379, 0.0
    %1388 = vadd.xlane.f32.xlu0 %v1387
    %v1389 = vpop.xlane.xlu0 %1388
    %v1390 = vsel %vm191, %v1380, 0.0
    %1391 = vadd.xlane.f32.xlu0 %v1390
    %v1392 = vpop.xlane.xlu0 %1391
    %v1393 = vsel %vm191, %v1381, 0.0
    %1394 = vadd.xlane.f32.xlu0 %v1393
    %v1395 = vpop.xlane.xlu0 %1394
    %v1396 = vsel %vm191, %v1382, 0.0
    %1397 = vadd.xlane.f32.xlu0 %v1396
    %v1398 = vpop.xlane.xlu0 %1397
    %v1399 = vsel %vm191, %v1383, 0.0
    %1400 = vadd.xlane.f32.xlu0 %v1399
    %v1401 = vpop.xlane.xlu0 %1400
    %vm1402 = vcmp.lt.f32.partialorder %v1386, 3.0
    %vm1403 = vcmp.lt.f32.partialorder %v1389, 3.0
    %vm1404 = vcmp.lt.f32.partialorder %v1392, 3.0
    %vm1405 = vcmp.lt.f32.partialorder %v1395, 3.0
    %vm1406 = vcmp.lt.f32.partialorder %v1398, 3.0
    %vm1407 = vcmp.lt.f32.partialorder %v1401, 3.0
    %v1408 = vsel %vm1402, 1.0, 0.0
    %v1409 = vsel %vm1403, 1.0, 0.0
    %v1410 = vsel %vm1404, 1.0, 0.0
    %v1411 = vsel %vm1405, 1.0, 0.0
    %v1412 = vsel %vm1406, 1.0, 0.0
    %v1413 = vsel %vm1407, 1.0, 0.0
    %1415 = vset.pattern.permute.xlu0 0
    %1416 = vperm.xlu0 %1415, %v1253
    %v1417 = vpop.permute.xlu0 %1416
    %1420 = vset.pattern.permute.xlu0 0
    %1421 = vperm.xlu0 %1420, %v1254
    %v1422 = vpop.permute.xlu0 %1421
    %1425 = vset.pattern.permute.xlu0 0
    %1426 = vperm.xlu0 %1425, %v1255
    %v1427 = vpop.permute.xlu0 %1426
    %1430 = vset.pattern.permute.xlu0 0
    %1431 = vperm.xlu0 %1430, %v1256
    %v1432 = vpop.permute.xlu0 %1431
    %1435 = vset.pattern.permute.xlu0 0
    %1436 = vperm.xlu0 %1435, %v1257
    %v1437 = vpop.permute.xlu0 %1436
    %1440 = vset.pattern.permute.xlu0 0
    %1441 = vperm.xlu0 %1440, %v1258
    %v1442 = vpop.permute.xlu0 %1441
    %v1444 = vmul.f32 %v1132, %v1417
    %v1445 = vmul.f32 %v1133, %v1422
    %v1446 = vmul.f32 %v1134, %v1427
    %v1447 = vmul.f32 %v1135, %v1432
    %v1448 = vmul.f32 %v1136, %v1437
    %v1449 = vmul.f32 %v1137, %v1442
    %v1450 = vmul.f32 %v1444, %v1408
    %v1451 = vmul.f32 %v1445, %v1409
    %v1452 = vmul.f32 %v1446, %v1410
    %v1453 = vmul.f32 %v1447, %v1411
    %v1454 = vmul.f32 %v1448, %v1412
    %v1455 = vmul.f32 %v1449, %v1413
    %1456 = vmatpush.msra.mxu0 0.0
    %1457 = vmatpush.msra.mxu0 0.0
    %1458 = vmatpush.msra.mxu0 0.0
    %1459 = vmatpush.msra.mxu0 0.0
    %1460 = vmatpush.msra.mxu0 0.0
    %1461 = vmatpush.msra.mxu0 0.0
    %1462 = vmatpush.msra.mxu0 0.0
    %1463 = vmatpush.msra.mxu0 0.0
    %1464 = vmatpush.msra.mxu0 0.0
    %1465 = vmatpush.msra.mxu0 0.0
    %1466 = vmatpush.msra.mxu0 %v1455
    %1467 = vmatpush.msra.mxu0 %v1454
    %1468 = vmatpush.msra.mxu0 %v1453
    %1469 = vmatpush.msra.mxu0 %v1452
    %1470 = vmatpush.msra.mxu0 %v1451
    %1471 = vmatpush.msra.mxu0 %v1450
    %1472 = vmatmul.f32.gmra.mxu0 %v768
    %v1473 = vpop.f32.mrf.mxu0
    %v1474 = vadd.f32 0.0, %v1473
    %1475 = vdwg.mxu0
    %v1476 = vmul.f32 %v1474, 0.33333334
    %v1477 = vsub.f32 %v1408, 1.0
    %v1478 = vsub.f32 %v1409, 1.0
    %v1479 = vsub.f32 %v1410, 1.0
    %v1480 = vsub.f32 %v1411, 1.0
    %v1481 = vsub.f32 %v1412, 1.0
    %v1482 = vsub.f32 %v1413, 1.0
    %v1483 = vmul.f32 %v1477, 1e+09
    %v1484 = vmul.f32 %v1478, 1e+09
    %v1485 = vmul.f32 %v1479, 1e+09
    %v1486 = vmul.f32 %v1480, 1e+09
    %v1487 = vmul.f32 %v1481, 1e+09
    %v1488 = vmul.f32 %v1482, 1e+09
    %v1489 = vadd.f32 %v1450, %v1483
    %v1490 = vadd.f32 %v1451, %v1484
    %v1491 = vadd.f32 %v1452, %v1485
    %v1492 = vadd.f32 %v1453, %v1486
    %v1493 = vadd.f32 %v1454, %v1487
    %v1494 = vadd.f32 %v1455, %v1488
    %v1495 = vsel %vm457, %v1489, -inf
    %v1496 = vsel %vm810, %v1490, -inf
    %v1497 = vmax.f32 %v1495, %v1496
    %v1498 = vrot.slane %v1497, 4
    %v1499 = vmax.f32 %v1497, %v1498
    %v1500 = vrot.slane %v1499, 2
    %v1501 = vmax.f32 %v1499, %v1500
    %v1502 = vrot.slane %v1501, 1
    %v1503 = vmax.f32 %v1501, %v1502
    %v1504 = vsel %vm819, %v1490, -inf
    %v1505 = vsel %vm457, %v1491, -inf
    %v1506 = vmax.f32 %v1504, %v1505
    %v1507 = vrot.slane %v1506, 4
    %v1508 = vmax.f32 %v1506, %v1507
    %v1509 = vrot.slane %v1508, 2
    %v1510 = vmax.f32 %v1508, %v1509
    %v1511 = vrot.slane %v1510, 1
    %v1512 = vmax.f32 %v1510, %v1511
    %v1513 = vsel %vm457, %v1492, -inf
    %v1514 = vsel %vm810, %v1493, -inf
    %v1515 = vmax.f32 %v1513, %v1514
    %v1516 = vrot.slane %v1515, 4
    %v1517 = vmax.f32 %v1515, %v1516
    %v1518 = vrot.slane %v1517, 2
    %v1519 = vmax.f32 %v1517, %v1518
    %v1520 = vrot.slane %v1519, 1
    %v1521 = vmax.f32 %v1519, %v1520
    %v1522 = vsel %vm819, %v1493, -inf
    %v1523 = vsel %vm457, %v1494, -inf
    %v1524 = vmax.f32 %v1522, %v1523
    %v1525 = vrot.slane %v1524, 4
    %v1526 = vmax.f32 %v1524, %v1525
    %v1527 = vrot.slane %v1526, 2
    %v1528 = vmax.f32 %v1526, %v1527
    %v1529 = vrot.slane %v1528, 1
    %v1530 = vmax.f32 %v1528, %v1529
    %v1531 = vsel %vm847, %v1503, %v1512
    %v1532 = vsel %vm849, %v1531, %v1521
    %v1533 = vsel %vm851, %v1532, %v1530
    %1535 = vrot.lane.b32.xlu0 %v1476, 32
    %v1536 = vpop.permute.xlu0 %1535
    %v1538 = vsel %vm457, %v1533, %v1536
    %v1539 = vmul.f32 %v858, %v1408
    %v1540 = vmul.f32 %v859, %v1409
    %v1541 = vmul.f32 %v860, %v1410
    %v1542 = vmul.f32 %v861, %v1411
    %v1543 = vmul.f32 %v862, %v1412
    %v1544 = vmul.f32 %v863, %v1413
    %v1545 = vld [vmem:[%s27] sm:$0xff]
    %v1546 = vld [vmem:[%s27 + $0x8] sm:$0xff]
    %v1547 = vld [vmem:[%s27 + $0x10] sm:$0xff]
    %v1548 = vld [vmem:[%s27 + $0x18] sm:$0xff]
    %v1549 = vld [vmem:[%s29] sm:$0x1]
    %v1550 = vld [vmem:[%s31] sm:$0xff]
    %v1551 = vld [vmem:[%s31 + $0x8] sm:$0xff]
    %v1552 = vld [vmem:[%s31 + $0x10] sm:$0xff]
    %v1553 = vld [vmem:[%s31 + $0x18] sm:$0xff]
    %v1554 = vld [vmem:[#allocation4] sm:$0x1]
    %v1556 = vsel %vm191, %v1539, 0
    %v1559 = vsel %vm191, %v1540, 0
    %v1562 = vsel %vm191, %v1541, 0
    %v1565 = vsel %vm191, %v1542, 0
    %v1568 = vsel %vm191, %v1543, 0
    %v1571 = vsel %vm191, %v1544, 0
    %1573 = vmatpush.msra.mxu0 0.0
    %1574 = vmatpush.msra.mxu0 0.0
    %1575 = vmatpush.msra.mxu0 0.0
    %1576 = vmatpush.msra.mxu0 0.0
    %1577 = vmatpush.msra.mxu0 0.0
    %1578 = vmatpush.msra.mxu0 0.0
    %1579 = vmatpush.msra.mxu0 0.0
    %1580 = vmatpush.msra.mxu0 0.0
    %1581 = vmatpush.msra.mxu0 0.0
    %1582 = vmatpush.msra.mxu0 0.0
    %1583 = vmatpush.msra.mxu0 %v1413
    %1584 = vmatpush.msra.mxu0 %v1412
    %1585 = vmatpush.msra.mxu0 %v1411
    %1586 = vmatpush.msra.mxu0 %v1410
    %1587 = vmatpush.msra.mxu0 %v1409
    %1588 = vmatpush.msra.mxu0 %v1408
    %1589 = vmatmul.f32.gmra.mxu0 %v1556
    %v1590 = vpop.f32.mrf.mxu0
    %v1591 = vadd.f32 0.0, %v1590
    %1592 = vmatmul.f32.gmra.mxu0 %v1559
    %v1593 = vpop.f32.mrf.mxu0
    %v1594 = vadd.f32 0.0, %v1593
    %1595 = vmatmul.f32.gmra.mxu0 %v1562
    %v1596 = vpop.f32.mrf.mxu0
    %v1597 = vadd.f32 0.0, %v1596
    %1598 = vmatmul.f32.gmra.mxu0 %v1565
    %v1599 = vpop.f32.mrf.mxu0
    %v1600 = vadd.f32 0.0, %v1599
    %1601 = vmatmul.f32.gmra.mxu0 %v1568
    %v1602 = vpop.f32.mrf.mxu0
    %v1603 = vadd.f32 0.0, %v1602
    %1604 = vmatmul.f32.gmra.mxu0 %v1571
    %v1605 = vpop.f32.mrf.mxu0
    %v1606 = vadd.f32 0.0, %v1605
    %1607 = vdwg.mxu0
    %v1608 = vmax.f32 %v1591, 1.0
    %v1609 = vmax.f32 %v1594, 1.0
    %v1610 = vmax.f32 %v1597, 1.0
    %v1611 = vmax.f32 %v1600, 1.0
    %v1612 = vmax.f32 %v1603, 1.0
    %v1613 = vmax.f32 %v1606, 1.0
    %v1614 = vrsqrt.pop %v1608
    %v1615 = vmul.f32 %v1614, %v1608
    %v1616 = vmul.f32 %v1615, %v1614
    %v1617 = vmul.f32 0.5, %v1616
    %v1618 = vsub.f32 1.5, %v1617
    %v1619 = vmul.f32 %v1614, %v1618
    %vm1620 = vweird.f32 %v1608
    %vm1621 = vweird.f32 %v1614
    %vm1622 = vmor %vm1620, %vm1621
    %v1623 = vsel %vm1622, %v1614, %v1619
    %v1624 = vrsqrt.pop %v1609
    %v1625 = vmul.f32 %v1624, %v1609
    %v1626 = vmul.f32 %v1625, %v1624
    %v1627 = vmul.f32 0.5, %v1626
    %v1628 = vsub.f32 1.5, %v1627
    %v1629 = vmul.f32 %v1624, %v1628
    %vm1630 = vweird.f32 %v1609
    %vm1631 = vweird.f32 %v1624
    %vm1632 = vmor %vm1630, %vm1631
    %v1633 = vsel %vm1632, %v1624, %v1629
    %v1634 = vrsqrt.pop %v1610
    %v1635 = vmul.f32 %v1634, %v1610
    %v1636 = vmul.f32 %v1635, %v1634
    %v1637 = vmul.f32 0.5, %v1636
    %v1638 = vsub.f32 1.5, %v1637
    %v1639 = vmul.f32 %v1634, %v1638
    %vm1640 = vweird.f32 %v1610
    %vm1641 = vweird.f32 %v1634
    %vm1642 = vmor %vm1640, %vm1641
    %v1643 = vsel %vm1642, %v1634, %v1639
    %v1644 = vrsqrt.pop %v1611
    %v1645 = vmul.f32 %v1644, %v1611
    %v1646 = vmul.f32 %v1645, %v1644
    %v1647 = vmul.f32 0.5, %v1646
    %v1648 = vsub.f32 1.5, %v1647
    %v1649 = vmul.f32 %v1644, %v1648
    %vm1650 = vweird.f32 %v1611
    %vm1651 = vweird.f32 %v1644
    %vm1652 = vmor %vm1650, %vm1651
    %v1653 = vsel %vm1652, %v1644, %v1649
    %v1654 = vrsqrt.pop %v1612
    %v1655 = vmul.f32 %v1654, %v1612
    %v1656 = vmul.f32 %v1655, %v1654
    %v1657 = vmul.f32 0.5, %v1656
    %v1658 = vsub.f32 1.5, %v1657
    %v1659 = vmul.f32 %v1654, %v1658
    %vm1660 = vweird.f32 %v1612
    %vm1661 = vweird.f32 %v1654
    %vm1662 = vmor %vm1660, %vm1661
    %v1663 = vsel %vm1662, %v1654, %v1659
    %v1664 = vrsqrt.pop %v1613
    %v1665 = vmul.f32 %v1664, %v1613
    %v1666 = vmul.f32 %v1665, %v1664
    %v1667 = vmul.f32 0.5, %v1666
    %v1668 = vsub.f32 1.5, %v1667
    %v1669 = vmul.f32 %v1664, %v1668
    %vm1670 = vweird.f32 %v1613
    %vm1671 = vweird.f32 %v1664
    %vm1672 = vmor %vm1670, %vm1671
    %v1673 = vsel %vm1672, %v1664, %v1669
    %v1675 = vsel %vm457, %v1450, 0
    %v1678 = vsel %vm457, %v1451, 0
    %v1681 = vsel %vm457, %v1452, 0
    %v1684 = vsel %vm457, %v1453, 0
    %v1687 = vsel %vm457, %v1454, 0
    %v1690 = vsel %vm457, %v1455, 0
    %1692 = vmatpush.msra.mxu0 0.0
    %1693 = vmatpush.msra.mxu0 0.0
    %1694 = vmatpush.msra.mxu0 0.0
    %1695 = vmatpush.msra.mxu0 0.0
    %1696 = vmatpush.msra.mxu0 0.0
    %1697 = vmatpush.msra.mxu0 0.0
    %1698 = vmatpush.msra.mxu0 0.0
    %1699 = vmatpush.msra.mxu0 0.0
    %1700 = vmatpush.msra.mxu0 0.0
    %1701 = vmatpush.msra.mxu0 0.0
    %1702 = vmatpush.msra.mxu0 0.0
    %1703 = vmatpush.msra.mxu0 0.0
    %1704 = vmatpush.msra.mxu0 %v1548
    %1705 = vmatpush.msra.mxu0 %v1547
    %1706 = vmatpush.msra.mxu0 %v1546
    %1707 = vmatpush.msra.mxu0 %v1545
    %1708 = vmatmul.f32.gmra.mxu0 %v1675
    %v1709 = vpop.f32.mrf.mxu0
    %v1710 = vadd.f32 0.0, %v1709
    %1711 = vmatmul.f32.gmra.mxu0 %v1678
    %v1712 = vpop.f32.mrf.mxu0
    %v1713 = vadd.f32 0.0, %v1712
    %1714 = vmatmul.f32.gmra.mxu0 %v1681
    %v1715 = vpop.f32.mrf.mxu0
    %v1716 = vadd.f32 0.0, %v1715
    %1717 = vmatmul.f32.gmra.mxu0 %v1684
    %v1718 = vpop.f32.mrf.mxu0
    %v1719 = vadd.f32 0.0, %v1718
    %1720 = vmatmul.f32.gmra.mxu0 %v1687
    %v1721 = vpop.f32.mrf.mxu0
    %v1722 = vadd.f32 0.0, %v1721
    %1723 = vmatmul.f32.gmra.mxu0 %v1690
    %v1724 = vpop.f32.mrf.mxu0
    %v1725 = vadd.f32 0.0, %v1724
    %1726 = vdwg.mxu0
    %1728 = vset.pattern.permute.xlu0 0
    %1729 = vperm.xlu0 %1728, %v1623
    %v1730 = vpop.permute.xlu0 %1729
    %1733 = vset.pattern.permute.xlu0 0
    %1734 = vperm.xlu0 %1733, %v1633
    %v1735 = vpop.permute.xlu0 %1734
    %1738 = vset.pattern.permute.xlu0 0
    %1739 = vperm.xlu0 %1738, %v1643
    %v1740 = vpop.permute.xlu0 %1739
    %1743 = vset.pattern.permute.xlu0 0
    %1744 = vperm.xlu0 %1743, %v1653
    %v1745 = vpop.permute.xlu0 %1744
    %1748 = vset.pattern.permute.xlu0 0
    %1749 = vperm.xlu0 %1748, %v1663
    %v1750 = vpop.permute.xlu0 %1749
    %1753 = vset.pattern.permute.xlu0 0
    %1754 = vperm.xlu0 %1753, %v1673
    %v1755 = vpop.permute.xlu0 %1754
    %v1757 = vmul.f32 %v1730, %v1710
    %v1758 = vmul.f32 %v1735, %v1713
    %v1759 = vmul.f32 %v1740, %v1716
    %v1760 = vmul.f32 %v1745, %v1719
    %v1761 = vmul.f32 %v1750, %v1722
    %v1762 = vmul.f32 %v1755, %v1725
    %1763 = vmatpush.msra.mxu0 0.0
    %1764 = vmatpush.msra.mxu0 0.0
    %1765 = vmatpush.msra.mxu0 0.0
    %1766 = vmatpush.msra.mxu0 0.0
    %1767 = vmatpush.msra.mxu0 0.0
    %1768 = vmatpush.msra.mxu0 0.0
    %1769 = vmatpush.msra.mxu0 0.0
    %1770 = vmatpush.msra.mxu0 0.0
    %1771 = vmatpush.msra.mxu0 0.0
    %1772 = vmatpush.msra.mxu0 0.0
    %1773 = vmatpush.msra.mxu0 %v1762
    %1774 = vmatpush.msra.mxu0 %v1761
    %1775 = vmatpush.msra.mxu0 %v1760
    %1776 = vmatpush.msra.mxu0 %v1759
    %1777 = vmatpush.msra.mxu0 %v1758
    %1778 = vmatpush.msra.mxu0 %v1757
    %1779 = vmatmul.f32.gmra.mxu0 %v1556
    %v1780 = vpop.f32.mrf.mxu0
    %v1781 = vadd.f32 0.0, %v1780
    %1782 = vmatmul.f32.gmra.mxu0 %v1559
    %v1783 = vpop.f32.mrf.mxu0
    %v1784 = vadd.f32 0.0, %v1783
    %1785 = vmatmul.f32.gmra.mxu0 %v1562
    %v1786 = vpop.f32.mrf.mxu0
    %v1787 = vadd.f32 0.0, %v1786
    %1788 = vmatmul.f32.gmra.mxu0 %v1565
    %v1789 = vpop.f32.mrf.mxu0
    %v1790 = vadd.f32 0.0, %v1789
    %1791 = vmatmul.f32.gmra.mxu0 %v1568
    %v1792 = vpop.f32.mrf.mxu0
    %v1793 = vadd.f32 0.0, %v1792
    %1794 = vmatmul.f32.gmra.mxu0 %v1571
    %v1795 = vpop.f32.mrf.mxu0
    %v1796 = vadd.f32 0.0, %v1795
    %1797 = vdwg.mxu0
    %v1798 = vmul.f32 %v1730, %v1781
    %v1799 = vmul.f32 %v1735, %v1784
    %v1800 = vmul.f32 %v1740, %v1787
    %v1801 = vmul.f32 %v1745, %v1790
    %v1802 = vmul.f32 %v1750, %v1793
    %v1803 = vmul.f32 %v1755, %v1796
    %v1805 = vperm.slane %v1549, 0
    %v1807 = vadd.f32 %v1798, %v1805
    %v1808 = vadd.f32 %v1799, %v1805
    %v1809 = vadd.f32 %v1800, %v1805
    %v1810 = vadd.f32 %v1801, %v1805
    %v1811 = vadd.f32 %v1802, %v1805
    %v1812 = vadd.f32 %v1803, %v1805
    %v1813 = vmax.f32 %v1807, 0.0
    %v1814 = vmax.f32 %v1808, 0.0
    %v1815 = vmax.f32 %v1809, 0.0
    %v1816 = vmax.f32 %v1810, 0.0
    %v1817 = vmax.f32 %v1811, 0.0
    %v1818 = vmax.f32 %v1812, 0.0
    %v1819 = vmul.f32 %v1813, %v1408
    %v1820 = vmul.f32 %v1814, %v1409
    %v1821 = vmul.f32 %v1815, %v1410
    %v1822 = vmul.f32 %v1816, %v1411
    %v1823 = vmul.f32 %v1817, %v1412
    %v1824 = vmul.f32 %v1818, %v1413
    %v1826 = vsel %vm457, %v1819, 0
    %v1829 = vsel %vm457, %v1820, 0
    %v1832 = vsel %vm457, %v1821, 0
    %v1835 = vsel %vm457, %v1822, 0
    %v1838 = vsel %vm457, %v1823, 0
    %v1841 = vsel %vm457, %v1824, 0
    %1843 = vmatpush.msra.mxu0 0.0
    %1844 = vmatpush.msra.mxu0 0.0
    %1845 = vmatpush.msra.mxu0 0.0
    %1846 = vmatpush.msra.mxu0 0.0
    %1847 = vmatpush.msra.mxu0 0.0
    %1848 = vmatpush.msra.mxu0 0.0
    %1849 = vmatpush.msra.mxu0 0.0
    %1850 = vmatpush.msra.mxu0 0.0
    %1851 = vmatpush.msra.mxu0 0.0
    %1852 = vmatpush.msra.mxu0 0.0
    %1853 = vmatpush.msra.mxu0 0.0
    %1854 = vmatpush.msra.mxu0 0.0
    %1855 = vmatpush.msra.mxu0 %v1553
    %1856 = vmatpush.msra.mxu0 %v1552
    %1857 = vmatpush.msra.mxu0 %v1551
    %1858 = vmatpush.msra.mxu0 %v1550
    %1859 = vmatmul.f32.gmra.mxu0 %v1826
    %v1860 = vpop.f32.mrf.mxu0
    %v1861 = vadd.f32 0.0, %v1860
    %1862 = vmatmul.f32.gmra.mxu0 %v1829
    %v1863 = vpop.f32.mrf.mxu0
    %v1864 = vadd.f32 0.0, %v1863
    %1865 = vmatmul.f32.gmra.mxu0 %v1832
    %v1866 = vpop.f32.mrf.mxu0
    %v1867 = vadd.f32 0.0, %v1866
    %1868 = vmatmul.f32.gmra.mxu0 %v1835
    %v1869 = vpop.f32.mrf.mxu0
    %v1870 = vadd.f32 0.0, %v1869
    %1871 = vmatmul.f32.gmra.mxu0 %v1838
    %v1872 = vpop.f32.mrf.mxu0
    %v1873 = vadd.f32 0.0, %v1872
    %1874 = vmatmul.f32.gmra.mxu0 %v1841
    %v1875 = vpop.f32.mrf.mxu0
    %v1876 = vadd.f32 0.0, %v1875
    %1877 = vdwg.mxu0
    %v1878 = vmul.f32 %v1623, %v1861
    %v1879 = vmul.f32 %v1633, %v1864
    %v1880 = vmul.f32 %v1643, %v1867
    %v1881 = vmul.f32 %v1653, %v1870
    %v1882 = vmul.f32 %v1663, %v1873
    %v1883 = vmul.f32 %v1673, %v1876
    %1884 = vmatpush.msra.mxu0 0.0
    %1885 = vmatpush.msra.mxu0 0.0
    %1886 = vmatpush.msra.mxu0 0.0
    %1887 = vmatpush.msra.mxu0 0.0
    %1888 = vmatpush.msra.mxu0 0.0
    %1889 = vmatpush.msra.mxu0 0.0
    %1890 = vmatpush.msra.mxu0 0.0
    %1891 = vmatpush.msra.mxu0 0.0
    %1892 = vmatpush.msra.mxu0 0.0
    %1893 = vmatpush.msra.mxu0 0.0
    %1894 = vmatpush.msra.mxu0 %v1883
    %1895 = vmatpush.msra.mxu0 %v1882
    %1896 = vmatpush.msra.mxu0 %v1881
    %1897 = vmatpush.msra.mxu0 %v1880
    %1898 = vmatpush.msra.mxu0 %v1879
    %1899 = vmatpush.msra.mxu0 %v1878
    %1900 = vmatmul.f32.gmra.mxu0 %v1556
    %v1901 = vpop.f32.mrf.mxu0
    %v1902 = vadd.f32 0.0, %v1901
    %1903 = vmatmul.f32.gmra.mxu0 %v1559
    %v1904 = vpop.f32.mrf.mxu0
    %v1905 = vadd.f32 0.0, %v1904
    %1906 = vmatmul.f32.gmra.mxu0 %v1562
    %v1907 = vpop.f32.mrf.mxu0
    %v1908 = vadd.f32 0.0, %v1907
    %1909 = vmatmul.f32.gmra.mxu0 %v1565
    %v1910 = vpop.f32.mrf.mxu0
    %v1911 = vadd.f32 0.0, %v1910
    %1912 = vmatmul.f32.gmra.mxu0 %v1568
    %v1913 = vpop.f32.mrf.mxu0
    %v1914 = vadd.f32 0.0, %v1913
    %1915 = vmatmul.f32.gmra.mxu0 %v1571
    %v1916 = vpop.f32.mrf.mxu0
    %v1917 = vadd.f32 0.0, %v1916
    %1918 = vdwg.mxu0
    %v1919 = vmul.f32 %v1623, %v1902
    %v1920 = vmul.f32 %v1633, %v1905
    %v1921 = vmul.f32 %v1643, %v1908
    %v1922 = vmul.f32 %v1653, %v1911
    %v1923 = vmul.f32 %v1663, %v1914
    %v1924 = vmul.f32 %v1673, %v1917
    %v1926 = vperm.slane %v1554, 0
    %v1928 = vadd.f32 %v1919, %v1926
    %v1929 = vadd.f32 %v1920, %v1926
    %v1930 = vadd.f32 %v1921, %v1926
    %v1931 = vadd.f32 %v1922, %v1926
    %v1932 = vadd.f32 %v1923, %v1926
    %v1933 = vadd.f32 %v1924, %v1926
    %v1934 = vtanh.pop %v1928
    %v1935 = vtanh.pop %v1929
    %v1936 = vtanh.pop %v1930
    %v1937 = vtanh.pop %v1931
    %v1938 = vtanh.pop %v1932
    %v1939 = vtanh.pop %v1933
    %v1940 = vmul.f32 %v1934, %v1408
    %v1941 = vmul.f32 %v1935, %v1409
    %v1942 = vmul.f32 %v1936, %v1410
    %v1943 = vmul.f32 %v1937, %v1411
    %v1944 = vmul.f32 %v1938, %v1412
    %v1945 = vmul.f32 %v1939, %v1413
    %v1946 = vadd.f32 %v1940, %v1483
    %v1947 = vadd.f32 %v1941, %v1484
    %v1948 = vadd.f32 %v1942, %v1485
    %v1949 = vadd.f32 %v1943, %v1486
    %v1950 = vadd.f32 %v1944, %v1487
    %v1951 = vadd.f32 %v1945, %v1488
    %1953 = vset.pattern.permute.xlu0 0
    %1954 = vperm.xlu0 %1953, %v1946
    %v1955 = vpop.permute.xlu0 %1954
    %1958 = vset.pattern.permute.xlu0 0
    %1959 = vperm.xlu0 %1958, %v1947
    %v1960 = vpop.permute.xlu0 %1959
    %1963 = vset.pattern.permute.xlu0 0
    %1964 = vperm.xlu0 %1963, %v1948
    %v1965 = vpop.permute.xlu0 %1964
    %1968 = vset.pattern.permute.xlu0 0
    %1969 = vperm.xlu0 %1968, %v1949
    %v1970 = vpop.permute.xlu0 %1969
    %1973 = vset.pattern.permute.xlu0 0
    %1974 = vperm.xlu0 %1973, %v1950
    %v1975 = vpop.permute.xlu0 %1974
    %1978 = vset.pattern.permute.xlu0 0
    %1979 = vperm.xlu0 %1978, %v1951
    %v1980 = vpop.permute.xlu0 %1979
    %v1982 = vmul.f32 %v1955, %v177
    %v1983 = vmul.f32 %v1960, %v178
    %v1984 = vmul.f32 %v1965, %v179
    %v1985 = vmul.f32 %v1970, %v180
    %v1986 = vmul.f32 %v1975, %v181
    %v1987 = vmul.f32 %v1980, %v182
    %1988 = vmatpush.msra.mxu0 0.0
    %1989 = vmatpush.msra.mxu0 0.0
    %1990 = vmatpush.msra.mxu0 0.0
    %1991 = vmatpush.msra.mxu0 0.0
    %1992 = vmatpush.msra.mxu0 0.0
    %1993 = vmatpush.msra.mxu0 0.0
    %1994 = vmatpush.msra.mxu0 0.0
    %1995 = vmatpush.msra.mxu0 0.0
    %1996 = vmatpush.msra.mxu0 0.0
    %1997 = vmatpush.msra.mxu0 0.0
    %1998 = vmatpush.msra.mxu0 %v1987
    %1999 = vmatpush.msra.mxu0 %v1986
    %2000 = vmatpush.msra.mxu0 %v1985
    %2001 = vmatpush.msra.mxu0 %v1984
    %2002 = vmatpush.msra.mxu0 %v1983
    %2003 = vmatpush.msra.mxu0 %v1982
    %2004 = vmatmul.f32.gmra.mxu0 %v616
    %v2005 = vpop.f32.mrf.mxu0
    %v2006 = vadd.f32 0.0, %v2005
    %2007 = vmatmul.f32.gmra.mxu0 %v616
    %v2008 = vpop.f32.mrf.mxu0
    %v2009 = vadd.f32 0.0, %v2008
    %2010 = vmatmul.f32.gmra.mxu0 %v616
    %v2011 = vpop.f32.mrf.mxu0
    %v2012 = vadd.f32 0.0, %v2011
    %2013 = vmatmul.f32.gmra.mxu0 %v616
    %v2014 = vpop.f32.mrf.mxu0
    %v2015 = vadd.f32 0.0, %v2014
    %2016 = vmatmul.f32.gmra.mxu0 %v616
    %v2017 = vpop.f32.mrf.mxu0
    %v2018 = vadd.f32 0.0, %v2017
    %2019 = vmatmul.f32.gmra.mxu0 %v616
    %v2020 = vpop.f32.mrf.mxu0
    %v2021 = vadd.f32 0.0, %v2020
    %2022 = vdwg.mxu0
    %vm2023 = vcmp.gt.f32.partialorder %v2006, %v1955
    %vm2024 = vcmp.gt.f32.partialorder %v2009, %v1960
    %vm2025 = vcmp.gt.f32.partialorder %v2012, %v1965
    %vm2026 = vcmp.gt.f32.partialorder %v2015, %v1970
    %vm2027 = vcmp.gt.f32.partialorder %v2018, %v1975
    %vm2028 = vcmp.gt.f32.partialorder %v2021, %v1980
    %v2029 = vsel %vm2023, 1.0, 0.0
    %v2030 = vsel %vm2024, 1.0, 0.0
    %v2031 = vsel %vm2025, 1.0, 0.0
    %v2032 = vsel %vm2026, 1.0, 0.0
    %v2033 = vsel %vm2027, 1.0, 0.0
    %v2034 = vsel %vm2028, 1.0, 0.0
    %v2035 = vmul.f32 %v149, %v2029
    %v2036 = vmul.f32 %v150, %v2030
    %v2037 = vmul.f32 %v151, %v2031
    %v2038 = vmul.f32 %v152, %v2032
    %v2039 = vmul.f32 %v153, %v2033
    %v2040 = vmul.f32 %v154, %v2034
    %vm2041 = vcmp.eq.f32.partialorder %v2006, %v1955
    %vm2042 = vcmp.eq.f32.partialorder %v2009, %v1960
    %vm2043 = vcmp.eq.f32.partialorder %v2012, %v1965
    %vm2044 = vcmp.eq.f32.partialorder %v2015, %v1970
    %vm2045 = vcmp.eq.f32.partialorder %v2018, %v1975
    %vm2046 = vcmp.eq.f32.partialorder %v2021, %v1980
    %v2047 = vsel %vm2041, 1.0, 0.0
    %v2048 = vsel %vm2042, 1.0, 0.0
    %v2049 = vsel %vm2043, 1.0, 0.0
    %v2050 = vsel %vm2044, 1.0, 0.0
    %v2051 = vsel %vm2045, 1.0, 0.0
    %v2052 = vsel %vm2046, 1.0, 0.0
    %v2053 = vmul.f32 %v155, %v2047
    %v2054 = vmul.f32 %v156, %v2048
    %v2055 = vmul.f32 %v157, %v2049
    %v2056 = vmul.f32 %v158, %v2050
    %v2057 = vmul.f32 %v159, %v2051
    %v2058 = vmul.f32 %v160, %v2052
    %v2059 = vadd.f32 %v2035, %v2053
    %v2060 = vadd.f32 %v2036, %v2054
    %v2061 = vadd.f32 %v2037, %v2055
    %v2062 = vadd.f32 %v2038, %v2056
    %v2063 = vadd.f32 %v2039, %v2057
    %v2064 = vadd.f32 %v2040, %v2058
    %v2065 = vsel %vm191, %v2059, 0.0
    %2066 = vadd.xlane.f32.xlu0 %v2065
    %v2067 = vpop.xlane.xlu0 %2066
    %v2068 = vsel %vm191, %v2060, 0.0
    %2069 = vadd.xlane.f32.xlu0 %v2068
    %v2070 = vpop.xlane.xlu0 %2069
    %v2071 = vsel %vm191, %v2061, 0.0
    %2072 = vadd.xlane.f32.xlu0 %v2071
    %v2073 = vpop.xlane.xlu0 %2072
    %v2074 = vsel %vm191, %v2062, 0.0
    %2075 = vadd.xlane.f32.xlu0 %v2074
    %v2076 = vpop.xlane.xlu0 %2075
    %v2077 = vsel %vm191, %v2063, 0.0
    %2078 = vadd.xlane.f32.xlu0 %v2077
    %v2079 = vpop.xlane.xlu0 %2078
    %v2080 = vsel %vm191, %v2064, 0.0
    %2081 = vadd.xlane.f32.xlu0 %v2080
    %v2082 = vpop.xlane.xlu0 %2081
    %vm2083 = vcmp.lt.f32.partialorder %v2067, 2.0
    %vm2084 = vcmp.lt.f32.partialorder %v2070, 2.0
    %vm2085 = vcmp.lt.f32.partialorder %v2073, 2.0
    %vm2086 = vcmp.lt.f32.partialorder %v2076, 2.0
    %vm2087 = vcmp.lt.f32.partialorder %v2079, 2.0
    %vm2088 = vcmp.lt.f32.partialorder %v2082, 2.0
    %v2089 = vsel %vm2083, 1.0, 0.0
    %v2090 = vsel %vm2084, 1.0, 0.0
    %v2091 = vsel %vm2085, 1.0, 0.0
    %v2092 = vsel %vm2086, 1.0, 0.0
    %v2093 = vsel %vm2087, 1.0, 0.0
    %v2094 = vsel %vm2088, 1.0, 0.0
    %2096 = vset.pattern.permute.xlu0 0
    %2097 = vperm.xlu0 %2096, %v1934
    %v2098 = vpop.permute.xlu0 %2097
    %2101 = vset.pattern.permute.xlu0 0
    %2102 = vperm.xlu0 %2101, %v1935
    %v2103 = vpop.permute.xlu0 %2102
    %2106 = vset.pattern.permute.xlu0 0
    %2107 = vperm.xlu0 %2106, %v1936
    %v2108 = vpop.permute.xlu0 %2107
    %2111 = vset.pattern.permute.xlu0 0
    %2112 = vperm.xlu0 %2111, %v1937
    %v2113 = vpop.permute.xlu0 %2112
    %2116 = vset.pattern.permute.xlu0 0
    %2117 = vperm.xlu0 %2116, %v1938
    %v2118 = vpop.permute.xlu0 %2117
    %2121 = vset.pattern.permute.xlu0 0
    %2122 = vperm.xlu0 %2121, %v1939
    %v2123 = vpop.permute.xlu0 %2122
    %v2125 = vmul.f32 %v1813, %v2098
    %v2126 = vmul.f32 %v1814, %v2103
    %v2127 = vmul.f32 %v1815, %v2108
    %v2128 = vmul.f32 %v1816, %v2113
    %v2129 = vmul.f32 %v1817, %v2118
    %v2130 = vmul.f32 %v1818, %v2123
    %v2131 = vmul.f32 %v2125, %v2089
    %v2132 = vmul.f32 %v2126, %v2090
    %v2133 = vmul.f32 %v2127, %v2091
    %v2134 = vmul.f32 %v2128, %v2092
    %v2135 = vmul.f32 %v2129, %v2093
    %v2136 = vmul.f32 %v2130, %v2094
    %2137 = vmatpush.msra.mxu0 0.0
    %2138 = vmatpush.msra.mxu0 0.0
    %2139 = vmatpush.msra.mxu0 0.0
    %2140 = vmatpush.msra.mxu0 0.0
    %2141 = vmatpush.msra.mxu0 0.0
    %2142 = vmatpush.msra.mxu0 0.0
    %2143 = vmatpush.msra.mxu0 0.0
    %2144 = vmatpush.msra.mxu0 0.0
    %2145 = vmatpush.msra.mxu0 0.0
    %2146 = vmatpush.msra.mxu0 0.0
    %2147 = vmatpush.msra.mxu0 %v2136
    %2148 = vmatpush.msra.mxu0 %v2135
    %2149 = vmatpush.msra.mxu0 %v2134
    %2150 = vmatpush.msra.mxu0 %v2133
    %2151 = vmatpush.msra.mxu0 %v2132
    %2152 = vmatpush.msra.mxu0 %v2131
    %2153 = vmatmul.f32.gmra.mxu0 %v768
    %v2154 = vpop.f32.mrf.mxu0
    %v2155 = vadd.f32 0.0, %v2154
    %2156 = vdwg.mxu0
    %v2157 = vmul.f32 %v2155, 0.5
    %v2158 = vsub.f32 %v2089, 1.0
    %v2159 = vsub.f32 %v2090, 1.0
    %v2160 = vsub.f32 %v2091, 1.0
    %v2161 = vsub.f32 %v2092, 1.0
    %v2162 = vsub.f32 %v2093, 1.0
    %v2163 = vsub.f32 %v2094, 1.0
    %v2164 = vmul.f32 %v2158, 1e+09
    %v2165 = vmul.f32 %v2159, 1e+09
    %v2166 = vmul.f32 %v2160, 1e+09
    %v2167 = vmul.f32 %v2161, 1e+09
    %v2168 = vmul.f32 %v2162, 1e+09
    %v2169 = vmul.f32 %v2163, 1e+09
    %v2170 = vadd.f32 %v2131, %v2164
    %v2171 = vadd.f32 %v2132, %v2165
    %v2172 = vadd.f32 %v2133, %v2166
    %v2173 = vadd.f32 %v2134, %v2167
    %v2174 = vadd.f32 %v2135, %v2168
    %v2175 = vadd.f32 %v2136, %v2169
    %v2176 = vsel %vm457, %v2170, -inf
    %v2177 = vsel %vm810, %v2171, -inf
    %v2178 = vmax.f32 %v2176, %v2177
    %v2179 = vrot.slane %v2178, 4
    %v2180 = vmax.f32 %v2178, %v2179
    %v2181 = vrot.slane %v2180, 2
    %v2182 = vmax.f32 %v2180, %v2181
    %v2183 = vrot.slane %v2182, 1
    %v2184 = vmax.f32 %v2182, %v2183
    %v2185 = vsel %vm819, %v2171, -inf
    %v2186 = vsel %vm457, %v2172, -inf
    %v2187 = vmax.f32 %v2185, %v2186
    %v2188 = vrot.slane %v2187, 4
    %v2189 = vmax.f32 %v2187, %v2188
    %v2190 = vrot.slane %v2189, 2
    %v2191 = vmax.f32 %v2189, %v2190
    %v2192 = vrot.slane %v2191, 1
    %v2193 = vmax.f32 %v2191, %v2192
    %v2194 = vsel %vm457, %v2173, -inf
    %v2195 = vsel %vm810, %v2174, -inf
    %v2196 = vmax.f32 %v2194, %v2195
    %v2197 = vrot.slane %v2196, 4
    %v2198 = vmax.f32 %v2196, %v2197
    %v2199 = vrot.slane %v2198, 2
    %v2200 = vmax.f32 %v2198, %v2199
    %v2201 = vrot.slane %v2200, 1
    %v2202 = vmax.f32 %v2200, %v2201
    %v2203 = vsel %vm819, %v2174, -inf
    %v2204 = vsel %vm457, %v2175, -inf
    %v2205 = vmax.f32 %v2203, %v2204
    %v2206 = vrot.slane %v2205, 4
    %v2207 = vmax.f32 %v2205, %v2206
    %v2208 = vrot.slane %v2207, 2
    %v2209 = vmax.f32 %v2207, %v2208
    %v2210 = vrot.slane %v2209, 1
    %v2211 = vmax.f32 %v2209, %v2210
    %v2212 = vsel %vm847, %v2184, %v2193
    %v2213 = vsel %vm849, %v2212, %v2202
    %v2214 = vsel %vm851, %v2213, %v2211
    %2216 = vrot.lane.b32.xlu0 %v2157, 32
    %v2217 = vpop.permute.xlu0 %2216
    %v2219 = vsel %vm457, %v2214, %v2217
    %2221 = vrot.lane.b32.xlu0 %v1538, 64
    %v2222 = vpop.permute.xlu0 %2221
    %vm2224 = vcmask 523264
    %v2225 = vsel %vm2224, %v857, %v2222
    %v2226 = vld [vmem:[%s35] sm:$0xff]
    %2228 = vst [vmem:[#allocation1] ss:$2 sm:$0xff] %v2226
    %v2229 = vld.sshfl [vmem:[#allocation1] sm:$0xff pattern:$0x75316420]
    %v2230 = vld.sshfl [vmem:[#allocation1 + $0x8] sm:$0xff pattern:$0x75316420]
    %v2233 = vmul.f32 %v2225, %v2229
    %v2234 = vmul.f32 %v2219, %v2230
    %v2235 = vld [vmem:[%s37] sm:$0x7f]
    %vm2236 = vcmask 31744
    %v2238 = vsel %vm2236, %v2235, 0
    %vm2240 = vcmask 1043456
    %v2242 = vsel %vm2240, %v2233, 0
    %v2245 = vsel %vm2240, %v2234, 0
    %2247 = vmatpush.msra.mxu0 0.0
    %2248 = vmatpush.msra.mxu0 0.0
    %2249 = vmatpush.msra.mxu0 0.0
    %2250 = vmatpush.msra.mxu0 0.0
    %2251 = vmatpush.msra.mxu0 0.0
    %2252 = vmatpush.msra.mxu0 0.0
    %2253 = vmatpush.msra.mxu0 0.0
    %2254 = vmatpush.msra.mxu0 0.0
    %2255 = vmatpush.msra.mxu0 0.0
    %2256 = vmatpush.msra.mxu0 0.0
    %2257 = vmatpush.msra.mxu0 0.0
    %2258 = vmatpush.msra.mxu0 0.0
    %2259 = vmatpush.msra.mxu0 0.0
    %2260 = vmatpush.msra.mxu0 0.0
    %2261 = vmatpush.msra.mxu0 0.0
    %2262 = vmatpush.msra.mxu0 %v2242
    %2263 = vmatmul.f32.gmra.mxu0 %v2238
    %v2264 = vpop.f32.mrf.mxu0
    %v2265 = vadd.f32 0.0, %v2264
    %2266 = vdwg.mxu0
    %2267 = vmatpush.msra.mxu0 0.0
    %2268 = vmatpush.msra.mxu0 0.0
    %2269 = vmatpush.msra.mxu0 0.0
    %2270 = vmatpush.msra.mxu0 0.0
    %2271 = vmatpush.msra.mxu0 0.0
    %2272 = vmatpush.msra.mxu0 0.0
    %2273 = vmatpush.msra.mxu0 0.0
    %2274 = vmatpush.msra.mxu0 0.0
    %2275 = vmatpush.msra.mxu0 0.0
    %2276 = vmatpush.msra.mxu0 0.0
    %2277 = vmatpush.msra.mxu0 0.0
    %2278 = vmatpush.msra.mxu0 0.0
    %2279 = vmatpush.msra.mxu0 0.0
    %2280 = vmatpush.msra.mxu0 0.0
    %2281 = vmatpush.msra.mxu0 0.0
    %2282 = vmatpush.msra.mxu0 %v2245
    %2283 = vmatmul.f32.gmra.mxu0 %v2238
    %v2284 = vpop.f32.mrf.mxu0
    %v2285 = vadd.f32 0.0, %v2284
    %2286 = vdwg.mxu0
    %v2287 = vld [vmem:[%s39] sm:$0x7f]
    %vm2288 = vcmask 55296
    %v2289 = vsel %vm2288, %v2287, 0.0
    %2290 = vadd.xlane.f32.xlu0 %v2289
    %v2291 = vpop.xlane.xlu0 %2290
    %v2292 = vrsqrt.pop %v2291
    %v2293 = vmul.f32 %v2292, %v2291
    %v2294 = vmul.f32 %v2293, %v2292
    %v2295 = vmul.f32 0.5, %v2294
    %v2296 = vsub.f32 1.5, %v2295
    %v2297 = vmul.f32 %v2292, %v2296
    %vm2298 = vweird.f32 %v2291
    %vm2299 = vweird.f32 %v2292
    %vm2300 = vmor %vm2298, %vm2299
    %v2301 = vsel %vm2300, %v2292, %v2297
    %v2302 = vld [vmem:[%s41] sm:$0xff]
    %v2303 = vld [vmem:[%s41 + $0x8] sm:$0xff]
    %v2304 = vld [vmem:[%s41 + $0x10] sm:$0xff]
    %v2305 = vld [vmem:[%s41 + $0x18] sm:$0xff]
    %v2306 = vld [vmem:[%s41 + $0x20] sm:$0xff]
    %v2307 = vld [vmem:[%s41 + $0x28] sm:$0xff]
    %v2308 = vld [vmem:[%s41 + $0x30] sm:$0xff]
    %v2309 = vld [vmem:[%s41 + $0x38] sm:$0xff]
    %v2310 = vld [vmem:[%s41 + $0x40] sm:$0xff]
    %v2311 = vld [vmem:[%s41 + $0x48] sm:$0xff]
    %v2312 = vld [vmem:[%s41 + $0x50] sm:$0xff]
    %v2313 = vld [vmem:[%s41 + $0x58] sm:$0xff]
    %v2314 = vld [vmem:[%s41 + $0x60] sm:$0xff]
    %v2315 = vld [vmem:[%s41 + $0x68] sm:$0xff]
    %v2316 = vld [vmem:[%s41 + $0x70] sm:$0xff]
    %v2317 = vld [vmem:[%s41 + $0x78] sm:$0xff]
    %v2318 = vld [vmem:[%s41 + $0x80] sm:$0xff]
    %v2319 = vld [vmem:[%s41 + $0x88] sm:$0xff]
    %v2320 = vld [vmem:[%s41 + $0x90] sm:$0xff]
    %v2321 = vld [vmem:[%s41 + $0x98] sm:$0xff]
    %v2322 = vld [vmem:[%s41 + $0xa0] sm:$0xff]
    %v2323 = vld [vmem:[%s41 + $0xa8] sm:$0xff]
    %v2324 = vld [vmem:[%s41 + $0xb0] sm:$0xff]
    %v2325 = vld [vmem:[%s41 + $0xb8] sm:$0xff]
    %v2326 = vld [vmem:[%s43] sm:$0x1]
    %v2328 = vsel %vm2224, %v2285, 0
    %2330 = vmatpush.msra.mxu0 %v2317
    %2331 = vmatpush.msra.mxu0 %v2316
    %2332 = vmatpush.msra.mxu0 %v2315
    %2333 = vmatpush.msra.mxu0 %v2314
    %2334 = vmatpush.msra.mxu0 %v2313
    %2335 = vmatpush.msra.mxu0 %v2312
    %2336 = vmatpush.msra.mxu0 %v2311
    %2337 = vmatpush.msra.mxu0 %v2310
    %2338 = vmatpush.msra.mxu0 %v2309
    %2339 = vmatpush.msra.mxu0 %v2308
    %2340 = vmatpush.msra.mxu0 %v2307
    %2341 = vmatpush.msra.mxu0 %v2306
    %2342 = vmatpush.msra.mxu0 %v2305
    %2343 = vmatpush.msra.mxu0 %v2304
    %2344 = vmatpush.msra.mxu0 %v2303
    %2345 = vmatpush.msra.mxu0 %v2302
    %2346 = vmatmul.f32.gmra.mxu0 %v2265
    %v2347 = vpop.f32.mrf.mxu0
    %v2348 = vadd.f32 0.0, %v2347
    %2349 = vdwg.mxu0
    %2350 = vmatpush.msra.mxu0 0.0
    %2351 = vmatpush.msra.mxu0 0.0
    %2352 = vmatpush.msra.mxu0 0.0
    %2353 = vmatpush.msra.mxu0 0.0
    %2354 = vmatpush.msra.mxu0 0.0
    %2355 = vmatpush.msra.mxu0 0.0
    %2356 = vmatpush.msra.mxu0 0.0
    %2357 = vmatpush.msra.mxu0 0.0
    %2358 = vmatpush.msra.mxu0 %v2325
    %2359 = vmatpush.msra.mxu0 %v2324
    %2360 = vmatpush.msra.mxu0 %v2323
    %2361 = vmatpush.msra.mxu0 %v2322
    %2362 = vmatpush.msra.mxu0 %v2321
    %2363 = vmatpush.msra.mxu0 %v2320
    %2364 = vmatpush.msra.mxu0 %v2319
    %2365 = vmatpush.msra.mxu0 %v2318
    %2366 = vmatmul.f32.gmra.mxu0 %v2328
    %v2367 = vpop.f32.mrf.mxu0
    %v2368 = vadd.f32 %v2348, %v2367
    %2369 = vdwg.mxu0
    %v2370 = vmul.f32 %v2301, %v2368
    %vm2371 = vcmask 56320
    %v2373 = vsel %vm2371, %v2287, 0
    %vm2375 = vcmask 1046528
    %v2377 = vsel %vm2375, %v2370, 0
    %2379 = vmatpush.msra.mxu0 0.0
    %2380 = vmatpush.msra.mxu0 0.0
    %2381 = vmatpush.msra.mxu0 0.0
    %2382 = vmatpush.msra.mxu0 0.0
    %2383 = vmatpush.msra.mxu0 0.0
    %2384 = vmatpush.msra.mxu0 0.0
    %2385 = vmatpush.msra.mxu0 0.0
    %2386 = vmatpush.msra.mxu0 0.0
    %2387 = vmatpush.msra.mxu0 0.0
    %2388 = vmatpush.msra.mxu0 0.0
    %2389 = vmatpush.msra.mxu0 0.0
    %2390 = vmatpush.msra.mxu0 0.0
    %2391 = vmatpush.msra.mxu0 0.0
    %2392 = vmatpush.msra.mxu0 0.0
    %2393 = vmatpush.msra.mxu0 0.0
    %2394 = vmatpush.msra.mxu0 %v2377
    %2395 = vmatmul.f32.gmra.mxu0 %v2373
    %v2396 = vpop.f32.mrf.mxu0
    %v2397 = vadd.f32 0.0, %v2396
    %2398 = vdwg.mxu0
    %v2399 = vmul.f32 %v2301, %v2397
    %v2401 = vperm.slane %v2326, 0
    %v2403 = vadd.f32 %v2399, %v2401
    %v2404 = vmax.f32 %v2403, 0.0
    %2405 = vst.msk [vmem:[#allocation5] sm:$0xf] %vm810, %v2404
    %v2406 = vld [vmem:[%s45] sm:$0xff]
    %v2407 = vld [vmem:[%s45 + $0x8] sm:$0xff]
    %v2409 = vsel %vm2371, %v2406, 0
    %v2412 = vsel %vm2371, %v2407, 0
    %v2415 = vsel %vm2375, %v2404, 0
    %2417 = vmatpush.msra.mxu0 0.0
    %2418 = vmatpush.msra.mxu0 0.0
    %2419 = vmatpush.msra.mxu0 0.0
    %2420 = vmatpush.msra.mxu0 0.0
    %2421 = vmatpush.msra.mxu0 0.0
    %2422 = vmatpush.msra.mxu0 0.0
    %2423 = vmatpush.msra.mxu0 0.0
    %2424 = vmatpush.msra.mxu0 0.0
    %2425 = vmatpush.msra.mxu0 0.0
    %2426 = vmatpush.msra.mxu0 0.0
    %2427 = vmatpush.msra.mxu0 0.0
    %2428 = vmatpush.msra.mxu0 0.0
    %2429 = vmatpush.msra.mxu0 0.0
    %2430 = vmatpush.msra.mxu0 0.0
    %2431 = vmatpush.msra.mxu0 0.0
    %2432 = vmatpush.msra.mxu0 %v2415
    %2433 = vmatmul.f32.gmra.mxu0 %v2409
    %v2434 = vpop.f32.mrf.mxu0
    %v2435 = vadd.f32 0.0, %v2434
    %2436 = vmatmul.f32.gmra.mxu0 %v2412
    %v2437 = vpop.f32.mrf.mxu0
    %v2438 = vadd.f32 0.0, %v2437
    %2439 = vdwg.mxu0
    %v2440 = vld [vmem:[%s47] sm:$0xff]
    %v2441 = vld [vmem:[%s47 + $0x8] sm:$0xff]
    %v2443 = vsel %vm2371, %v2440, 0
    %v2446 = vsel %vm2371, %v2441, 0
    %2448 = vmatpush.msra.mxu0 0.0
    %2449 = vmatpush.msra.mxu0 0.0
    %2450 = vmatpush.msra.mxu0 0.0
    %2451 = vmatpush.msra.mxu0 0.0
    %2452 = vmatpush.msra.mxu0 0.0
    %2453 = vmatpush.msra.mxu0 0.0
    %2454 = vmatpush.msra.mxu0 0.0
    %2455 = vmatpush.msra.mxu0 0.0
    %2456 = vmatpush.msra.mxu0 0.0
    %2457 = vmatpush.msra.mxu0 0.0
    %2458 = vmatpush.msra.mxu0 0.0
    %2459 = vmatpush.msra.mxu0 0.0
    %2460 = vmatpush.msra.mxu0 0.0
    %2461 = vmatpush.msra.mxu0 0.0
    %2462 = vmatpush.msra.mxu0 0.0
    %2463 = vmatpush.msra.mxu0 %v2415
    %2464 = vmatmul.f32.gmra.mxu0 %v2443
    %v2465 = vpop.f32.mrf.mxu0
    %v2466 = vadd.f32 0.0, %v2465
    %2467 = vmatmul.f32.gmra.mxu0 %v2446
    %v2468 = vpop.f32.mrf.mxu0
    %v2469 = vadd.f32 0.0, %v2468
    %2470 = vdwg.mxu0
    %v2471 = vld [vmem:[%s49] sm:$0xff]
    %v2472 = vld [vmem:[%s49 + $0x8] sm:$0xff]
    %v2473 = vld [vmem:[%s49 + $0x10] sm:$0xff]
    %v2474 = vld [vmem:[%s49 + $0x18] sm:$0xff]
    %v2475 = vld [vmem:[%s51] sm:$0x1]
    %v2477 = vperm.slane %v2475, 0
    %v2480 = vsel %vm457, %v2435, 0
    %v2483 = vsel %vm457, %v2438, 0
    %2485 = vmatpush.msra.mxu0 0.0
    %2486 = vmatpush.msra.mxu0 0.0
    %2487 = vmatpush.msra.mxu0 0.0
    %2488 = vmatpush.msra.mxu0 0.0
    %2489 = vmatpush.msra.mxu0 0.0
    %2490 = vmatpush.msra.mxu0 0.0
    %2491 = vmatpush.msra.mxu0 0.0
    %2492 = vmatpush.msra.mxu0 0.0
    %2493 = vmatpush.msra.mxu0 0.0
    %2494 = vmatpush.msra.mxu0 0.0
    %2495 = vmatpush.msra.mxu0 0.0
    %2496 = vmatpush.msra.mxu0 0.0
    %2497 = vmatpush.msra.mxu0 %v2474
    %2498 = vmatpush.msra.mxu0 %v2473
    %2499 = vmatpush.msra.mxu0 %v2472
    %2500 = vmatpush.msra.mxu0 %v2471
    %2501 = vmatmul.f32.gmra.mxu0 %v2480
    %v2502 = vpop.f32.mrf.mxu0
    %v2503 = vadd.f32 %v2477, %v2502
    %2504 = vmatmul.f32.gmra.mxu0 %v2483
    %v2505 = vpop.f32.mrf.mxu0
    %v2506 = vadd.f32 %v2477, %v2505
    %2507 = vdwg.mxu0
    %v2508 = vld [vmem:[%s53] sm:$0xff]
    %v2509 = vld [vmem:[%s53 + $0x8] sm:$0xff]
    %v2510 = vld [vmem:[%s53 + $0x10] sm:$0xff]
    %v2511 = vld [vmem:[%s53 + $0x18] sm:$0xff]
    %v2512 = vld [vmem:[%s55] sm:$0x1]
    %v2514 = vperm.slane %v2512, 0
    %v2517 = vsel %vm457, %v2466, 0
    %v2520 = vsel %vm457, %v2469, 0
    %2522 = vmatpush.msra.mxu0 0.0
    %2523 = vmatpush.msra.mxu0 0.0
    %2524 = vmatpush.msra.mxu0 0.0
    %2525 = vmatpush.msra.mxu0 0.0
    %2526 = vmatpush.msra.mxu0 0.0
    %2527 = vmatpush.msra.mxu0 0.0
    %2528 = vmatpush.msra.mxu0 0.0
    %2529 = vmatpush.msra.mxu0 0.0
    %2530 = vmatpush.msra.mxu0 0.0
    %2531 = vmatpush.msra.mxu0 0.0
    %2532 = vmatpush.msra.mxu0 0.0
    %2533 = vmatpush.msra.mxu0 0.0
    %2534 = vmatpush.msra.mxu0 %v2511
    %2535 = vmatpush.msra.mxu0 %v2510
    %2536 = vmatpush.msra.mxu0 %v2509
    %2537 = vmatpush.msra.mxu0 %v2508
    %2538 = vmatmul.f32.gmra.mxu0 %v2517
    %v2539 = vpop.f32.mrf.mxu0
    %v2540 = vadd.f32 %v2514, %v2539
    %2541 = vmatmul.f32.gmra.mxu0 %v2520
    %v2542 = vpop.f32.mrf.mxu0
    %v2543 = vadd.f32 %v2514, %v2542
    %2544 = vdwg.mxu0
    %v2545 = vmul.f32 %v2503, %v2540
    %v2546 = vmul.f32 %v2506, %v2543
    %v2547 = vsel %vm457, %v2545, 0.0
    %2548 = vadd.xlane.f32.xlu0 %v2547
    %v2549 = vpop.xlane.xlu0 %2548
    %v2550 = vsel %vm457, %v2546, 0.0
    %2551 = vadd.xlane.f32.xlu0 %v2550
    %v2552 = vpop.xlane.xlu0 %2551
    %v2553 = vld [vmem:[%s57] sm:$0xff]
    %v2554 = vld [vmem:[%s57 + $0x8] sm:$0xff]
    %v2555 = vmax.f32 %v2549, 0.0
    %v2556 = vmax.f32 %v2552, 0.0
    %v2557 = vmul.f32 %v2549, %v2553
    %v2558 = vmul.f32 %v2552, %v2554
    %v2559 = vsub.f32 %v2555, %v2557
    %v2560 = vsub.f32 %v2556, %v2558
    %v2561 = vand.u32 2147483647, %v2549
    %v2562 = vand.u32 2147483647, %v2552
    %v2563 = vsub.f32 0.0, %v2561
    %v2564 = vsub.f32 0.0, %v2562
    %v2565 = vmul.f32 %v2563, 1.442695
    %v2566 = vpow.pop %v2565
    %v2567 = vmul.f32 %v2564, 1.442695
    %v2568 = vpow.pop %v2567
    %v2569 = vadd.f32 %v2566, 1.0
    %v2570 = vlog2.pop %v2569
    %v2571 = vmul.f32 %v2570, 0.6931472
    %v2572 = vmul.f32 -0.5, %v2566
    %v2573 = vadd.f32 %v2572, 1.0
    %v2574 = vmul.f32 %v2573, %v2566
    %v2575 = vand.u32 2147483647, %v2566
    %vm2576 = vcmp.lt.f32.partialorder %v2575, 0.0004427343
    %v2577 = vsel %vm2576, %v2574, %v2571
    %v2578 = vadd.f32 %v2568, 1.0
    %v2579 = vlog2.pop %v2578
    %v2580 = vmul.f32 %v2579, 0.6931472
    %v2581 = vmul.f32 -0.5, %v2568
    %v2582 = vadd.f32 %v2581, 1.0
    %v2583 = vmul.f32 %v2582, %v2568
    %v2584 = vand.u32 2147483647, %v2568
    %vm2585 = vcmp.lt.f32.partialorder %v2584, 0.0004427343
    %v2586 = vsel %vm2585, %v2583, %v2580
    %v2587 = vadd.f32 %v2559, %v2577
    %v2588 = vadd.f32 %v2560, %v2586
    %v2589 = vld [vmem:[%s59] sm:$0xff]
    %v2590 = vld [vmem:[%s59 + $0x8] sm:$0xff]
    %v2591 = vmul.f32 %v2587, %v2589
    %v2592 = vmul.f32 %v2588, %v2590
    %vm2593 = vcmask 7168
    %v2594 = vsel %vm2593, %v2591, 0.0
    %v2595 = vsel %vm2593, %v2592, 0.0
    %v2596 = vadd.f32 %v2594, %v2595
    %v2597 = vrot.slane %v2596, 4
    %v2598 = vadd.f32 %v2596, %v2597
    %v2599 = vrot.slane %v2598, 2
    %v2600 = vadd.f32 %v2598, %v2599
    %v2601 = vrot.slane %v2600, 1
    %v2602 = vadd.f32 %v2600, %v2601
    %vm2603 = vcmask 0
    %2604 = vst.msk [vmem:[#allocation7] sm:$0x1] %vm2603, %v2602
    // Predicated region
    $region122: #{forward.1} parent=1 // pred_check
      _
    $region123: #{forward.1} parent=1 // pred_check_branch
      %2606 = sbr.rel (0) target = $region125
    $region124: #{forward.1} parent=1 // pred_region
      %2608 = vsyncadd [#allocation6], 0
      %s2610 = sshll.u32 [#allocation5], 4
      %s2611 = int_to_ptr.vmem [resolvable:$true] %s2610
      %s2612 = sshll.u32 %s61, 4
      %s2613 = int_to_ptr.hbm [resolvable:$true] %s2612
      %2615 = dma.vmem_to_hbm [thread:$0]  %s2611, 64, %s2613, [#allocation6]
    $region125: #{forward.1} parent=1 // pred_fallthru
      _
    // Predicated region
    $region126: #{forward.1} parent=1 // pred_check
      _
    $region127: #{forward.1} parent=1 // pred_check_branch
      %2617 = sbr.rel (0) target = $region129
    $region128: #{forward.1} parent=1 // pred_region
      %2619 = vsyncadd [#allocation8], 0
      %s2621 = sshll.u32 [#allocation7], 4
      %s2622 = int_to_ptr.vmem [resolvable:$true] %s2621
      %s2623 = sshll.u32 %s63, 4
      %s2624 = int_to_ptr.hbm [resolvable:$true] %s2623
      %2626 = dma.vmem_to_hbm [thread:$0]  %s2622, 16, %s2624, [#allocation8]
    $region129: #{forward.1} parent=1 // pred_fallthru
      _
    // Predicated region
    $region130: #{forward.1} parent=1 // pred_check
      _
    $region131: #{forward.1} parent=1 // pred_check_branch
      %2628 = sbr.rel (0) target = $region133
    $region132: #{forward.1} parent=1 // pred_region
      %2630 = dma.done [#allocation6], 64
    $region133: #{forward.1} parent=1 // pred_fallthru
      _
    // Predicated region
    $region134: #{forward.1} parent=1 // pred_check
      _
    $region135: #{forward.1} parent=1 // pred_check_branch
      %2632 = sbr.rel (0) target = $region137
    $region136: #{forward.1} parent=1 // pred_region
      %2634 = dma.done [#allocation8], 16
    $region137: #{forward.1} parent=1 // pred_fallthru
      _
    %2635 = vsyncpa [#allocation6], 1
    %2636 = vsyncpa [#allocation8], 1

</llo_original>
